<compile_context>
chip_gen: v7x
topology: tpu7x:2x2x1
jax: 0.10.0
libtpu: 0.0.40
codegen_flags: <defaults>
</compile_context>

<pallas_src>
import jax
import jax.numpy as jnp
from jax.experimental import pallas as pl
from jax.experimental.pallas import tpu as pltpu

CONTEXT_SIZES = (1, 3, 5)   # contextSizeList
TB = 8                      # batch tile (samples per grid step), multiple of 8
OUT_PAD = 128               # lane-dense logits width (>= classNum)


def cnn_kernel(toks_ref, table_ref, wconv_ref, bconv_ref, lng_ref, lnb_ref,
               wf_ref, bf_ref, o_ref, xpad_ref):
    """Fused Embedding -> multi-scale Conv1d -> LayerNorm -> ReLU -> max-pool -> Linear.

    toks_ref  : (TB, L, 1) int32   token ids for this batch tile
    table_ref : (V, E)             embedding table (VMEM-resident)
    wconv_ref : (sum(k)*E, H)      packed conv weights; tap t of scale k is the
                                   (E, H) row-block at its static offset
    bconv_ref : (S, H)             conv biases, one row per scale
    lng_ref   : (S, H)             LayerNorm gamma per scale
    lnb_ref   : (S, H)             LayerNorm beta per scale
    wf_ref    : (S*H, OUT_PAD)     output Linear weight, zero-padded to OUT_PAD cols
    bf_ref    : (1, OUT_PAD)       output Linear bias, zero-padded
    o_ref     : (TB, OUT_PAD)      logits (lane-dense; padded cols carry bias pad)
    xpad_ref  : (TB, L + 2*max_half, E) VMEM scratch: zero-padded embedded seqs
    """
    V, E = table_ref.shape
    H = bconv_ref.shape[1]
    tb, L, _ = toks_ref.shape
    max_half = max(CONTEXT_SIZES) // 2
    eps = 1e-5

    # Row offset of each context size's taps inside the packed conv weight.
    tap_base, acc = [], 0
    for k in CONTEXT_SIZES:
        tap_base.append(acc)
        acc += k * E

    # ---- Embedding lookup for the whole tile as one one-hot matmul (MXU) ----
    tok = toks_ref[...].reshape(tb * L, 1)                          # (TB*L, 1)
    lane_ids = jax.lax.broadcasted_iota(jnp.int32, (tb * L, V), 1)
    onehot = (lane_ids == tok).astype(jnp.float32)                  # (TB*L, V)
    x = jnp.dot(onehot, table_ref[...],
                preferred_element_type=jnp.float32)                 # (TB*L, E)
    x = x.reshape(tb, L, E)
    # TODO(synk): embedding dropout (p=0.2) is training-only; identity here.

    # Zero the halo rows once, then write the embedded sequences in the center.
    xpad_ref[...] = jnp.zeros_like(xpad_ref)
    xpad_ref[:, max_half:max_half + L, :] = x

    feats = []
    for ci, k in enumerate(CONTEXT_SIZES):
        half = k // 2
        y = jnp.zeros((tb * L, H), jnp.float32)
        for t in range(k):                          # 'same' conv = shifted matmuls
            start = max_half - half + t
            xs = xpad_ref[:, start:start + L, :].reshape(tb * L, E)
            w_t = wconv_ref[tap_base[ci] + t * E:
                            tap_base[ci] + (t + 1) * E, :]          # (E, H)
            y = y + jnp.dot(xs, w_t, preferred_element_type=jnp.float32)
        y = y.reshape(tb, L, H) + bconv_ref[ci:ci + 1, :]           # conv bias
        # LayerNorm over the filter dimension (biased variance, eps=1e-5).
        mu = jnp.mean(y, axis=-1, keepdims=True)
        var = jnp.mean((y - mu) * (y - mu), axis=-1, keepdims=True)
        yn = (y - mu) * jax.lax.rsqrt(var + eps)
        yn = yn * lng_ref[ci:ci + 1, :] + lnb_ref[ci:ci + 1, :]
        yn = jnp.maximum(yn, 0.0)                                   # ReLU
        feats.append(jnp.max(yn, axis=1))                           # (TB, H) max-pool

    feat = jnp.concatenate(feats, axis=-1)                          # (TB, S*H)

    # ---- fcLinear: single Linear over the concatenated pooled features ----
    o_ref[...] = (jnp.dot(feat, wf_ref[...],
                          preferred_element_type=jnp.float32) + bf_ref[...])


def cnn_forward(tokens, params):
    """tokens: (B, L) int32 token ids. Returns {'y_logit': (B, classNum)} float32."""
    B, L = tokens.shape
    V, E = params["emb_table"].shape
    n_scales, H = params["bconv"].shape
    C = params["class_num"]
    sumk = sum(CONTEXT_SIZES)
    out_pad = params["wf_pad"].shape[1]
    max_half = max(CONTEXT_SIZES) // 2

    # Pad batch to a multiple of the tile so every output block is (TB, 128)
    # aligned; padded rows use token 0 and are sliced off below.
    B_pad = ((B + TB - 1) // TB) * TB
    toks = jnp.zeros((B_pad, L, 1), jnp.int32).at[:B, :, 0].set(tokens.astype(jnp.int32))

    # VMEM budget per grid step (f32): resident weights (table ~6 KB + conv
    # ~148 KB + fc ~100 KB + misc) + 2x double-buffered (TB,L,1) tokens and
    # (TB,128) logits + (TB, L+4, E) scratch  <  0.5 MiB  -> trivially within
    # v5e/v6e (128 MiB) and v7x (64 MiB); no vmem_limit_bytes override needed.
    out = pl.pallas_call(
        cnn_kernel,
        out_shape=jax.ShapeDtypeStruct((B_pad, out_pad), jnp.float32),
        grid_spec=pltpu.PrefetchScalarGridSpec(
            num_scalar_prefetch=0,
            grid=(B_pad // TB,),
            in_specs=[
                pl.BlockSpec((TB, L, 1), lambda b: (b, 0, 0)),            # token ids (tiled)
                pl.BlockSpec((V, E), lambda b: (0, 0)),                   # embedding table
                pl.BlockSpec((sumk * E, H), lambda b: (0, 0)),            # packed conv weights
                pl.BlockSpec((n_scales, H), lambda b: (0, 0)),            # conv biases
                pl.BlockSpec((n_scales, H), lambda b: (0, 0)),            # LN gamma
                pl.BlockSpec((n_scales, H), lambda b: (0, 0)),            # LN beta
                pl.BlockSpec((n_scales * H, out_pad), lambda b: (0, 0)),  # fc weight (padded)
                pl.BlockSpec((1, out_pad), lambda b: (0, 0)),             # fc bias (padded)
            ],
            out_specs=pl.BlockSpec((TB, out_pad), lambda b: (b, 0)),
            scratch_shapes=[
                pltpu.VMEM((TB, L + 2 * max_half, E), jnp.float32),  # padded sequences
            ],
        ),
        compiler_params=pltpu.CompilerParams(
            dimension_semantics=("parallel",),   # batch tiles independent -> megacore on v7x
        ),
    )(toks, params["emb_table"], params["wconv"], params["bconv"],
      params["ln_g"], params["ln_b"], params["wf_pad"], params["bf_pad"])

    return {"y_logit": out[:B, :C]}


def init_params(key, tkn_num, emb_size, hdn_size, class_num):
    """Deterministic parameter init mimicking the module's __init__ shapes."""
    n_scales = len(CONTEXT_SIZES)
    # keys needed: 1 (emb) + 2*n_scales (conv w,b) + 2 (LN g,b) + 2 (fc w,b)
    keys = iter(jax.random.split(key, 5 + 2 * n_scales))

    # nn.Embedding default init N(0,1). (from_pretrained / freeze / padding_idx
    # only affect init & grads, not the forward lookup.)
    emb_table = jax.random.normal(next(keys), (tkn_num, emb_size), jnp.float32)

    # Conv1d(embSize, hdnSize, k, padding=k//2) weights, packed (sum(k)*E, H).
    # Tap t of scale k occupies rows [base + t*E, base + (t+1)*E) and is laid
    # out (in_channels, out_channels) == torch_weight[:, :, t].T.
    w_parts, b_rows = [], []
    for k in CONTEXT_SIZES:
        bound = 1.0 / (emb_size * k) ** 0.5
        w_parts.append(jax.random.uniform(next(keys), (k * emb_size, hdn_size),
                                          jnp.float32, -bound, bound))
        b_rows.append(jax.random.uniform(next(keys), (1, hdn_size),
                                         jnp.float32, -bound, bound))
    wconv = jnp.concatenate(w_parts, axis=0)
    bconv = jnp.concatenate(b_rows, axis=0)

    # LayerNorm(hdnSize) affine params per scale (perturbed from 1/0 so the
    # affine path is actually exercised by the correctness check).
    ln_g = 1.0 + 0.1 * jax.random.normal(next(keys), (n_scales, hdn_size), jnp.float32)
    ln_b = 0.05 * jax.random.normal(next(keys), (n_scales, hdn_size), jnp.float32)

    # fcLinear = MLP(hdnSize * n_scales, classNum) with default hiddenList=[]
    # -> a single Linear. Stored transposed (in, out) and zero-padded to
    # OUT_PAD output columns for a lane-dense store inside the kernel.
    in_f = hdn_size * n_scales
    bound = 1.0 / in_f ** 0.5
    wf = jax.random.uniform(next(keys), (in_f, class_num), jnp.float32, -bound, bound)
    bf = jax.random.uniform(next(keys), (1, class_num), jnp.float32, -bound, bound)
    wf_pad = jnp.zeros((in_f, OUT_PAD), jnp.float32).at[:, :class_num].set(wf)
    bf_pad = jnp.zeros((1, OUT_PAD), jnp.float32).at[:, :class_num].set(bf)

    return {
        "emb_table": emb_table,
        "wconv": wconv, "bconv": bconv,
        "ln_g": ln_g, "ln_b": ln_b,
        "wf_pad": wf_pad, "bf_pad": bf_pad,
        "class_num": class_num,
    }


def cnn_reference(tokens, params):
    """Plain-JAX reference of the same forward, for a correctness check."""
    table = params["emb_table"]
    x = table[tokens]                                    # (B, L, E) embedding lookup
    B, L, E = x.shape
    H = params["bconv"].shape[1]
    feats, row = [], 0
    for ci, k in enumerate(CONTEXT_SIZES):
        half = k // 2
        xp = jnp.pad(x, ((0, 0), (half, half), (0, 0)))
        y = jnp.zeros((B, L, H), jnp.float32)
        for t in range(k):
            w_t = params["wconv"][row + t * E: row + (t + 1) * E]
            y = y + jnp.einsum("ble,eh->blh", xp[:, t:t + L, :], w_t)
        row += k * E
        y = y + params["bconv"][ci]
        mu = y.mean(-1, keepdims=True)
        var = ((y - mu) ** 2).mean(-1, keepdims=True)
        yn = (y - mu) / jnp.sqrt(var + 1e-5)
        yn = yn * params["ln_g"][ci] + params["ln_b"][ci]
        yn = jnp.maximum(yn, 0.0)
        feats.append(yn.max(axis=1))                     # (B, H)
    feat = jnp.concatenate(feats, axis=1)                # (B, S*H)
    logits = feat @ params["wf_pad"] + params["bf_pad"]
    return logits[:, :params["class_num"]]


if __name__ == "__main__":
    # Small shapes consistent with CNN: tokenizedSeqArr is (batch, seqLen) int
    # token ids. batch=12, seqLen=16, tknNum=24, embSize=64, hdnSize=64,
    # contextSizeList=[1,3,5], classNum=4.
    B, L, V, E, H, C = 12, 16, 24, 64, 64, 4

    key = jax.random.PRNGKey(0)
    k_tok, k_par = jax.random.split(key)
    tokens = jax.random.randint(k_tok, (B, L), 0, V, dtype=jnp.int32)
    params = init_params(k_par, V, E, H, C)

    out = cnn_forward(tokens, params)
    y = jax.block_until_ready(out["y_logit"])

    ref = cnn_reference(tokens, params)
    assert y.shape == (B, C)
    assert jnp.allclose(y, ref, atol=2e-3, rtol=2e-3), "mismatch vs JAX reference"

    print("KERNEL_OK")
</pallas_src>

<mosaic_0001>
module attributes {stable_mosaic.version = 11 : i64} {
  func.func @cnn_kernel(%arg0: i32, %arg1: memref<8x16x1xi32, #tpu.memory_space<vmem>>, %arg2: memref<24x64xf32, #tpu.memory_space<vmem>>, %arg3: memref<576x64xf32, #tpu.memory_space<vmem>>, %arg4: memref<3x64xf32, #tpu.memory_space<vmem>>, %arg5: memref<3x64xf32, #tpu.memory_space<vmem>>, %arg6: memref<3x64xf32, #tpu.memory_space<vmem>>, %arg7: memref<192x128xf32, #tpu.memory_space<vmem>>, %arg8: memref<1x128xf32, #tpu.memory_space<vmem>>, %arg9: memref<8x128xf32, #tpu.memory_space<vmem>>, %arg10: memref<8x20x64xf32, #tpu.memory_space<vmem>>) attributes {dimension_semantics = [#tpu.dimension_semantics<parallel>], iteration_bounds = array<i64: 2>, scalar_prefetch = 0 : i64, scratch_operands = 1 : i64, tpu.core_type = #tpu.core_type<tc>, window_params = [{transform_indices = @transform_0, window_bounds = array<i64: 8, 16, 1>}, {pipeline_mode = #tpu.pipeline_mode<synchronous>, transform_indices = @transform_1, window_bounds = array<i64: 24, 64>}, {pipeline_mode = #tpu.pipeline_mode<synchronous>, transform_indices = @transform_2, window_bounds = array<i64: 576, 64>}, {pipeline_mode = #tpu.pipeline_mode<synchronous>, transform_indices = @transform_3, window_bounds = array<i64: 3, 64>}, {pipeline_mode = #tpu.pipeline_mode<synchronous>, transform_indices = @transform_4, window_bounds = array<i64: 3, 64>}, {pipeline_mode = #tpu.pipeline_mode<synchronous>, transform_indices = @transform_5, window_bounds = array<i64: 3, 64>}, {pipeline_mode = #tpu.pipeline_mode<synchronous>, transform_indices = @transform_6, window_bounds = array<i64: 192, 128>}, {pipeline_mode = #tpu.pipeline_mode<synchronous>, transform_indices = @transform_7, window_bounds = array<i64: 1, 128>}, {transform_indices = @transform_8, window_bounds = array<i64: 8, 128>}]} {
    %c0 = arith.constant 0 : index
    %c0_0 = arith.constant 0 : index
    %c0_1 = arith.constant 0 : index
    %0 = vector.load %arg1[%c0, %c0_0, %c0_1] : memref<8x16x1xi32, #tpu.memory_space<vmem>>, vector<8x16x1xi32>
    %1 = vector.shape_cast %0 : vector<8x16x1xi32> to vector<128x1xi32>
    %2 = tpu.iota {dimensions = array<i32: 1>} : vector<128x24xi32>
    %3 = vector.broadcast %1 : vector<128x1xi32> to vector<128x24xi32>
    %4 = arith.cmpi eq, %2, %3 : vector<128x24xi32>
    %5 = arith.extui %4 : vector<128x24xi1> to vector<128x24xi32>
    %6 = arith.sitofp %5 : vector<128x24xi32> to vector<128x24xf32>
    %c0_2 = arith.constant 0 : index
    %c0_3 = arith.constant 0 : index
    %7 = vector.load %arg2[%c0_2, %c0_3] : memref<24x64xf32, #tpu.memory_space<vmem>>, vector<24x64xf32>
    %cst = arith.constant dense<0.000000e+00> : vector<128x64xf32>
    %8 = tpu.matmul %6, %7, %cst {dimension_numbers = #tpu.dot_dimension_numbers<[1], [0], [0], [1], [0, 0, 1, 1], [], []>} : vector<128x24xf32>, vector<24x64xf32>, vector<128x64xf32> -> vector<128x64xf32>
    %9 = vector.shape_cast %8 : vector<128x64xf32> to vector<8x16x64xf32>
    %cst_4 = arith.constant 0.000000e+00 : f32
    %10 = vector.broadcast %cst_4 : f32 to vector<8x20x64xf32>
    %c0_5 = arith.constant 0 : index
    %c0_6 = arith.constant 0 : index
    %c0_7 = arith.constant 0 : index
    %11 = vector.load %arg10[%c0_5, %c0_6, %c0_7] : memref<8x20x64xf32, #tpu.memory_space<vmem>>, vector<8x20x64xf32>
    tpu.vector_store %arg10[%c0_5, %c0_6, %c0_7], %10 {strides = array<i32>} : memref<8x20x64xf32, #tpu.memory_space<vmem>>, vector<8x20x64xf32>,
    %c0_8 = arith.constant 0 : index
    %c2 = arith.constant 2 : index
    %c0_9 = arith.constant 0 : index
    %12 = vector.load %arg10[%c0_8, %c2, %c0_9] : memref<8x20x64xf32, #tpu.memory_space<vmem>>, vector<8x16x64xf32>
    tpu.vector_store %arg10[%c0_8, %c2, %c0_9], %9 {strides = array<i32>} : memref<8x20x64xf32, #tpu.memory_space<vmem>>, vector<8x16x64xf32>,
    %cst_10 = arith.constant 0.000000e+00 : f32
    %13 = vector.broadcast %cst_10 : f32 to vector<128x64xf32>
    %c0_11 = arith.constant 0 : index
    %c2_12 = arith.constant 2 : index
    %c0_13 = arith.constant 0 : index
    %14 = vector.load %arg10[%c0_11, %c2_12, %c0_13] : memref<8x20x64xf32, #tpu.memory_space<vmem>>, vector<8x16x64xf32>
    %15 = vector.shape_cast %14 : vector<8x16x64xf32> to vector<128x64xf32>
    %c0_14 = arith.constant 0 : index
    %c0_15 = arith.constant 0 : index
    %16 = vector.load %arg3[%c0_14, %c0_15] : memref<576x64xf32, #tpu.memory_space<vmem>>, vector<64x64xf32>
    %cst_16 = arith.constant dense<0.000000e+00> : vector<128x64xf32>
    %17 = tpu.matmul %15, %16, %cst_16 {dimension_numbers = #tpu.dot_dimension_numbers<[1], [0], [0], [1], [0, 0, 1, 1], [], []>} : vector<128x64xf32>, vector<64x64xf32>, vector<128x64xf32> -> vector<128x64xf32>
    %18 = arith.addf %13, %17 : vector<128x64xf32>
    %19 = vector.shape_cast %18 : vector<128x64xf32> to vector<8x16x64xf32>
    %c0_17 = arith.constant 0 : index
    %c0_18 = arith.constant 0 : index
    %20 = vector.load %arg4[%c0_17, %c0_18] : memref<3x64xf32, #tpu.memory_space<vmem>>, vector<1x64xf32>
    %21 = vector.shape_cast %20 : vector<1x64xf32> to vector<1x1x64xf32>
    %22 = vector.broadcast %21 : vector<1x1x64xf32> to vector<8x16x64xf32>
    %23 = arith.addf %19, %22 : vector<8x16x64xf32>
    %cst_19 = arith.constant dense<0.000000e+00> : vector<8x16xf32>
    %24 = vector.multi_reduction <add>, %23, %cst_19 [2] : vector<8x16x64xf32> to vector<8x16xf32>
    %25 = vector.shape_cast %24 : vector<8x16xf32> to vector<8x16x1xf32>
    %cst_20 = arith.constant 6.400000e+01 : f32
    %26 = vector.broadcast %cst_20 : f32 to vector<8x16x1xf32>
    %27 = arith.divf %25, %26 : vector<8x16x1xf32>
    %28 = vector.broadcast %27 : vector<8x16x1xf32> to vector<8x16x64xf32>
    %29 = arith.subf %23, %28 : vector<8x16x64xf32>
    %30 = vector.broadcast %27 : vector<8x16x1xf32> to vector<8x16x64xf32>
    %31 = arith.subf %23, %30 : vector<8x16x64xf32>
    %32 = arith.mulf %29, %31 : vector<8x16x64xf32>
    %cst_21 = arith.constant dense<0.000000e+00> : vector<8x16xf32>
    %33 = vector.multi_reduction <add>, %32, %cst_21 [2] : vector<8x16x64xf32> to vector<8x16xf32>
    %34 = vector.shape_cast %33 : vector<8x16xf32> to vector<8x16x1xf32>
    %cst_22 = arith.constant 6.400000e+01 : f32
    %35 = vector.broadcast %cst_22 : f32 to vector<8x16x1xf32>
    %36 = arith.divf %34, %35 : vector<8x16x1xf32>
    %37 = vector.broadcast %27 : vector<8x16x1xf32> to vector<8x16x64xf32>
    %38 = arith.subf %23, %37 : vector<8x16x64xf32>
    %cst_23 = arith.constant 9.99999974E-6 : f32
    %39 = vector.broadcast %cst_23 : f32 to vector<8x16x1xf32>
    %40 = arith.addf %36, %39 : vector<8x16x1xf32>
    %41 = math.rsqrt %40 : vector<8x16x1xf32>
    %42 = vector.broadcast %41 : vector<8x16x1xf32> to vector<8x16x64xf32>
    %43 = arith.mulf %38, %42 : vector<8x16x64xf32>
    %c0_24 = arith.constant 0 : index
    %c0_25 = arith.constant 0 : index
    %44 = vector.load %arg5[%c0_24, %c0_25] : memref<3x64xf32, #tpu.memory_space<vmem>>, vector<1x64xf32>
    %45 = vector.shape_cast %44 : vector<1x64xf32> to vector<1x1x64xf32>
    %46 = vector.broadcast %45 : vector<1x1x64xf32> to vector<8x16x64xf32>
    %47 = arith.mulf %43, %46 : vector<8x16x64xf32>
    %c0_26 = arith.constant 0 : index
    %c0_27 = arith.constant 0 : index
    %48 = vector.load %arg6[%c0_26, %c0_27] : memref<3x64xf32, #tpu.memory_space<vmem>>, vector<1x64xf32>
    %49 = vector.shape_cast %48 : vector<1x64xf32> to vector<1x1x64xf32>
    %50 = vector.broadcast %49 : vector<1x1x64xf32> to vector<8x16x64xf32>
    %51 = arith.addf %47, %50 : vector<8x16x64xf32>
    %cst_28 = arith.constant 0.000000e+00 : f32
    %52 = vector.broadcast %cst_28 : f32 to vector<8x16x64xf32>
    %53 = arith.maximumf %51, %52 : vector<8x16x64xf32>
    %cst_29 = arith.constant dense<0xFF800000> : vector<8x64xf32>
    %54 = vector.multi_reduction <maximumf>, %53, %cst_29 [1] : vector<8x16x64xf32> to vector<8x64xf32>
    %cst_30 = arith.constant 0.000000e+00 : f32
    %55 = vector.broadcast %cst_30 : f32 to vector<128x64xf32>
    %c0_31 = arith.constant 0 : index
    %c1 = arith.constant 1 : index
    %c0_32 = arith.constant 0 : index
    %56 = vector.load %arg10[%c0_31, %c1, %c0_32] : memref<8x20x64xf32, #tpu.memory_space<vmem>>, vector<8x16x64xf32>
    %57 = vector.shape_cast %56 : vector<8x16x64xf32> to vector<128x64xf32>
    %c64 = arith.constant 64 : index
    %c0_33 = arith.constant 0 : index
    %58 = vector.load %arg3[%c64, %c0_33] : memref<576x64xf32, #tpu.memory_space<vmem>>, vector<64x64xf32>
    %cst_34 = arith.constant dense<0.000000e+00> : vector<128x64xf32>
    %59 = tpu.matmul %57, %58, %cst_34 {dimension_numbers = #tpu.dot_dimension_numbers<[1], [0], [0], [1], [0, 0, 1, 1], [], []>} : vector<128x64xf32>, vector<64x64xf32>, vector<128x64xf32> -> vector<128x64xf32>
    %60 = arith.addf %55, %59 : vector<128x64xf32>
    %c0_35 = arith.constant 0 : index
    %c2_36 = arith.constant 2 : index
    %c0_37 = arith.constant 0 : index
    %61 = vector.load %arg10[%c0_35, %c2_36, %c0_37] : memref<8x20x64xf32, #tpu.memory_space<vmem>>, vector<8x16x64xf32>
    %62 = vector.shape_cast %61 : vector<8x16x64xf32> to vector<128x64xf32>
    %c128 = arith.constant 128 : index
    %c0_38 = arith.constant 0 : index
    %63 = vector.load %arg3[%c128, %c0_38] : memref<576x64xf32, #tpu.memory_space<vmem>>, vector<64x64xf32>
    %cst_39 = arith.constant dense<0.000000e+00> : vector<128x64xf32>
    %64 = tpu.matmul %62, %63, %cst_39 {dimension_numbers = #tpu.dot_dimension_numbers<[1], [0], [0], [1], [0, 0, 1, 1], [], []>} : vector<128x64xf32>, vector<64x64xf32>, vector<128x64xf32> -> vector<128x64xf32>
    %65 = arith.addf %60, %64 : vector<128x64xf32>
    %c0_40 = arith.constant 0 : index
    %c3 = arith.constant 3 : index
    %c0_41 = arith.constant 0 : index
    %66 = vector.load %arg10[%c0_40, %c3, %c0_41] : memref<8x20x64xf32, #tpu.memory_space<vmem>>, vector<8x16x64xf32>
    %67 = vector.shape_cast %66 : vector<8x16x64xf32> to vector<128x64xf32>
    %c192 = arith.constant 192 : index
    %c0_42 = arith.constant 0 : index
    %68 = vector.load %arg3[%c192, %c0_42] : memref<576x64xf32, #tpu.memory_space<vmem>>, vector<64x64xf32>
    %cst_43 = arith.constant dense<0.000000e+00> : vector<128x64xf32>
    %69 = tpu.matmul %67, %68, %cst_43 {dimension_numbers = #tpu.dot_dimension_numbers<[1], [0], [0], [1], [0, 0, 1, 1], [], []>} : vector<128x64xf32>, vector<64x64xf32>, vector<128x64xf32> -> vector<128x64xf32>
    %70 = arith.addf %65, %69 : vector<128x64xf32>
    %71 = vector.shape_cast %70 : vector<128x64xf32> to vector<8x16x64xf32>
    %c1_44 = arith.constant 1 : index
    %c0_45 = arith.constant 0 : index
    %72 = vector.load %arg4[%c1_44, %c0_45] : memref<3x64xf32, #tpu.memory_space<vmem>>, vector<1x64xf32>
    %73 = vector.shape_cast %72 : vector<1x64xf32> to vector<1x1x64xf32>
    %74 = vector.broadcast %73 : vector<1x1x64xf32> to vector<8x16x64xf32>
    %75 = arith.addf %71, %74 : vector<8x16x64xf32>
    %cst_46 = arith.constant dense<0.000000e+00> : vector<8x16xf32>
    %76 = vector.multi_reduction <add>, %75, %cst_46 [2] : vector<8x16x64xf32> to vector<8x16xf32>
    %77 = vector.shape_cast %76 : vector<8x16xf32> to vector<8x16x1xf32>
    %cst_47 = arith.constant 6.400000e+01 : f32
    %78 = vector.broadcast %cst_47 : f32 to vector<8x16x1xf32>
    %79 = arith.divf %77, %78 : vector<8x16x1xf32>
    %80 = vector.broadcast %79 : vector<8x16x1xf32> to vector<8x16x64xf32>
    %81 = arith.subf %75, %80 : vector<8x16x64xf32>
    %82 = vector.broadcast %79 : vector<8x16x1xf32> to vector<8x16x64xf32>
    %83 = arith.subf %75, %82 : vector<8x16x64xf32>
    %84 = arith.mulf %81, %83 : vector<8x16x64xf32>
    %cst_48 = arith.constant dense<0.000000e+00> : vector<8x16xf32>
    %85 = vector.multi_reduction <add>, %84, %cst_48 [2] : vector<8x16x64xf32> to vector<8x16xf32>
    %86 = vector.shape_cast %85 : vector<8x16xf32> to vector<8x16x1xf32>
    %cst_49 = arith.constant 6.400000e+01 : f32
    %87 = vector.broadcast %cst_49 : f32 to vector<8x16x1xf32>
    %88 = arith.divf %86, %87 : vector<8x16x1xf32>
    %89 = vector.broadcast %79 : vector<8x16x1xf32> to vector<8x16x64xf32>
    %90 = arith.subf %75, %89 : vector<8x16x64xf32>
    %cst_50 = arith.constant 9.99999974E-6 : f32
    %91 = vector.broadcast %cst_50 : f32 to vector<8x16x1xf32>
    %92 = arith.addf %88, %91 : vector<8x16x1xf32>
    %93 = math.rsqrt %92 : vector<8x16x1xf32>
    %94 = vector.broadcast %93 : vector<8x16x1xf32> to vector<8x16x64xf32>
    %95 = arith.mulf %90, %94 : vector<8x16x64xf32>
    %c1_51 = arith.constant 1 : index
    %c0_52 = arith.constant 0 : index
    %96 = vector.load %arg5[%c1_51, %c0_52] : memref<3x64xf32, #tpu.memory_space<vmem>>, vector<1x64xf32>
    %97 = vector.shape_cast %96 : vector<1x64xf32> to vector<1x1x64xf32>
    %98 = vector.broadcast %97 : vector<1x1x64xf32> to vector<8x16x64xf32>
    %99 = arith.mulf %95, %98 : vector<8x16x64xf32>
    %c1_53 = arith.constant 1 : index
    %c0_54 = arith.constant 0 : index
    %100 = vector.load %arg6[%c1_53, %c0_54] : memref<3x64xf32, #tpu.memory_space<vmem>>, vector<1x64xf32>
    %101 = vector.shape_cast %100 : vector<1x64xf32> to vector<1x1x64xf32>
    %102 = vector.broadcast %101 : vector<1x1x64xf32> to vector<8x16x64xf32>
    %103 = arith.addf %99, %102 : vector<8x16x64xf32>
    %cst_55 = arith.constant 0.000000e+00 : f32
    %104 = vector.broadcast %cst_55 : f32 to vector<8x16x64xf32>
    %105 = arith.maximumf %103, %104 : vector<8x16x64xf32>
    %cst_56 = arith.constant dense<0xFF800000> : vector<8x64xf32>
    %106 = vector.multi_reduction <maximumf>, %105, %cst_56 [1] : vector<8x16x64xf32> to vector<8x64xf32>
    %cst_57 = arith.constant 0.000000e+00 : f32
    %107 = vector.broadcast %cst_57 : f32 to vector<128x64xf32>
    %c0_58 = arith.constant 0 : index
    %c0_59 = arith.constant 0 : index
    %c0_60 = arith.constant 0 : index
    %108 = vector.load %arg10[%c0_58, %c0_59, %c0_60] : memref<8x20x64xf32, #tpu.memory_space<vmem>>, vector<8x16x64xf32>
    %109 = vector.shape_cast %108 : vector<8x16x64xf32> to vector<128x64xf32>
    %c256 = arith.constant 256 : index
    %c0_61 = arith.constant 0 : index
    %110 = vector.load %arg3[%c256, %c0_61] : memref<576x64xf32, #tpu.memory_space<vmem>>, vector<64x64xf32>
    %cst_62 = arith.constant dense<0.000000e+00> : vector<128x64xf32>
    %111 = tpu.matmul %109, %110, %cst_62 {dimension_numbers = #tpu.dot_dimension_numbers<[1], [0], [0], [1], [0, 0, 1, 1], [], []>} : vector<128x64xf32>, vector<64x64xf32>, vector<128x64xf32> -> vector<128x64xf32>
    %112 = arith.addf %107, %111 : vector<128x64xf32>
    %c0_63 = arith.constant 0 : index
    %c1_64 = arith.constant 1 : index
    %c0_65 = arith.constant 0 : index
    %113 = vector.load %arg10[%c0_63, %c1_64, %c0_65] : memref<8x20x64xf32, #tpu.memory_space<vmem>>, vector<8x16x64xf32>
    %114 = vector.shape_cast %113 : vector<8x16x64xf32> to vector<128x64xf32>
    %c320 = arith.constant 320 : index
    %c0_66 = arith.constant 0 : index
    %115 = vector.load %arg3[%c320, %c0_66] : memref<576x64xf32, #tpu.memory_space<vmem>>, vector<64x64xf32>
    %cst_67 = arith.constant dense<0.000000e+00> : vector<128x64xf32>
    %116 = tpu.matmul %114, %115, %cst_67 {dimension_numbers = #tpu.dot_dimension_numbers<[1], [0], [0], [1], [0, 0, 1, 1], [], []>} : vector<128x64xf32>, vector<64x64xf32>, vector<128x64xf32> -> vector<128x64xf32>
    %117 = arith.addf %112, %116 : vector<128x64xf32>
    %c0_68 = arith.constant 0 : index
    %c2_69 = arith.constant 2 : index
    %c0_70 = arith.constant 0 : index
    %118 = vector.load %arg10[%c0_68, %c2_69, %c0_70] : memref<8x20x64xf32, #tpu.memory_space<vmem>>, vector<8x16x64xf32>
    %119 = vector.shape_cast %118 : vector<8x16x64xf32> to vector<128x64xf32>
    %c384 = arith.constant 384 : index
    %c0_71 = arith.constant 0 : index
    %120 = vector.load %arg3[%c384, %c0_71] : memref<576x64xf32, #tpu.memory_space<vmem>>, vector<64x64xf32>
    %cst_72 = arith.constant dense<0.000000e+00> : vector<128x64xf32>
    %121 = tpu.matmul %119, %120, %cst_72 {dimension_numbers = #tpu.dot_dimension_numbers<[1], [0], [0], [1], [0, 0, 1, 1], [], []>} : vector<128x64xf32>, vector<64x64xf32>, vector<128x64xf32> -> vector<128x64xf32>
    %122 = arith.addf %117, %121 : vector<128x64xf32>
    %c0_73 = arith.constant 0 : index
    %c3_74 = arith.constant 3 : index
    %c0_75 = arith.constant 0 : index
    %123 = vector.load %arg10[%c0_73, %c3_74, %c0_75] : memref<8x20x64xf32, #tpu.memory_space<vmem>>, vector<8x16x64xf32>
    %124 = vector.shape_cast %123 : vector<8x16x64xf32> to vector<128x64xf32>
    %c448 = arith.constant 448 : index
    %c0_76 = arith.constant 0 : index
    %125 = vector.load %arg3[%c448, %c0_76] : memref<576x64xf32, #tpu.memory_space<vmem>>, vector<64x64xf32>
    %cst_77 = arith.constant dense<0.000000e+00> : vector<128x64xf32>
    %126 = tpu.matmul %124, %125, %cst_77 {dimension_numbers = #tpu.dot_dimension_numbers<[1], [0], [0], [1], [0, 0, 1, 1], [], []>} : vector<128x64xf32>, vector<64x64xf32>, vector<128x64xf32> -> vector<128x64xf32>
    %127 = arith.addf %122, %126 : vector<128x64xf32>
    %c0_78 = arith.constant 0 : index
    %c4 = arith.constant 4 : index
    %c0_79 = arith.constant 0 : index
    %128 = vector.load %arg10[%c0_78, %c4, %c0_79] : memref<8x20x64xf32, #tpu.memory_space<vmem>>, vector<8x16x64xf32>
    %129 = vector.shape_cast %128 : vector<8x16x64xf32> to vector<128x64xf32>
    %c512 = arith.constant 512 : index
    %c0_80 = arith.constant 0 : index
    %130 = vector.load %arg3[%c512, %c0_80] : memref<576x64xf32, #tpu.memory_space<vmem>>, vector<64x64xf32>
    %cst_81 = arith.constant dense<0.000000e+00> : vector<128x64xf32>
    %131 = tpu.matmul %129, %130, %cst_81 {dimension_numbers = #tpu.dot_dimension_numbers<[1], [0], [0], [1], [0, 0, 1, 1], [], []>} : vector<128x64xf32>, vector<64x64xf32>, vector<128x64xf32> -> vector<128x64xf32>
    %132 = arith.addf %127, %131 : vector<128x64xf32>
    %133 = vector.shape_cast %132 : vector<128x64xf32> to vector<8x16x64xf32>
    %c2_82 = arith.constant 2 : index
    %c0_83 = arith.constant 0 : index
    %134 = vector.load %arg4[%c2_82, %c0_83] : memref<3x64xf32, #tpu.memory_space<vmem>>, vector<1x64xf32>
    %135 = vector.shape_cast %134 : vector<1x64xf32> to vector<1x1x64xf32>
    %136 = vector.broadcast %135 : vector<1x1x64xf32> to vector<8x16x64xf32>
    %137 = arith.addf %133, %136 : vector<8x16x64xf32>
    %cst_84 = arith.constant dense<0.000000e+00> : vector<8x16xf32>
    %138 = vector.multi_reduction <add>, %137, %cst_84 [2] : vector<8x16x64xf32> to vector<8x16xf32>
    %139 = vector.shape_cast %138 : vector<8x16xf32> to vector<8x16x1xf32>
    %cst_85 = arith.constant 6.400000e+01 : f32
    %140 = vector.broadcast %cst_85 : f32 to vector<8x16x1xf32>
    %141 = arith.divf %139, %140 : vector<8x16x1xf32>
    %142 = vector.broadcast %141 : vector<8x16x1xf32> to vector<8x16x64xf32>
    %143 = arith.subf %137, %142 : vector<8x16x64xf32>
    %144 = vector.broadcast %141 : vector<8x16x1xf32> to vector<8x16x64xf32>
    %145 = arith.subf %137, %144 : vector<8x16x64xf32>
    %146 = arith.mulf %143, %145 : vector<8x16x64xf32>
    %cst_86 = arith.constant dense<0.000000e+00> : vector<8x16xf32>
    %147 = vector.multi_reduction <add>, %146, %cst_86 [2] : vector<8x16x64xf32> to vector<8x16xf32>
    %148 = vector.shape_cast %147 : vector<8x16xf32> to vector<8x16x1xf32>
    %cst_87 = arith.constant 6.400000e+01 : f32
    %149 = vector.broadcast %cst_87 : f32 to vector<8x16x1xf32>
    %150 = arith.divf %148, %149 : vector<8x16x1xf32>
    %151 = vector.broadcast %141 : vector<8x16x1xf32> to vector<8x16x64xf32>
    %152 = arith.subf %137, %151 : vector<8x16x64xf32>
    %cst_88 = arith.constant 9.99999974E-6 : f32
    %153 = vector.broadcast %cst_88 : f32 to vector<8x16x1xf32>
    %154 = arith.addf %150, %153 : vector<8x16x1xf32>
    %155 = math.rsqrt %154 : vector<8x16x1xf32>
    %156 = vector.broadcast %155 : vector<8x16x1xf32> to vector<8x16x64xf32>
    %157 = arith.mulf %152, %156 : vector<8x16x64xf32>
    %c2_89 = arith.constant 2 : index
    %c0_90 = arith.constant 0 : index
    %158 = vector.load %arg5[%c2_89, %c0_90] : memref<3x64xf32, #tpu.memory_space<vmem>>, vector<1x64xf32>
    %159 = vector.shape_cast %158 : vector<1x64xf32> to vector<1x1x64xf32>
    %160 = vector.broadcast %159 : vector<1x1x64xf32> to vector<8x16x64xf32>
    %161 = arith.mulf %157, %160 : vector<8x16x64xf32>
    %c2_91 = arith.constant 2 : index
    %c0_92 = arith.constant 0 : index
    %162 = vector.load %arg6[%c2_91, %c0_92] : memref<3x64xf32, #tpu.memory_space<vmem>>, vector<1x64xf32>
    %163 = vector.shape_cast %162 : vector<1x64xf32> to vector<1x1x64xf32>
    %164 = vector.broadcast %163 : vector<1x1x64xf32> to vector<8x16x64xf32>
    %165 = arith.addf %161, %164 : vector<8x16x64xf32>
    %cst_93 = arith.constant 0.000000e+00 : f32
    %166 = vector.broadcast %cst_93 : f32 to vector<8x16x64xf32>
    %167 = arith.maximumf %165, %166 : vector<8x16x64xf32>
    %cst_94 = arith.constant dense<0xFF800000> : vector<8x64xf32>
    %168 = vector.multi_reduction <maximumf>, %167, %cst_94 [1] : vector<8x16x64xf32> to vector<8x64xf32>
    %169 = tpu.concatenate %54, %106, %168 in 1 : vector<8x64xf32>, vector<8x64xf32>, vector<8x64xf32> -> vector<8x192xf32>
    %c0_95 = arith.constant 0 : index
    %c0_96 = arith.constant 0 : index
    %170 = vector.load %arg7[%c0_95, %c0_96] : memref<192x128xf32, #tpu.memory_space<vmem>>, vector<192x128xf32>
    %cst_97 = arith.constant dense<0.000000e+00> : vector<8x128xf32>
    %171 = tpu.matmul %169, %170, %cst_97 {dimension_numbers = #tpu.dot_dimension_numbers<[1], [0], [0], [1], [0, 0, 1, 1], [], []>} : vector<8x192xf32>, vector<192x128xf32>, vector<8x128xf32> -> vector<8x128xf32>
    %c0_98 = arith.constant 0 : index
    %c0_99 = arith.constant 0 : index
    %172 = vector.load %arg8[%c0_98, %c0_99] : memref<1x128xf32, #tpu.memory_space<vmem>>, vector<1x128xf32>
    %173 = vector.broadcast %172 : vector<1x128xf32> to vector<8x128xf32>
    %174 = arith.addf %171, %173 : vector<8x128xf32>
    %c0_100 = arith.constant 0 : index
    %c0_101 = arith.constant 0 : index
    %175 = vector.load %arg9[%c0_100, %c0_101] : memref<8x128xf32, #tpu.memory_space<vmem>>, vector<8x128xf32>
    tpu.vector_store %arg9[%c0_100, %c0_101], %174 {strides = array<i32>} : memref<8x128xf32, #tpu.memory_space<vmem>>, vector<8x128xf32>,
    return
  }
  func.func @transform_0(%arg0: i32) -> (i32, i32, i32) {
    %c0_i32 = arith.constant 0 : i32
    %c0_i32_0 = arith.constant 0 : i32
    %c0_i32_1 = arith.constant 0 : i32
    return %arg0, %c0_i32, %c0_i32_0 : i32, i32, i32
  }
  func.func @transform_1(%arg0: i32) -> (i32, i32) {
    %c0_i32 = arith.constant 0 : i32
    %c0_i32_0 = arith.constant 0 : i32
    %c0_i32_1 = arith.constant 0 : i32
    return %c0_i32, %c0_i32_0 : i32, i32
  }
  func.func @transform_2(%arg0: i32) -> (i32, i32) {
    %c0_i32 = arith.constant 0 : i32
    %c0_i32_0 = arith.constant 0 : i32
    %c0_i32_1 = arith.constant 0 : i32
    return %c0_i32, %c0_i32_0 : i32, i32
  }
  func.func @transform_3(%arg0: i32) -> (i32, i32) {
    %c0_i32 = arith.constant 0 : i32
    %c0_i32_0 = arith.constant 0 : i32
    %c0_i32_1 = arith.constant 0 : i32
    return %c0_i32, %c0_i32_0 : i32, i32
  }
  func.func @transform_4(%arg0: i32) -> (i32, i32) {
    %c0_i32 = arith.constant 0 : i32
    %c0_i32_0 = arith.constant 0 : i32
    %c0_i32_1 = arith.constant 0 : i32
    return %c0_i32, %c0_i32_0 : i32, i32
  }
  func.func @transform_5(%arg0: i32) -> (i32, i32) {
    %c0_i32 = arith.constant 0 : i32
    %c0_i32_0 = arith.constant 0 : i32
    %c0_i32_1 = arith.constant 0 : i32
    return %c0_i32, %c0_i32_0 : i32, i32
  }
  func.func @transform_6(%arg0: i32) -> (i32, i32) {
    %c0_i32 = arith.constant 0 : i32
    %c0_i32_0 = arith.constant 0 : i32
    %c0_i32_1 = arith.constant 0 : i32
    return %c0_i32, %c0_i32_0 : i32, i32
  }
  func.func @transform_7(%arg0: i32) -> (i32, i32) {
    %c0_i32 = arith.constant 0 : i32
    %c0_i32_0 = arith.constant 0 : i32
    %c0_i32_1 = arith.constant 0 : i32
    return %c0_i32, %c0_i32_0 : i32, i32
  }
  func.func @transform_8(%arg0: i32) -> (i32, i32) {
    %c0_i32 = arith.constant 0 : i32
    %c0_i32_0 = arith.constant 0 : i32
    return %arg0, %c0_i32 : i32, i32
  }
}

</mosaic_0001>

<llo_original>
// kernel: tpu_custom_call.1
$region0: #{tpu_custom_call.1}
  #allocation0 [shape = 'u32[]', space=smem, size = 0x4, offset = 0x4, fixed_abs, tag = 'smem constant byte address 0x4 - core index']
  #allocation1 [shape = 'u32[144,128]{1,0:T(1,128)}', space=vmem, size = 0x12000, scoped, tag = 'internal scratch']
  #allocation2 [shape = 'f32[8,20,64]{2,1,0:T(8,128)}', space=vmem, size = 0x18000, scoped, tag = 'scratch operand']
  %s0 = inlined_call_operand.vmem [shape: s32[16,16,1], index: 0, kind: input, shape index: {}]
  %s1 = inlined_call_operand.vmem [shape: f32[24,64], index: 1, kind: input, shape index: {}]
  %s2 = inlined_call_operand.vmem [shape: f32[576,64], index: 2, kind: input, shape index: {}]
  %s3 = inlined_call_operand.vmem [shape: f32[3,64], index: 3, kind: input, shape index: {}]
  %s4 = inlined_call_operand.vmem [shape: f32[3,64], index: 4, kind: input, shape index: {}]
  %s5 = inlined_call_operand.vmem [shape: f32[3,64], index: 5, kind: input, shape index: {}]
  %s6 = inlined_call_operand.vmem [shape: f32[192,128], index: 6, kind: input, shape index: {}]
  %s7 = inlined_call_operand.vmem [shape: f32[1,128], index: 7, kind: input, shape index: {}]
  %s8 = inlined_call_operand.hbm [shape: f32[16,128], index: 8, kind: output, shape index: {}]
  %s9 = sld [smem:[#allocation0]]
  $region65: #{tpu_custom_call.1} parent=0
    _
  %s11 = ssub.s32 1, %s9
  %s12 = scalar_select 0, %s11, %s9
  $region1: #{tpu_custom_call.1} parent=0
    #allocation3 [shape = 'u8[8192]{0}', space=vmem, size = 0x2000, scoped, tag = 'output window, operand 0']
    #allocation4 [shape = 's32[2]{0}', space=sflag, size = 0x8, scoped, tag = 'scoped memory for tpu_custom_call.1']
    %13 = vsyncpa [#allocation4], 0
    %s14 = scalar_lea.sflag [#allocation4], 1
    %15 = vsyncpa %s14, 0
    loop: start=0, step=1, limit=4
    $region2: #{tpu_custom_call.1} parent=1 // loop_pre_header
      _
    $region3: #{tpu_custom_call.1} parent=1 // loop_header
      %s17 = sphi 0, %s21
      %p18 = scmp.ge.s32.totalorder %s17, 4
      %s27 = sphi 0, %s29
      %s30 = sphi 0, %s27
      %s31 = sphi 0, %s30
      %s47 = sphi 0, %s31
      %s51 = sphi 0, %s51
      %s53 = sphi 0, %s51
      %s54 = sphi 0, %s53
      %s68 = sphi 0, %s54
      %s72 = sphi 0, %s72
      %s74 = sphi 0, %s72
      %s75 = sphi 0, %s74
      %s89 = sphi 0, %s75
      %s93 = sphi 0, %s93
      %s95 = sphi 0, %s93
      %s96 = sphi 0, %s95
      %s110 = sphi 0, %s96
      %s114 = sphi 0, %s114
      %s116 = sphi 0, %s114
      %s117 = sphi 0, %s116
      %s131 = sphi 0, %s117
      %s135 = sphi 0, %s135
      %s137 = sphi 0, %s135
      %s138 = sphi 0, %s137
      %s152 = sphi 0, %s138
      %s156 = sphi 0, %s156
      %s158 = sphi 0, %s156
      %s159 = sphi 0, %s158
      %s173 = sphi 0, %s159
      %s177 = sphi 0, %s177
      %s179 = sphi 0, %s177
      %s180 = sphi 0, %s179
      %s194 = sphi 0, %s180
      %s200 = sphi 0, %s202
      %s203 = sphi 0, %s200
      %s204 = sphi 0, %s203
      %s220 = sphi 0, %s204
    $region4: #{tpu_custom_call.1} parent=1 // loop_header_branch
      %20 = sbr.rel (%p18) target = $region8
    $region5: #{tpu_custom_call.1} parent=1 // loop_body
      %s22 = ssub.s32 %s17, 1
      %s23 = ssub.s32 %s17, 2
      %s24 = sadd.s32 %s17, 1
      %s25 = ssub.s32 %s17, %s24
      %p26 = scmp.eq.s32.totalorder %s25, 0
      %s28 = sadd.s32 %s27, 1
      %s29 = scalar_select %p26, %s27, %s28
      %p32 = pneg %p26
      %p33 = scmp.eq.s32.totalorder %s17, 1
      %p34 = por %p32, %p33
      %p35 = scmp.ne.s32.totalorder %s27, %s30
      %p36 = scmp.eq.s32.totalorder %s17, 0
      %p37 = por %p35, %p36
      %p38 = scmp.ne.s32.totalorder %s27, %s30
      %p39 = scmp.eq.s32.totalorder %s22, 1
      %p40 = por %p38, %p39
      %p41 = scmp.ne.s32.totalorder %s30, %s31
      %p42 = scmp.eq.s32.totalorder %s22, 0
      %p43 = por %p41, %p42
      %p44 = scmp.ne.s32.totalorder %s30, %s31
      %p45 = scmp.eq.s32.totalorder %s23, 1
      %p46 = por %p44, %p45
      %p48 = scmp.ne.s32.totalorder %s31, %s47
      %p49 = scmp.eq.s32.totalorder %s23, 0
      %p50 = por %p48, %p49
      %s52 = sadd.s32 %s51, 1
      %p55 = scmp.eq.s32.totalorder %s17, 1
      %p56 = scmp.ne.s32.totalorder %s51, %s53
      %p57 = scmp.eq.s32.totalorder %s17, 0
      %p58 = por %p56, %p57
      %p59 = scmp.ne.s32.totalorder %s51, %s53
      %p60 = scmp.eq.s32.totalorder %s22, 1
      %p61 = por %p59, %p60
      %p62 = scmp.ne.s32.totalorder %s53, %s54
      %p63 = scmp.eq.s32.totalorder %s22, 0
      %p64 = por %p62, %p63
      %p65 = scmp.ne.s32.totalorder %s53, %s54
      %p66 = scmp.eq.s32.totalorder %s23, 1
      %p67 = por %p65, %p66
      %p69 = scmp.ne.s32.totalorder %s54, %s68
      %p70 = scmp.eq.s32.totalorder %s23, 0
      %p71 = por %p69, %p70
      %s73 = sadd.s32 %s72, 1
      %p76 = scmp.eq.s32.totalorder %s17, 1
      %p77 = scmp.ne.s32.totalorder %s72, %s74
      %p78 = scmp.eq.s32.totalorder %s17, 0
      %p79 = por %p77, %p78
      %p80 = scmp.ne.s32.totalorder %s72, %s74
      %p81 = scmp.eq.s32.totalorder %s22, 1
      %p82 = por %p80, %p81
      %p83 = scmp.ne.s32.totalorder %s74, %s75
      %p84 = scmp.eq.s32.totalorder %s22, 0
      %p85 = por %p83, %p84
      %p86 = scmp.ne.s32.totalorder %s74, %s75
      %p87 = scmp.eq.s32.totalorder %s23, 1
      %p88 = por %p86, %p87
      %p90 = scmp.ne.s32.totalorder %s75, %s89
      %p91 = scmp.eq.s32.totalorder %s23, 0
      %p92 = por %p90, %p91
      %s94 = sadd.s32 %s93, 1
      %p97 = scmp.eq.s32.totalorder %s17, 1
      %p98 = scmp.ne.s32.totalorder %s93, %s95
      %p99 = scmp.eq.s32.totalorder %s17, 0
      %p100 = por %p98, %p99
      %p101 = scmp.ne.s32.totalorder %s93, %s95
      %p102 = scmp.eq.s32.totalorder %s22, 1
      %p103 = por %p101, %p102
      %p104 = scmp.ne.s32.totalorder %s95, %s96
      %p105 = scmp.eq.s32.totalorder %s22, 0
      %p106 = por %p104, %p105
      %p107 = scmp.ne.s32.totalorder %s95, %s96
      %p108 = scmp.eq.s32.totalorder %s23, 1
      %p109 = por %p107, %p108
      %p111 = scmp.ne.s32.totalorder %s96, %s110
      %p112 = scmp.eq.s32.totalorder %s23, 0
      %p113 = por %p111, %p112
      %s115 = sadd.s32 %s114, 1
      %p118 = scmp.eq.s32.totalorder %s17, 1
      %p119 = scmp.ne.s32.totalorder %s114, %s116
      %p120 = scmp.eq.s32.totalorder %s17, 0
      %p121 = por %p119, %p120
      %p122 = scmp.ne.s32.totalorder %s114, %s116
      %p123 = scmp.eq.s32.totalorder %s22, 1
      %p124 = por %p122, %p123
      %p125 = scmp.ne.s32.totalorder %s116, %s117
      %p126 = scmp.eq.s32.totalorder %s22, 0
      %p127 = por %p125, %p126
      %p128 = scmp.ne.s32.totalorder %s116, %s117
      %p129 = scmp.eq.s32.totalorder %s23, 1
      %p130 = por %p128, %p129
      %p132 = scmp.ne.s32.totalorder %s117, %s131
      %p133 = scmp.eq.s32.totalorder %s23, 0
      %p134 = por %p132, %p133
      %s136 = sadd.s32 %s135, 1
      %p139 = scmp.eq.s32.totalorder %s17, 1
      %p140 = scmp.ne.s32.totalorder %s135, %s137
      %p141 = scmp.eq.s32.totalorder %s17, 0
      %p142 = por %p140, %p141
      %p143 = scmp.ne.s32.totalorder %s135, %s137
      %p144 = scmp.eq.s32.totalorder %s22, 1
      %p145 = por %p143, %p144
      %p146 = scmp.ne.s32.totalorder %s137, %s138
      %p147 = scmp.eq.s32.totalorder %s22, 0
      %p148 = por %p146, %p147
      %p149 = scmp.ne.s32.totalorder %s137, %s138
      %p150 = scmp.eq.s32.totalorder %s23, 1
      %p151 = por %p149, %p150
      %p153 = scmp.ne.s32.totalorder %s138, %s152
      %p154 = scmp.eq.s32.totalorder %s23, 0
      %p155 = por %p153, %p154
      %s157 = sadd.s32 %s156, 1
      %p160 = scmp.eq.s32.totalorder %s17, 1
      %p161 = scmp.ne.s32.totalorder %s156, %s158
      %p162 = scmp.eq.s32.totalorder %s17, 0
      %p163 = por %p161, %p162
      %p164 = scmp.ne.s32.totalorder %s156, %s158
      %p165 = scmp.eq.s32.totalorder %s22, 1
      %p166 = por %p164, %p165
      %p167 = scmp.ne.s32.totalorder %s158, %s159
      %p168 = scmp.eq.s32.totalorder %s22, 0
      %p169 = por %p167, %p168
      %p170 = scmp.ne.s32.totalorder %s158, %s159
      %p171 = scmp.eq.s32.totalorder %s23, 1
      %p172 = por %p170, %p171
      %p174 = scmp.ne.s32.totalorder %s159, %s173
      %p175 = scmp.eq.s32.totalorder %s23, 0
      %p176 = por %p174, %p175
      %s178 = sadd.s32 %s177, 1
      %p181 = scmp.eq.s32.totalorder %s17, 1
      %p182 = scmp.ne.s32.totalorder %s177, %s179
      %p183 = scmp.eq.s32.totalorder %s17, 0
      %p184 = por %p182, %p183
      %p185 = scmp.ne.s32.totalorder %s177, %s179
      %p186 = scmp.eq.s32.totalorder %s22, 1
      %p187 = por %p185, %p186
      %p188 = scmp.ne.s32.totalorder %s179, %s180
      %p189 = scmp.eq.s32.totalorder %s22, 0
      %p190 = por %p188, %p189
      %p191 = scmp.ne.s32.totalorder %s179, %s180
      %p192 = scmp.eq.s32.totalorder %s23, 1
      %p193 = por %p191, %p192
      %p195 = scmp.ne.s32.totalorder %s180, %s194
      %p196 = scmp.eq.s32.totalorder %s23, 0
      %p197 = por %p195, %p196
      %s198 = ssub.s32 %s17, %s24
      %p199 = scmp.eq.s32.totalorder %s198, 0
      %s201 = sadd.s32 %s200, 1
      %s202 = scalar_select %p199, %s200, %s201
      %p205 = pneg %p199
      %p206 = scmp.eq.s32.totalorder %s17, 1
      %p207 = por %p205, %p206
      %p208 = scmp.ne.s32.totalorder %s200, %s203
      %p209 = scmp.eq.s32.totalorder %s17, 0
      %p210 = por %p208, %p209
      %p211 = scmp.ne.s32.totalorder %s200, %s203
      %p212 = scmp.eq.s32.totalorder %s22, 1
      %p213 = por %p211, %p212
      %p214 = scmp.ne.s32.totalorder %s203, %s204
      %p215 = scmp.eq.s32.totalorder %s22, 0
      %p216 = por %p214, %p215
      %p217 = scmp.ne.s32.totalorder %s203, %s204
      %p218 = scmp.eq.s32.totalorder %s23, 1
      %p219 = por %p217, %p218
      %p221 = scmp.ne.s32.totalorder %s204, %s220
      %p222 = scmp.eq.s32.totalorder %s23, 0
      %p223 = por %p221, %p222
      %p224 = scmp.le.s32.totalorder 1, %s17
      %p225 = scmp.lt.s32.totalorder %s17, 3
      %p226 = pnand %p224, %p225
      %p227 = pneg %p226
      // Predicated region
      $region9: #{tpu_custom_call.1} parent=5 // pred_check
        _
      $region10: #{tpu_custom_call.1} parent=5 // pred_check_branch
        %229 = sbr.rel (%p226) target = $region12
      $region11: #{tpu_custom_call.1} parent=5 // pred_region
        %s230 = ssub.s32 %s17, 1
        // Predicated region
        $region13: #{tpu_custom_call.1} parent=11 // pred_check
          %p231 = pneg %p64
        $region14: #{tpu_custom_call.1} parent=11 // pred_check_branch
          %233 = sbr.rel (%p231) target = $region16
        $region15: #{tpu_custom_call.1} parent=11 // pred_region
          _
        $region16: #{tpu_custom_call.1} parent=11 // pred_fallthru
          _
        // Predicated region
        $region17: #{tpu_custom_call.1} parent=11 // pred_check
          %p234 = pneg %p85
        $region18: #{tpu_custom_call.1} parent=11 // pred_check_branch
          %236 = sbr.rel (%p234) target = $region20
        $region19: #{tpu_custom_call.1} parent=11 // pred_region
          _
        $region20: #{tpu_custom_call.1} parent=11 // pred_fallthru
          _
        // Predicated region
        $region21: #{tpu_custom_call.1} parent=11 // pred_check
          %p237 = pneg %p106
        $region22: #{tpu_custom_call.1} parent=11 // pred_check_branch
          %239 = sbr.rel (%p237) target = $region24
        $region23: #{tpu_custom_call.1} parent=11 // pred_region
          _
        $region24: #{tpu_custom_call.1} parent=11 // pred_fallthru
          _
        // Predicated region
        $region25: #{tpu_custom_call.1} parent=11 // pred_check
          %p240 = pneg %p127
        $region26: #{tpu_custom_call.1} parent=11 // pred_check_branch
          %242 = sbr.rel (%p240) target = $region28
        $region27: #{tpu_custom_call.1} parent=11 // pred_region
          _
        $region28: #{tpu_custom_call.1} parent=11 // pred_fallthru
          _
        // Predicated region
        $region29: #{tpu_custom_call.1} parent=11 // pred_check
          %p243 = pneg %p148
        $region30: #{tpu_custom_call.1} parent=11 // pred_check_branch
          %245 = sbr.rel (%p243) target = $region32
        $region31: #{tpu_custom_call.1} parent=11 // pred_region
          _
        $region32: #{tpu_custom_call.1} parent=11 // pred_fallthru
          _
        // Predicated region
        $region33: #{tpu_custom_call.1} parent=11 // pred_check
          %p246 = pneg %p169
        $region34: #{tpu_custom_call.1} parent=11 // pred_check_branch
          %248 = sbr.rel (%p246) target = $region36
        $region35: #{tpu_custom_call.1} parent=11 // pred_region
          _
        $region36: #{tpu_custom_call.1} parent=11 // pred_fallthru
          _
        // Predicated region
        $region37: #{tpu_custom_call.1} parent=11 // pred_check
          %p249 = pneg %p190
        $region38: #{tpu_custom_call.1} parent=11 // pred_check_branch
          %251 = sbr.rel (%p249) target = $region40
        $region39: #{tpu_custom_call.1} parent=11 // pred_region
          _
        $region40: #{tpu_custom_call.1} parent=11 // pred_fallthru
          _
      $region12: #{tpu_custom_call.1} parent=5 // pred_fallthru
        _
      %p252 = scmp.lt.s32.totalorder %s17, 2
      // Predicated region
      $region41: #{tpu_custom_call.1} parent=5 // pred_check
        %p253 = pneg %p252
      $region42: #{tpu_custom_call.1} parent=5 // pred_check_branch
        %255 = sbr.rel (%p253) target = $region44
      $region43: #{tpu_custom_call.1} parent=5 // pred_region
        // Predicated region
        $region45: #{tpu_custom_call.1} parent=43 // pred_check
          %p256 = pneg %p37
        $region46: #{tpu_custom_call.1} parent=43 // pred_check_branch
          %258 = sbr.rel (%p256) target = $region48
        $region47: #{tpu_custom_call.1} parent=43 // pred_region
          %s259 = smul.u32 8, %s17
          %p260 = scmp.lt.s32.totalorder %s259, 15
          %s261 = scalar_select %p260, %s259, 15
          %s262 = smul.addr %s261, 2
          %s263 = smul.addr %s262, 8
          %s264 = scalar_lea.vmem %s0, %s263
          %s265 = smul.u32 8, %s17
        $region48: #{tpu_custom_call.1} parent=43 // pred_fallthru
          _
      $region44: #{tpu_custom_call.1} parent=5 // pred_fallthru
        _
      %p266 = scmp.le.s32.totalorder 1, %s17
      %p267 = scmp.lt.s32.totalorder %s17, 3
      %p268 = pnand %p266, %p267
      %p269 = pneg %p268
      // Predicated region
      $region49: #{tpu_custom_call.1} parent=5 // pred_check
        _
      $region50: #{tpu_custom_call.1} parent=5 // pred_check_branch
        %271 = sbr.rel (%p268) target = $region52
      $region51: #{tpu_custom_call.1} parent=5 // pred_region
        %s272 = ssub.s32 %s17, 1
        %s273 = smul.u32 8, %s22
        %p274 = scmp.lt.s32.totalorder %s273, 15
        %s275 = scalar_select %p274, %s273, 15
        %s276 = smul.addr %s275, 2
        %s277 = smul.addr %s276, 8
        %s278 = scalar_lea.vmem %s0, %s277
        %p279 = pneg %p43
        %p280 = pneg %p40
        %p281 = pneg %p64
        %p282 = pneg %p61
        %p283 = pneg %p85
        %p284 = pneg %p82
        %p285 = pneg %p106
        %p286 = pneg %p103
        %p287 = pneg %p127
        %p288 = pneg %p124
        %p289 = pneg %p148
        %p290 = pneg %p145
        %p291 = pneg %p169
        %p292 = pneg %p166
        %p293 = pneg %p190
        %p294 = pneg %p187
        %p295 = pneg %p216
        %p296 = pneg %p213
        %s297 = sand.u32 %s203, 1
        %s298 = scalar_lea.sflag [#allocation4], %s297
        %s299 = sand.u32 %s203, 1
        %s300 = smul.addr %s299, 8
        %s301 = scalar_lea.vmem [#allocation3], %s300
        %s302 = smul.u32 8, %s22
        %p303 = scmp.lt.s32.totalorder %s302, 15
        %s304 = scalar_select %p303, %s302, 15
        %s305 = smul.addr %s304, 2
        %s306 = smul.addr %s305, 8
        %s307 = scalar_lea.vmem %s0, %s306
        %s308 = smul.u32 8, %s22
        %v309 = vld [vmem:[%s307] sm:$0xff]
        %v310 = vld [vmem:[%s307 + $0x8] sm:$0xff]
        %v311 = vld [vmem:[%s307 + $0x10] sm:$0xff]
        %v312 = vld [vmem:[%s307 + $0x18] sm:$0xff]
        %v313 = vld [vmem:[%s307 + $0x20] sm:$0xff]
        %v314 = vld [vmem:[%s307 + $0x28] sm:$0xff]
        %v315 = vld [vmem:[%s307 + $0x30] sm:$0xff]
        %v316 = vld [vmem:[%s307 + $0x38] sm:$0xff]
        %v317 = vld [vmem:[%s307 + $0x40] sm:$0xff]
        %v318 = vld [vmem:[%s307 + $0x48] sm:$0xff]
        %v319 = vld [vmem:[%s307 + $0x50] sm:$0xff]
        %v320 = vld [vmem:[%s307 + $0x58] sm:$0xff]
        %v321 = vld [vmem:[%s307 + $0x60] sm:$0xff]
        %v322 = vld [vmem:[%s307 + $0x68] sm:$0xff]
        %v323 = vld [vmem:[%s307 + $0x70] sm:$0xff]
        %v324 = vld [vmem:[%s307 + $0x78] sm:$0xff]
        %v325 = vlaneseq
        %v326 = vand.u32 %v325, 127
        %327 = vset.pattern.permute.xlu0 0
        %328 = vperm.xlu0 %327, %v309
        %v329 = vpop.permute.xlu0 %328
        %330 = vset.pattern.permute.xlu0 0
        %331 = vperm.xlu0 %330, %v310
        %v332 = vpop.permute.xlu0 %331
        %333 = vset.pattern.permute.xlu0 0
        %334 = vperm.xlu0 %333, %v311
        %v335 = vpop.permute.xlu0 %334
        %336 = vset.pattern.permute.xlu0 0
        %337 = vperm.xlu0 %336, %v312
        %v338 = vpop.permute.xlu0 %337
        %339 = vset.pattern.permute.xlu0 0
        %340 = vperm.xlu0 %339, %v313
        %v341 = vpop.permute.xlu0 %340
        %342 = vset.pattern.permute.xlu0 0
        %343 = vperm.xlu0 %342, %v314
        %v344 = vpop.permute.xlu0 %343
        %345 = vset.pattern.permute.xlu0 0
        %346 = vperm.xlu0 %345, %v315
        %v347 = vpop.permute.xlu0 %346
        %348 = vset.pattern.permute.xlu0 0
        %349 = vperm.xlu0 %348, %v316
        %v350 = vpop.permute.xlu0 %349
        %351 = vset.pattern.permute.xlu0 0
        %352 = vperm.xlu0 %351, %v317
        %v353 = vpop.permute.xlu0 %352
        %354 = vset.pattern.permute.xlu0 0
        %355 = vperm.xlu0 %354, %v318
        %v356 = vpop.permute.xlu0 %355
        %357 = vset.pattern.permute.xlu0 0
        %358 = vperm.xlu0 %357, %v319
        %v359 = vpop.permute.xlu0 %358
        %360 = vset.pattern.permute.xlu0 0
        %361 = vperm.xlu0 %360, %v320
        %v362 = vpop.permute.xlu0 %361
        %363 = vset.pattern.permute.xlu0 0
        %364 = vperm.xlu0 %363, %v321
        %v365 = vpop.permute.xlu0 %364
        %366 = vset.pattern.permute.xlu0 0
        %367 = vperm.xlu0 %366, %v322
        %v368 = vpop.permute.xlu0 %367
        %369 = vset.pattern.permute.xlu0 0
        %370 = vperm.xlu0 %369, %v323
        %v371 = vpop.permute.xlu0 %370
        %372 = vset.pattern.permute.xlu0 0
        %373 = vperm.xlu0 %372, %v324
        %v374 = vpop.permute.xlu0 %373
        %vm375 = vcmp.eq.s32.totalorder %v326, %v329
        %vm376 = vcmp.eq.s32.totalorder %v326, %v332
        %vm377 = vcmp.eq.s32.totalorder %v326, %v335
        %vm378 = vcmp.eq.s32.totalorder %v326, %v338
        %vm379 = vcmp.eq.s32.totalorder %v326, %v341
        %vm380 = vcmp.eq.s32.totalorder %v326, %v344
        %vm381 = vcmp.eq.s32.totalorder %v326, %v347
        %vm382 = vcmp.eq.s32.totalorder %v326, %v350
        %vm383 = vcmp.eq.s32.totalorder %v326, %v353
        %vm384 = vcmp.eq.s32.totalorder %v326, %v356
        %vm385 = vcmp.eq.s32.totalorder %v326, %v359
        %vm386 = vcmp.eq.s32.totalorder %v326, %v362
        %vm387 = vcmp.eq.s32.totalorder %v326, %v365
        %vm388 = vcmp.eq.s32.totalorder %v326, %v368
        %vm389 = vcmp.eq.s32.totalorder %v326, %v371
        %vm390 = vcmp.eq.s32.totalorder %v326, %v374
        %v391 = vsel %vm375, 1, 0
        %v392 = vsel %vm376, 1, 0
        %v393 = vsel %vm377, 1, 0
        %v394 = vsel %vm378, 1, 0
        %v395 = vsel %vm379, 1, 0
        %v396 = vsel %vm380, 1, 0
        %v397 = vsel %vm381, 1, 0
        %v398 = vsel %vm382, 1, 0
        %v399 = vsel %vm383, 1, 0
        %v400 = vsel %vm384, 1, 0
        %v401 = vsel %vm385, 1, 0
        %v402 = vsel %vm386, 1, 0
        %v403 = vsel %vm387, 1, 0
        %v404 = vsel %vm388, 1, 0
        %v405 = vsel %vm389, 1, 0
        %v406 = vsel %vm390, 1, 0
        %v407 = vcvt.s32.f32 %v391
        %v408 = vcvt.s32.f32 %v392
        %v409 = vcvt.s32.f32 %v393
        %v410 = vcvt.s32.f32 %v394
        %v411 = vcvt.s32.f32 %v395
        %v412 = vcvt.s32.f32 %v396
        %v413 = vcvt.s32.f32 %v397
        %v414 = vcvt.s32.f32 %v398
        %v415 = vcvt.s32.f32 %v399
        %v416 = vcvt.s32.f32 %v400
        %v417 = vcvt.s32.f32 %v401
        %v418 = vcvt.s32.f32 %v402
        %v419 = vcvt.s32.f32 %v403
        %v420 = vcvt.s32.f32 %v404
        %v421 = vcvt.s32.f32 %v405
        %v422 = vcvt.s32.f32 %v406
        %v423 = vld [vmem:[%s1] sm:$0xff]
        %v424 = vld [vmem:[%s1 + $0x8] sm:$0xff]
        %v425 = vld [vmem:[%s1 + $0x10] sm:$0xff]
        %vm426 = vcmask 195584
        %v428 = vsel %vm426, %v407, 0
        %v431 = vsel %vm426, %v408, 0
        %v434 = vsel %vm426, %v409, 0
        %v437 = vsel %vm426, %v410, 0
        %v440 = vsel %vm426, %v411, 0
        %v443 = vsel %vm426, %v412, 0
        %v446 = vsel %vm426, %v413, 0
        %v449 = vsel %vm426, %v414, 0
        %v452 = vsel %vm426, %v415, 0
        %v455 = vsel %vm426, %v416, 0
        %v458 = vsel %vm426, %v417, 0
        %v461 = vsel %vm426, %v418, 0
        %v464 = vsel %vm426, %v419, 0
        %v467 = vsel %vm426, %v420, 0
        %v470 = vsel %vm426, %v421, 0
        %v473 = vsel %vm426, %v422, 0
        %475 = vmatprep.subr.mxu0 0.0
        %476 = vmatpush1.msra.mxu0 %v423
        %477 = vmatprep.subr.mxu0 0.0
        %478 = vmatpush1.msra.mxu0 %v424
        %479 = vmatprep.subr.mxu0 0.0
        %480 = vmatpush1.msra.mxu0 %v425
        %481 = vmatprep.subr.mxu0 0.0
        %482 = vmatpush1.msra.mxu0 0.0
        %483 = vmatprep.subr.mxu0 0.0
        %484 = vmatpush1.msra.mxu0 0.0
        %485 = vmatprep.subr.mxu0 0.0
        %486 = vmatpush1.msra.mxu0 0.0
        %487 = vmatprep.subr.mxu0 0.0
        %488 = vmatpush1.msra.mxu0 0.0
        %489 = vmatprep.subr.mxu0 0.0
        %490 = vmatpush1.msra.mxu0 0.0
        %491 = vmatprep.subr.mxu0 0.0
        %492 = vmatpush1.msra.mxu0 0.0
        %493 = vmatprep.subr.mxu0 0.0
        %494 = vmatpush1.msra.mxu0 0.0
        %495 = vmatprep.subr.mxu0 0.0
        %496 = vmatpush1.msra.mxu0 0.0
        %497 = vmatprep.subr.mxu0 0.0
        %498 = vmatpush1.msra.mxu0 0.0
        %499 = vmatprep.subr.mxu0 0.0
        %500 = vmatpush1.msra.mxu0 0.0
        %501 = vmatprep.subr.mxu0 0.0
        %502 = vmatpush1.msra.mxu0 0.0
        %503 = vmatprep.subr.mxu0 0.0
        %504 = vmatpush1.msra.mxu0 0.0
        %505 = vmatprep.subr.mxu0 0.0
        %506 = vmatpush1.msra.mxu0 0.0
        %507 = vmatprep.subr.mxu0 0.0
        %508 = vmatpush1.msra.mxu0 0.0
        %509 = vmatprep.subr.mxu0 0.0
        %510 = vmatpush1.msra.mxu0 0.0
        %511 = vmatprep.subr.mxu0 0.0
        %512 = vmatpush1.msra.mxu0 0.0
        %513 = vmatprep.subr.mxu0 0.0
        %514 = vmatpush1.msra.mxu0 0.0
        %515 = vmatprep.subr.mxu0 0.0
        %516 = vmatpush1.msra.mxu0 0.0
        %517 = vmatprep.subr.mxu0 0.0
        %518 = vmatpush1.msra.mxu0 0.0
        %519 = vmatprep.subr.mxu0 0.0
        %520 = vmatpush1.msra.mxu0 0.0
        %521 = vmatprep.subr.mxu0 0.0
        %522 = vmatpush1.msra.mxu0 0.0
        %523 = vmatprep.subr.mxu0 0.0
        %524 = vmatpush1.msra.mxu0 0.0
        %525 = vmatprep.subr.mxu0 0.0
        %526 = vmatpush1.msra.mxu0 0.0
        %527 = vmatprep.subr.mxu0 0.0
        %528 = vmatpush1.msra.mxu0 0.0
        %529 = vmatprep.subr.mxu0 0.0
        %530 = vmatpush1.msra.mxu0 0.0
        %531 = vmatprep.subr.mxu0 0.0
        %532 = vmatpush1.msra.mxu0 0.0
        %533 = vmatprep.subr.mxu0 0.0
        %534 = vmatpush1.msra.mxu0 0.0
        %535 = vmatprep.subr.mxu0 0.0
        %536 = vmatpush1.msra.mxu0 0.0
        %537 = vmatprep.subr.mxu0 0.0
        %538 = vmatpush1.msra.mxu0 0.0
        %539 = vmatprep.mubr.f32.mxu0 0.0
        %540 = vmatmul.mubr.f32.gmra.mrb[0].mxu0 %v428
        %v541 = vpop.f32.mrb[0].mxu0
        %v542 = vadd.f32 0.0, %v541
        %v543 = vpop.f32.mrb[0].mxu0
        %544 = vmatprep.mubr.f32.mxu0 0.0
        %545 = vmatmul.mubr.f32.gmra.mrb[0].mxu0 %v431
        %v546 = vpop.f32.mrb[0].mxu0
        %v547 = vadd.f32 0.0, %v546
        %v548 = vpop.f32.mrb[0].mxu0
        %549 = vmatprep.mubr.f32.mxu0 0.0
        %550 = vmatmul.mubr.f32.gmra.mrb[0].mxu0 %v434
        %v551 = vpop.f32.mrb[0].mxu0
        %v552 = vadd.f32 0.0, %v551
        %v553 = vpop.f32.mrb[0].mxu0
        %554 = vmatprep.mubr.f32.mxu0 0.0
        %555 = vmatmul.mubr.f32.gmra.mrb[0].mxu0 %v437
        %v556 = vpop.f32.mrb[0].mxu0
        %v557 = vadd.f32 0.0, %v556
        %v558 = vpop.f32.mrb[0].mxu0
        %559 = vmatprep.mubr.f32.mxu0 0.0
        %560 = vmatmul.mubr.f32.gmra.mrb[0].mxu0 %v440
        %v561 = vpop.f32.mrb[0].mxu0
        %v562 = vadd.f32 0.0, %v561
        %v563 = vpop.f32.mrb[0].mxu0
        %564 = vmatprep.mubr.f32.mxu0 0.0
        %565 = vmatmul.mubr.f32.gmra.mrb[0].mxu0 %v443
        %v566 = vpop.f32.mrb[0].mxu0
        %v567 = vadd.f32 0.0, %v566
        %v568 = vpop.f32.mrb[0].mxu0
        %569 = vmatprep.mubr.f32.mxu0 0.0
        %570 = vmatmul.mubr.f32.gmra.mrb[0].mxu0 %v446
        %v571 = vpop.f32.mrb[0].mxu0
        %v572 = vadd.f32 0.0, %v571
        %v573 = vpop.f32.mrb[0].mxu0
        %574 = vmatprep.mubr.f32.mxu0 0.0
        %575 = vmatmul.mubr.f32.gmra.mrb[0].mxu0 %v449
        %v576 = vpop.f32.mrb[0].mxu0
        %v577 = vadd.f32 0.0, %v576
        %v578 = vpop.f32.mrb[0].mxu0
        %579 = vmatprep.mubr.f32.mxu0 0.0
        %580 = vmatmul.mubr.f32.gmra.mrb[0].mxu0 %v452
        %v581 = vpop.f32.mrb[0].mxu0
        %v582 = vadd.f32 0.0, %v581
        %v583 = vpop.f32.mrb[0].mxu0
        %584 = vmatprep.mubr.f32.mxu0 0.0
        %585 = vmatmul.mubr.f32.gmra.mrb[0].mxu0 %v455
        %v586 = vpop.f32.mrb[0].mxu0
        %v587 = vadd.f32 0.0, %v586
        %v588 = vpop.f32.mrb[0].mxu0
        %589 = vmatprep.mubr.f32.mxu0 0.0
        %590 = vmatmul.mubr.f32.gmra.mrb[0].mxu0 %v458
        %v591 = vpop.f32.mrb[0].mxu0
        %v592 = vadd.f32 0.0, %v591
        %v593 = vpop.f32.mrb[0].mxu0
        %594 = vmatprep.mubr.f32.mxu0 0.0
        %595 = vmatmul.mubr.f32.gmra.mrb[0].mxu0 %v461
        %v596 = vpop.f32.mrb[0].mxu0
        %v597 = vadd.f32 0.0, %v596
        %v598 = vpop.f32.mrb[0].mxu0
        %599 = vmatprep.mubr.f32.mxu0 0.0
        %600 = vmatmul.mubr.f32.gmra.mrb[0].mxu0 %v464
        %v601 = vpop.f32.mrb[0].mxu0
        %v602 = vadd.f32 0.0, %v601
        %v603 = vpop.f32.mrb[0].mxu0
        %604 = vmatprep.mubr.f32.mxu0 0.0
        %605 = vmatmul.mubr.f32.gmra.mrb[0].mxu0 %v467
        %v606 = vpop.f32.mrb[0].mxu0
        %v607 = vadd.f32 0.0, %v606
        %v608 = vpop.f32.mrb[0].mxu0
        %609 = vmatprep.mubr.f32.mxu0 0.0
        %610 = vmatmul.mubr.f32.gmra.mrb[0].mxu0 %v470
        %v611 = vpop.f32.mrb[0].mxu0
        %v612 = vadd.f32 0.0, %v611
        %v613 = vpop.f32.mrb[0].mxu0
        %614 = vmatprep.mubr.f32.mxu0 0.0
        %615 = vmatmul.mubr.f32.gmra.mrb[0].mxu0 %v473
        %v616 = vpop.f32.mrb[0].mxu0
        %v617 = vadd.f32 0.0, %v616
        %v618 = vpop.f32.mrb[0].mxu0
        %619 = vdwg.mxu0
        %vm620 = vcmask 523264
        %621 = vst.msk [vmem:[#allocation2] sm:$0xff] %vm620, 0.0
        %622 = vst.msk [vmem:[#allocation2 + $0x8] sm:$0xff] %vm620, 0.0
        %vm623 = vcmask 519168
        %624 = vst.msk [vmem:[#allocation2 + $0x10] sm:$0xf] %vm623, 0.0
        %625 = vst.msk [vmem:[#allocation2 + $0x18] sm:$0xff] %vm620, 0.0
        %626 = vst.msk [vmem:[#allocation2 + $0x20] sm:$0xff] %vm620, 0.0
        %627 = vst.msk [vmem:[#allocation2 + $0x28] sm:$0xf] %vm623, 0.0
        %628 = vst.msk [vmem:[#allocation2 + $0x30] sm:$0xff] %vm620, 0.0
        %629 = vst.msk [vmem:[#allocation2 + $0x38] sm:$0xff] %vm620, 0.0
        %630 = vst.msk [vmem:[#allocation2 + $0x40] sm:$0xf] %vm623, 0.0
        %631 = vst.msk [vmem:[#allocation2 + $0x48] sm:$0xff] %vm620, 0.0
        %632 = vst.msk [vmem:[#allocation2 + $0x50] sm:$0xff] %vm620, 0.0
        %633 = vst.msk [vmem:[#allocation2 + $0x58] sm:$0xf] %vm623, 0.0
        %634 = vst.msk [vmem:[#allocation2 + $0x60] sm:$0xff] %vm620, 0.0
        %635 = vst.msk [vmem:[#allocation2 + $0x68] sm:$0xff] %vm620, 0.0
        %636 = vst.msk [vmem:[#allocation2 + $0x70] sm:$0xf] %vm623, 0.0
        %637 = vst.msk [vmem:[#allocation2 + $0x78] sm:$0xff] %vm620, 0.0
        %638 = vst.msk [vmem:[#allocation2 + $0x80] sm:$0xff] %vm620, 0.0
        %639 = vst.msk [vmem:[#allocation2 + $0x88] sm:$0xf] %vm623, 0.0
        %640 = vst.msk [vmem:[#allocation2 + $0x90] sm:$0xff] %vm620, 0.0
        %641 = vst.msk [vmem:[#allocation2 + $0x98] sm:$0xff] %vm620, 0.0
        %642 = vst.msk [vmem:[#allocation2 + $0xa0] sm:$0xf] %vm623, 0.0
        %643 = vst.msk [vmem:[#allocation2 + $0xa8] sm:$0xff] %vm620, 0.0
        %644 = vst.msk [vmem:[#allocation2 + $0xb0] sm:$0xff] %vm620, 0.0
        %645 = vst.msk [vmem:[#allocation2 + $0xb8] sm:$0xf] %vm623, 0.0
        %646 = vst.msk [vmem:[#allocation2 + $0x2] sm:$0xff] %vm620, %v542
        %647 = vst.msk [vmem:[#allocation2 + $0xa] sm:$0xff] %vm620, %v547
        %648 = vst.msk [vmem:[#allocation2 + $0x1a] sm:$0xff] %vm620, %v552
        %649 = vst.msk [vmem:[#allocation2 + $0x22] sm:$0xff] %vm620, %v557
        %650 = vst.msk [vmem:[#allocation2 + $0x32] sm:$0xff] %vm620, %v562
        %651 = vst.msk [vmem:[#allocation2 + $0x3a] sm:$0xff] %vm620, %v567
        %652 = vst.msk [vmem:[#allocation2 + $0x4a] sm:$0xff] %vm620, %v572
        %653 = vst.msk [vmem:[#allocation2 + $0x52] sm:$0xff] %vm620, %v577
        %654 = vst.msk [vmem:[#allocation2 + $0x62] sm:$0xff] %vm620, %v582
        %655 = vst.msk [vmem:[#allocation2 + $0x6a] sm:$0xff] %vm620, %v587
        %656 = vst.msk [vmem:[#allocation2 + $0x7a] sm:$0xff] %vm620, %v592
        %657 = vst.msk [vmem:[#allocation2 + $0x82] sm:$0xff] %vm620, %v597
        %658 = vst.msk [vmem:[#allocation2 + $0x92] sm:$0xff] %vm620, %v602
        %659 = vst.msk [vmem:[#allocation2 + $0x9a] sm:$0xff] %vm620, %v607
        %660 = vst.msk [vmem:[#allocation2 + $0xaa] sm:$0xff] %vm620, %v612
        %661 = vst.msk [vmem:[#allocation2 + $0xb2] sm:$0xff] %vm620, %v617
        %v662 = vld [vmem:[#allocation2 + $0x2] sm:$0xff]
        %v663 = vld [vmem:[#allocation2 + $0xa] sm:$0xff]
        %v664 = vld [vmem:[#allocation2 + $0x1a] sm:$0xff]
        %v665 = vld [vmem:[#allocation2 + $0x22] sm:$0xff]
        %v666 = vld [vmem:[#allocation2 + $0x32] sm:$0xff]
        %v667 = vld [vmem:[#allocation2 + $0x3a] sm:$0xff]
        %v668 = vld [vmem:[#allocation2 + $0x4a] sm:$0xff]
        %v669 = vld [vmem:[#allocation2 + $0x52] sm:$0xff]
        %v670 = vld [vmem:[#allocation2 + $0x62] sm:$0xff]
        %v671 = vld [vmem:[#allocation2 + $0x6a] sm:$0xff]
        %v672 = vld [vmem:[#allocation2 + $0x7a] sm:$0xff]
        %v673 = vld [vmem:[#allocation2 + $0x82] sm:$0xff]
        %v674 = vld [vmem:[#allocation2 + $0x92] sm:$0xff]
        %v675 = vld [vmem:[#allocation2 + $0x9a] sm:$0xff]
        %v676 = vld [vmem:[#allocation2 + $0xaa] sm:$0xff]
        %v677 = vld [vmem:[#allocation2 + $0xb2] sm:$0xff]
        %v678 = vld [vmem:[%s2] sm:$0xff]
        %v679 = vld [vmem:[%s2 + $0x8] sm:$0xff]
        %v680 = vld [vmem:[%s2 + $0x10] sm:$0xff]
        %v681 = vld [vmem:[%s2 + $0x18] sm:$0xff]
        %v682 = vld [vmem:[%s2 + $0x20] sm:$0xff]
        %v683 = vld [vmem:[%s2 + $0x28] sm:$0xff]
        %v684 = vld [vmem:[%s2 + $0x30] sm:$0xff]
        %v685 = vld [vmem:[%s2 + $0x38] sm:$0xff]
        %v687 = vsel %vm620, %v662, 0
        %v690 = vsel %vm620, %v663, 0
        %v693 = vsel %vm620, %v664, 0
        %v696 = vsel %vm620, %v665, 0
        %v699 = vsel %vm620, %v666, 0
        %v702 = vsel %vm620, %v667, 0
        %v705 = vsel %vm620, %v668, 0
        %v708 = vsel %vm620, %v669, 0
        %v711 = vsel %vm620, %v670, 0
        %v714 = vsel %vm620, %v671, 0
        %v717 = vsel %vm620, %v672, 0
        %v720 = vsel %vm620, %v673, 0
        %v723 = vsel %vm620, %v674, 0
        %v726 = vsel %vm620, %v675, 0
        %v729 = vsel %vm620, %v676, 0
        %v732 = vsel %vm620, %v677, 0
        %734 = vmatprep.subr.mxu0 0.0
        %735 = vmatpush1.msra.mxu0 %v678
        %736 = vmatprep.subr.mxu0 0.0
        %737 = vmatpush1.msra.mxu0 %v679
        %738 = vmatprep.subr.mxu0 0.0
        %739 = vmatpush1.msra.mxu0 %v680
        %740 = vmatprep.subr.mxu0 0.0
        %741 = vmatpush1.msra.mxu0 %v681
        %742 = vmatprep.subr.mxu0 0.0
        %743 = vmatpush1.msra.mxu0 %v682
        %744 = vmatprep.subr.mxu0 0.0
        %745 = vmatpush1.msra.mxu0 %v683
        %746 = vmatprep.subr.mxu0 0.0
        %747 = vmatpush1.msra.mxu0 %v684
        %748 = vmatprep.subr.mxu0 0.0
        %749 = vmatpush1.msra.mxu0 %v685
        %750 = vmatprep.subr.mxu0 0.0
        %751 = vmatpush1.msra.mxu0 0.0
        %752 = vmatprep.subr.mxu0 0.0
        %753 = vmatpush1.msra.mxu0 0.0
        %754 = vmatprep.subr.mxu0 0.0
        %755 = vmatpush1.msra.mxu0 0.0
        %756 = vmatprep.subr.mxu0 0.0
        %757 = vmatpush1.msra.mxu0 0.0
        %758 = vmatprep.subr.mxu0 0.0
        %759 = vmatpush1.msra.mxu0 0.0
        %760 = vmatprep.subr.mxu0 0.0
        %761 = vmatpush1.msra.mxu0 0.0
        %762 = vmatprep.subr.mxu0 0.0
        %763 = vmatpush1.msra.mxu0 0.0
        %764 = vmatprep.subr.mxu0 0.0
        %765 = vmatpush1.msra.mxu0 0.0
        %766 = vmatprep.subr.mxu0 0.0
        %767 = vmatpush1.msra.mxu0 0.0
        %768 = vmatprep.subr.mxu0 0.0
        %769 = vmatpush1.msra.mxu0 0.0
        %770 = vmatprep.subr.mxu0 0.0
        %771 = vmatpush1.msra.mxu0 0.0
        %772 = vmatprep.subr.mxu0 0.0
        %773 = vmatpush1.msra.mxu0 0.0
        %774 = vmatprep.subr.mxu0 0.0
        %775 = vmatpush1.msra.mxu0 0.0
        %776 = vmatprep.subr.mxu0 0.0
        %777 = vmatpush1.msra.mxu0 0.0
        %778 = vmatprep.subr.mxu0 0.0
        %779 = vmatpush1.msra.mxu0 0.0
        %780 = vmatprep.subr.mxu0 0.0
        %781 = vmatpush1.msra.mxu0 0.0
        %782 = vmatprep.subr.mxu0 0.0
        %783 = vmatpush1.msra.mxu0 0.0
        %784 = vmatprep.subr.mxu0 0.0
        %785 = vmatpush1.msra.mxu0 0.0
        %786 = vmatprep.subr.mxu0 0.0
        %787 = vmatpush1.msra.mxu0 0.0
        %788 = vmatprep.subr.mxu0 0.0
        %789 = vmatpush1.msra.mxu0 0.0
        %790 = vmatprep.subr.mxu0 0.0
        %791 = vmatpush1.msra.mxu0 0.0
        %792 = vmatprep.subr.mxu0 0.0
        %793 = vmatpush1.msra.mxu0 0.0
        %794 = vmatprep.subr.mxu0 0.0
        %795 = vmatpush1.msra.mxu0 0.0
        %796 = vmatprep.subr.mxu0 0.0
        %797 = vmatpush1.msra.mxu0 0.0
        %798 = vmatprep.mubr.f32.mxu0 0.0
        %799 = vmatmul.mubr.f32.gmra.mrb[0].mxu0 %v687
        %v800 = vpop.f32.mrb[0].mxu0
        %v801 = vadd.f32 0.0, %v800
        %v802 = vpop.f32.mrb[0].mxu0
        %803 = vmatprep.mubr.f32.mxu0 0.0
        %804 = vmatmul.mubr.f32.gmra.mrb[0].mxu0 %v690
        %v805 = vpop.f32.mrb[0].mxu0
        %v806 = vadd.f32 0.0, %v805
        %v807 = vpop.f32.mrb[0].mxu0
        %808 = vmatprep.mubr.f32.mxu0 0.0
        %809 = vmatmul.mubr.f32.gmra.mrb[0].mxu0 %v693
        %v810 = vpop.f32.mrb[0].mxu0
        %v811 = vadd.f32 0.0, %v810
        %v812 = vpop.f32.mrb[0].mxu0
        %813 = vmatprep.mubr.f32.mxu0 0.0
        %814 = vmatmul.mubr.f32.gmra.mrb[0].mxu0 %v696
        %v815 = vpop.f32.mrb[0].mxu0
        %v816 = vadd.f32 0.0, %v815
        %v817 = vpop.f32.mrb[0].mxu0
        %818 = vmatprep.mubr.f32.mxu0 0.0
        %819 = vmatmul.mubr.f32.gmra.mrb[0].mxu0 %v699
        %v820 = vpop.f32.mrb[0].mxu0
        %v821 = vadd.f32 0.0, %v820
        %v822 = vpop.f32.mrb[0].mxu0
        %823 = vmatprep.mubr.f32.mxu0 0.0
        %824 = vmatmul.mubr.f32.gmra.mrb[0].mxu0 %v702
        %v825 = vpop.f32.mrb[0].mxu0
        %v826 = vadd.f32 0.0, %v825
        %v827 = vpop.f32.mrb[0].mxu0
        %828 = vmatprep.mubr.f32.mxu0 0.0
        %829 = vmatmul.mubr.f32.gmra.mrb[0].mxu0 %v705
        %v830 = vpop.f32.mrb[0].mxu0
        %v831 = vadd.f32 0.0, %v830
        %v832 = vpop.f32.mrb[0].mxu0
        %833 = vmatprep.mubr.f32.mxu0 0.0
        %834 = vmatmul.mubr.f32.gmra.mrb[0].mxu0 %v708
        %v835 = vpop.f32.mrb[0].mxu0
        %v836 = vadd.f32 0.0, %v835
        %v837 = vpop.f32.mrb[0].mxu0
        %838 = vmatprep.mubr.f32.mxu0 0.0
        %839 = vmatmul.mubr.f32.gmra.mrb[0].mxu0 %v711
        %v840 = vpop.f32.mrb[0].mxu0
        %v841 = vadd.f32 0.0, %v840
        %v842 = vpop.f32.mrb[0].mxu0
        %843 = vmatprep.mubr.f32.mxu0 0.0
        %844 = vmatmul.mubr.f32.gmra.mrb[0].mxu0 %v714
        %v845 = vpop.f32.mrb[0].mxu0
        %v846 = vadd.f32 0.0, %v845
        %v847 = vpop.f32.mrb[0].mxu0
        %848 = vmatprep.mubr.f32.mxu0 0.0
        %849 = vmatmul.mubr.f32.gmra.mrb[0].mxu0 %v717
        %v850 = vpop.f32.mrb[0].mxu0
        %v851 = vadd.f32 0.0, %v850
        %v852 = vpop.f32.mrb[0].mxu0
        %853 = vmatprep.mubr.f32.mxu0 0.0
        %854 = vmatmul.mubr.f32.gmra.mrb[0].mxu0 %v720
        %v855 = vpop.f32.mrb[0].mxu0
        %v856 = vadd.f32 0.0, %v855
        %v857 = vpop.f32.mrb[0].mxu0
        %858 = vmatprep.mubr.f32.mxu0 0.0
        %859 = vmatmul.mubr.f32.gmra.mrb[0].mxu0 %v723
        %v860 = vpop.f32.mrb[0].mxu0
        %v861 = vadd.f32 0.0, %v860
        %v862 = vpop.f32.mrb[0].mxu0
        %863 = vmatprep.mubr.f32.mxu0 0.0
        %864 = vmatmul.mubr.f32.gmra.mrb[0].mxu0 %v726
        %v865 = vpop.f32.mrb[0].mxu0
        %v866 = vadd.f32 0.0, %v865
        %v867 = vpop.f32.mrb[0].mxu0
        %868 = vmatprep.mubr.f32.mxu0 0.0
        %869 = vmatmul.mubr.f32.gmra.mrb[0].mxu0 %v729
        %v870 = vpop.f32.mrb[0].mxu0
        %v871 = vadd.f32 0.0, %v870
        %v872 = vpop.f32.mrb[0].mxu0
        %873 = vmatprep.mubr.f32.mxu0 0.0
        %874 = vmatmul.mubr.f32.gmra.mrb[0].mxu0 %v732
        %v875 = vpop.f32.mrb[0].mxu0
        %v876 = vadd.f32 0.0, %v875
        %v877 = vpop.f32.mrb[0].mxu0
        %878 = vdwg.mxu0
        %v879 = vld [vmem:[%s3] sm:$0x1]
        %v880 = vlaneseq
        %v881 = vshrl.u32 %v880, 7
        %v882 = vsub.s32 0, %v881
        %v883 = vrot.slane %v879, %v882
        %v884 = vadd.f32 %v801, %v883
        %v885 = vadd.f32 %v806, %v883
        %v886 = vadd.f32 %v811, %v883
        %v887 = vadd.f32 %v816, %v883
        %v888 = vadd.f32 %v821, %v883
        %v889 = vadd.f32 %v826, %v883
        %v890 = vadd.f32 %v831, %v883
        %v891 = vadd.f32 %v836, %v883
        %v892 = vadd.f32 %v841, %v883
        %v893 = vadd.f32 %v846, %v883
        %v894 = vadd.f32 %v851, %v883
        %v895 = vadd.f32 %v856, %v883
        %v896 = vadd.f32 %v861, %v883
        %v897 = vadd.f32 %v866, %v883
        %v898 = vadd.f32 %v871, %v883
        %v899 = vadd.f32 %v876, %v883
        %v900 = vsel %vm620, %v884, 0.0
        %901 = vadd.xlane.f32.xlu0 %v900
        %v902 = vpop.xlane.xlu0 %901
        %v903 = vsel %vm620, %v885, 0.0
        %904 = vadd.xlane.f32.xlu0 %v903
        %v905 = vpop.xlane.xlu0 %904
        %v906 = vsel %vm620, %v886, 0.0
        %907 = vadd.xlane.f32.xlu0 %v906
        %v908 = vpop.xlane.xlu0 %907
        %v909 = vsel %vm620, %v887, 0.0
        %910 = vadd.xlane.f32.xlu0 %v909
        %v911 = vpop.xlane.xlu0 %910
        %v912 = vsel %vm620, %v888, 0.0
        %913 = vadd.xlane.f32.xlu0 %v912
        %v914 = vpop.xlane.xlu0 %913
        %v915 = vsel %vm620, %v889, 0.0
        %916 = vadd.xlane.f32.xlu0 %v915
        %v917 = vpop.xlane.xlu0 %916
        %v918 = vsel %vm620, %v890, 0.0
        %919 = vadd.xlane.f32.xlu0 %v918
        %v920 = vpop.xlane.xlu0 %919
        %v921 = vsel %vm620, %v891, 0.0
        %922 = vadd.xlane.f32.xlu0 %v921
        %v923 = vpop.xlane.xlu0 %922
        %v924 = vsel %vm620, %v892, 0.0
        %925 = vadd.xlane.f32.xlu0 %v924
        %v926 = vpop.xlane.xlu0 %925
        %v927 = vsel %vm620, %v893, 0.0
        %928 = vadd.xlane.f32.xlu0 %v927
        %v929 = vpop.xlane.xlu0 %928
        %v930 = vsel %vm620, %v894, 0.0
        %931 = vadd.xlane.f32.xlu0 %v930
        %v932 = vpop.xlane.xlu0 %931
        %v933 = vsel %vm620, %v895, 0.0
        %934 = vadd.xlane.f32.xlu0 %v933
        %v935 = vpop.xlane.xlu0 %934
        %v936 = vsel %vm620, %v896, 0.0
        %937 = vadd.xlane.f32.xlu0 %v936
        %v938 = vpop.xlane.xlu0 %937
        %v939 = vsel %vm620, %v897, 0.0
        %940 = vadd.xlane.f32.xlu0 %v939
        %v941 = vpop.xlane.xlu0 %940
        %v942 = vsel %vm620, %v898, 0.0
        %943 = vadd.xlane.f32.xlu0 %v942
        %v944 = vpop.xlane.xlu0 %943
        %v945 = vsel %vm620, %v899, 0.0
        %946 = vadd.xlane.f32.xlu0 %v945
        %v947 = vpop.xlane.xlu0 %946
        %v948 = vrcp.pop 64.0
        %v949 = vmul.f32 %v902, %v948
        %v950 = vmul.f32 %v905, %v948
        %v951 = vmul.f32 %v908, %v948
        %v952 = vmul.f32 %v911, %v948
        %v953 = vmul.f32 %v914, %v948
        %v954 = vmul.f32 %v917, %v948
        %v955 = vmul.f32 %v920, %v948
        %v956 = vmul.f32 %v923, %v948
        %v957 = vmul.f32 %v926, %v948
        %v958 = vmul.f32 %v929, %v948
        %v959 = vmul.f32 %v932, %v948
        %v960 = vmul.f32 %v935, %v948
        %v961 = vmul.f32 %v938, %v948
        %v962 = vmul.f32 %v941, %v948
        %v963 = vmul.f32 %v944, %v948
        %v964 = vmul.f32 %v947, %v948
        %v965 = vsub.f32 %v884, %v949
        %v966 = vsub.f32 %v885, %v950
        %v967 = vsub.f32 %v886, %v951
        %v968 = vsub.f32 %v887, %v952
        %v969 = vsub.f32 %v888, %v953
        %v970 = vsub.f32 %v889, %v954
        %v971 = vsub.f32 %v890, %v955
        %v972 = vsub.f32 %v891, %v956
        %v973 = vsub.f32 %v892, %v957
        %v974 = vsub.f32 %v893, %v958
        %v975 = vsub.f32 %v894, %v959
        %v976 = vsub.f32 %v895, %v960
        %v977 = vsub.f32 %v896, %v961
        %v978 = vsub.f32 %v897, %v962
        %v979 = vsub.f32 %v898, %v963
        %v980 = vsub.f32 %v899, %v964
        %v981 = vmul.f32 %v965, %v965
        %v982 = vmul.f32 %v966, %v966
        %v983 = vmul.f32 %v967, %v967
        %v984 = vmul.f32 %v968, %v968
        %v985 = vmul.f32 %v969, %v969
        %v986 = vmul.f32 %v970, %v970
        %v987 = vmul.f32 %v971, %v971
        %v988 = vmul.f32 %v972, %v972
        %v989 = vmul.f32 %v973, %v973
        %v990 = vmul.f32 %v974, %v974
        %v991 = vmul.f32 %v975, %v975
        %v992 = vmul.f32 %v976, %v976
        %v993 = vmul.f32 %v977, %v977
        %v994 = vmul.f32 %v978, %v978
        %v995 = vmul.f32 %v979, %v979
        %v996 = vmul.f32 %v980, %v980
        %v997 = vsel %vm620, %v981, 0.0
        %998 = vadd.xlane.f32.xlu0 %v997
        %v999 = vpop.xlane.xlu0 %998
        %v1000 = vsel %vm620, %v982, 0.0
        %1001 = vadd.xlane.f32.xlu0 %v1000
        %v1002 = vpop.xlane.xlu0 %1001
        %v1003 = vsel %vm620, %v983, 0.0
        %1004 = vadd.xlane.f32.xlu0 %v1003
        %v1005 = vpop.xlane.xlu0 %1004
        %v1006 = vsel %vm620, %v984, 0.0
        %1007 = vadd.xlane.f32.xlu0 %v1006
        %v1008 = vpop.xlane.xlu0 %1007
        %v1009 = vsel %vm620, %v985, 0.0
        %1010 = vadd.xlane.f32.xlu0 %v1009
        %v1011 = vpop.xlane.xlu0 %1010
        %v1012 = vsel %vm620, %v986, 0.0
        %1013 = vadd.xlane.f32.xlu0 %v1012
        %v1014 = vpop.xlane.xlu0 %1013
        %v1015 = vsel %vm620, %v987, 0.0
        %1016 = vadd.xlane.f32.xlu0 %v1015
        %v1017 = vpop.xlane.xlu0 %1016
        %v1018 = vsel %vm620, %v988, 0.0
        %1019 = vadd.xlane.f32.xlu0 %v1018
        %v1020 = vpop.xlane.xlu0 %1019
        %v1021 = vsel %vm620, %v989, 0.0
        %1022 = vadd.xlane.f32.xlu0 %v1021
        %v1023 = vpop.xlane.xlu0 %1022
        %v1024 = vsel %vm620, %v990, 0.0
        %1025 = vadd.xlane.f32.xlu0 %v1024
        %v1026 = vpop.xlane.xlu0 %1025
        %v1027 = vsel %vm620, %v991, 0.0
        %1028 = vadd.xlane.f32.xlu0 %v1027
        %v1029 = vpop.xlane.xlu0 %1028
        %v1030 = vsel %vm620, %v992, 0.0
        %1031 = vadd.xlane.f32.xlu0 %v1030
        %v1032 = vpop.xlane.xlu0 %1031
        %v1033 = vsel %vm620, %v993, 0.0
        %1034 = vadd.xlane.f32.xlu0 %v1033
        %v1035 = vpop.xlane.xlu0 %1034
        %v1036 = vsel %vm620, %v994, 0.0
        %1037 = vadd.xlane.f32.xlu0 %v1036
        %v1038 = vpop.xlane.xlu0 %1037
        %v1039 = vsel %vm620, %v995, 0.0
        %1040 = vadd.xlane.f32.xlu0 %v1039
        %v1041 = vpop.xlane.xlu0 %1040
        %v1042 = vsel %vm620, %v996, 0.0
        %1043 = vadd.xlane.f32.xlu0 %v1042
        %v1044 = vpop.xlane.xlu0 %1043
        %v1045 = vmul.f32 %v999, %v948
        %v1046 = vmul.f32 %v1002, %v948
        %v1047 = vmul.f32 %v1005, %v948
        %v1048 = vmul.f32 %v1008, %v948
        %v1049 = vmul.f32 %v1011, %v948
        %v1050 = vmul.f32 %v1014, %v948
        %v1051 = vmul.f32 %v1017, %v948
        %v1052 = vmul.f32 %v1020, %v948
        %v1053 = vmul.f32 %v1023, %v948
        %v1054 = vmul.f32 %v1026, %v948
        %v1055 = vmul.f32 %v1029, %v948
        %v1056 = vmul.f32 %v1032, %v948
        %v1057 = vmul.f32 %v1035, %v948
        %v1058 = vmul.f32 %v1038, %v948
        %v1059 = vmul.f32 %v1041, %v948
        %v1060 = vmul.f32 %v1044, %v948
        %v1061 = vadd.f32 %v1045, 1e-05
        %v1062 = vadd.f32 %v1046, 1e-05
        %v1063 = vadd.f32 %v1047, 1e-05
        %v1064 = vadd.f32 %v1048, 1e-05
        %v1065 = vadd.f32 %v1049, 1e-05
        %v1066 = vadd.f32 %v1050, 1e-05
        %v1067 = vadd.f32 %v1051, 1e-05
        %v1068 = vadd.f32 %v1052, 1e-05
        %v1069 = vadd.f32 %v1053, 1e-05
        %v1070 = vadd.f32 %v1054, 1e-05
        %v1071 = vadd.f32 %v1055, 1e-05
        %v1072 = vadd.f32 %v1056, 1e-05
        %v1073 = vadd.f32 %v1057, 1e-05
        %v1074 = vadd.f32 %v1058, 1e-05
        %v1075 = vadd.f32 %v1059, 1e-05
        %v1076 = vadd.f32 %v1060, 1e-05
        %v1077 = vrsqrt.pop %v1061
        %v1078 = vrsqrt.pop %v1062
        %v1079 = vrsqrt.pop %v1063
        %v1080 = vrsqrt.pop %v1064
        %v1081 = vrsqrt.pop %v1065
        %v1082 = vrsqrt.pop %v1066
        %v1083 = vrsqrt.pop %v1067
        %v1084 = vrsqrt.pop %v1068
        %v1085 = vrsqrt.pop %v1069
        %v1086 = vrsqrt.pop %v1070
        %v1087 = vrsqrt.pop %v1071
        %v1088 = vrsqrt.pop %v1072
        %v1089 = vrsqrt.pop %v1073
        %v1090 = vrsqrt.pop %v1074
        %v1091 = vrsqrt.pop %v1075
        %v1092 = vrsqrt.pop %v1076
        %v1093 = vmul.f32 %v965, %v1077
        %v1094 = vmul.f32 %v966, %v1078
        %v1095 = vmul.f32 %v967, %v1079
        %v1096 = vmul.f32 %v968, %v1080
        %v1097 = vmul.f32 %v969, %v1081
        %v1098 = vmul.f32 %v970, %v1082
        %v1099 = vmul.f32 %v971, %v1083
        %v1100 = vmul.f32 %v972, %v1084
        %v1101 = vmul.f32 %v973, %v1085
        %v1102 = vmul.f32 %v974, %v1086
        %v1103 = vmul.f32 %v975, %v1087
        %v1104 = vmul.f32 %v976, %v1088
        %v1105 = vmul.f32 %v977, %v1089
        %v1106 = vmul.f32 %v978, %v1090
        %v1107 = vmul.f32 %v979, %v1091
        %v1108 = vmul.f32 %v980, %v1092
        %v1109 = vld [vmem:[%s4] sm:$0x1]
        %v1110 = vlaneseq
        %v1111 = vshrl.u32 %v1110, 7
        %v1112 = vsub.s32 0, %v1111
        %v1113 = vrot.slane %v1109, %v1112
        %v1114 = vmul.f32 %v1093, %v1113
        %v1115 = vmul.f32 %v1094, %v1113
        %v1116 = vmul.f32 %v1095, %v1113
        %v1117 = vmul.f32 %v1096, %v1113
        %v1118 = vmul.f32 %v1097, %v1113
        %v1119 = vmul.f32 %v1098, %v1113
        %v1120 = vmul.f32 %v1099, %v1113
        %v1121 = vmul.f32 %v1100, %v1113
        %v1122 = vmul.f32 %v1101, %v1113
        %v1123 = vmul.f32 %v1102, %v1113
        %v1124 = vmul.f32 %v1103, %v1113
        %v1125 = vmul.f32 %v1104, %v1113
        %v1126 = vmul.f32 %v1105, %v1113
        %v1127 = vmul.f32 %v1106, %v1113
        %v1128 = vmul.f32 %v1107, %v1113
        %v1129 = vmul.f32 %v1108, %v1113
        %v1130 = vld [vmem:[%s5] sm:$0x1]
        %v1131 = vlaneseq
        %v1132 = vshrl.u32 %v1131, 7
        %v1133 = vsub.s32 0, %v1132
        %v1134 = vrot.slane %v1130, %v1133
        %v1135 = vadd.f32 %v1114, %v1134
        %v1136 = vadd.f32 %v1115, %v1134
        %v1137 = vadd.f32 %v1116, %v1134
        %v1138 = vadd.f32 %v1117, %v1134
        %v1139 = vadd.f32 %v1118, %v1134
        %v1140 = vadd.f32 %v1119, %v1134
        %v1141 = vadd.f32 %v1120, %v1134
        %v1142 = vadd.f32 %v1121, %v1134
        %v1143 = vadd.f32 %v1122, %v1134
        %v1144 = vadd.f32 %v1123, %v1134
        %v1145 = vadd.f32 %v1124, %v1134
        %v1146 = vadd.f32 %v1125, %v1134
        %v1147 = vadd.f32 %v1126, %v1134
        %v1148 = vadd.f32 %v1127, %v1134
        %v1149 = vadd.f32 %v1128, %v1134
        %v1150 = vadd.f32 %v1129, %v1134
        %v1151 = vmax.f32 %v1135, 0.0
        %v1152 = vmax.f32 %v1136, 0.0
        %v1153 = vmax.f32 %v1137, 0.0
        %v1154 = vmax.f32 %v1138, 0.0
        %v1155 = vmax.f32 %v1139, 0.0
        %v1156 = vmax.f32 %v1140, 0.0
        %v1157 = vmax.f32 %v1141, 0.0
        %v1158 = vmax.f32 %v1142, 0.0
        %v1159 = vmax.f32 %v1143, 0.0
        %v1160 = vmax.f32 %v1144, 0.0
        %v1161 = vmax.f32 %v1145, 0.0
        %v1162 = vmax.f32 %v1146, 0.0
        %v1163 = vmax.f32 %v1147, 0.0
        %v1164 = vmax.f32 %v1148, 0.0
        %v1165 = vmax.f32 %v1149, 0.0
        %v1166 = vmax.f32 %v1150, 0.0
        %v1167 = vsel %vm620, %v1151, -inf
        %v1168 = vsel %vm620, %v1152, -inf
        %v1169 = vmax.f32 %v1167, %v1168
        %v1170 = vrot.slane %v1169, 4
        %v1171 = vmax.f32 %v1169, %v1170
        %v1172 = vrot.slane %v1171, 2
        %v1173 = vmax.f32 %v1171, %v1172
        %v1174 = vrot.slane %v1173, 1
        %v1175 = vmax.f32 %v1173, %v1174
        %v1176 = vsel %vm620, %v1153, -inf
        %v1177 = vsel %vm620, %v1154, -inf
        %v1178 = vmax.f32 %v1176, %v1177
        %v1179 = vrot.slane %v1178, 4
        %v1180 = vmax.f32 %v1178, %v1179
        %v1181 = vrot.slane %v1180, 2
        %v1182 = vmax.f32 %v1180, %v1181
        %v1183 = vrot.slane %v1182, 1
        %v1184 = vmax.f32 %v1182, %v1183
        %v1185 = vsel %vm620, %v1155, -inf
        %v1186 = vsel %vm620, %v1156, -inf
        %v1187 = vmax.f32 %v1185, %v1186
        %v1188 = vrot.slane %v1187, 4
        %v1189 = vmax.f32 %v1187, %v1188
        %v1190 = vrot.slane %v1189, 2
        %v1191 = vmax.f32 %v1189, %v1190
        %v1192 = vrot.slane %v1191, 1
        %v1193 = vmax.f32 %v1191, %v1192
        %v1194 = vsel %vm620, %v1157, -inf
        %v1195 = vsel %vm620, %v1158, -inf
        %v1196 = vmax.f32 %v1194, %v1195
        %v1197 = vrot.slane %v1196, 4
        %v1198 = vmax.f32 %v1196, %v1197
        %v1199 = vrot.slane %v1198, 2
        %v1200 = vmax.f32 %v1198, %v1199
        %v1201 = vrot.slane %v1200, 1
        %v1202 = vmax.f32 %v1200, %v1201
        %v1203 = vsel %vm620, %v1159, -inf
        %v1204 = vsel %vm620, %v1160, -inf
        %v1205 = vmax.f32 %v1203, %v1204
        %v1206 = vrot.slane %v1205, 4
        %v1207 = vmax.f32 %v1205, %v1206
        %v1208 = vrot.slane %v1207, 2
        %v1209 = vmax.f32 %v1207, %v1208
        %v1210 = vrot.slane %v1209, 1
        %v1211 = vmax.f32 %v1209, %v1210
        %v1212 = vsel %vm620, %v1161, -inf
        %v1213 = vsel %vm620, %v1162, -inf
        %v1214 = vmax.f32 %v1212, %v1213
        %v1215 = vrot.slane %v1214, 4
        %v1216 = vmax.f32 %v1214, %v1215
        %v1217 = vrot.slane %v1216, 2
        %v1218 = vmax.f32 %v1216, %v1217
        %v1219 = vrot.slane %v1218, 1
        %v1220 = vmax.f32 %v1218, %v1219
        %v1221 = vsel %vm620, %v1163, -inf
        %v1222 = vsel %vm620, %v1164, -inf
        %v1223 = vmax.f32 %v1221, %v1222
        %v1224 = vrot.slane %v1223, 4
        %v1225 = vmax.f32 %v1223, %v1224
        %v1226 = vrot.slane %v1225, 2
        %v1227 = vmax.f32 %v1225, %v1226
        %v1228 = vrot.slane %v1227, 1
        %v1229 = vmax.f32 %v1227, %v1228
        %v1230 = vsel %vm620, %v1165, -inf
        %v1231 = vsel %vm620, %v1166, -inf
        %v1232 = vmax.f32 %v1230, %v1231
        %v1233 = vrot.slane %v1232, 4
        %v1234 = vmax.f32 %v1232, %v1233
        %v1235 = vrot.slane %v1234, 2
        %v1236 = vmax.f32 %v1234, %v1235
        %v1237 = vrot.slane %v1236, 1
        %v1238 = vmax.f32 %v1236, %v1237
        %v1239 = vld [vmem:[#allocation2 + $0x1] sm:$0xff]
        %v1240 = vld [vmem:[#allocation2 + $0x9] sm:$0xff]
        %v1241 = vld [vmem:[#allocation2 + $0x19] sm:$0xff]
        %v1242 = vld [vmem:[#allocation2 + $0x21] sm:$0xff]
        %v1243 = vld [vmem:[#allocation2 + $0x31] sm:$0xff]
        %v1244 = vld [vmem:[#allocation2 + $0x39] sm:$0xff]
        %v1245 = vld [vmem:[#allocation2 + $0x49] sm:$0xff]
        %v1246 = vld [vmem:[#allocation2 + $0x51] sm:$0xff]
        %v1247 = vld [vmem:[#allocation2 + $0x61] sm:$0xff]
        %v1248 = vld [vmem:[#allocation2 + $0x69] sm:$0xff]
        %v1249 = vld [vmem:[#allocation2 + $0x79] sm:$0xff]
        %v1250 = vld [vmem:[#allocation2 + $0x81] sm:$0xff]
        %v1251 = vld [vmem:[#allocation2 + $0x91] sm:$0xff]
        %v1252 = vld [vmem:[#allocation2 + $0x99] sm:$0xff]
        %v1253 = vld [vmem:[#allocation2 + $0xa9] sm:$0xff]
        %v1254 = vld [vmem:[#allocation2 + $0xb1] sm:$0xff]
        %v1255 = vld [vmem:[%s2 + $0x40] sm:$0xff]
        %v1256 = vld [vmem:[%s2 + $0x48] sm:$0xff]
        %v1257 = vld [vmem:[%s2 + $0x50] sm:$0xff]
        %v1258 = vld [vmem:[%s2 + $0x58] sm:$0xff]
        %v1259 = vld [vmem:[%s2 + $0x60] sm:$0xff]
        %v1260 = vld [vmem:[%s2 + $0x68] sm:$0xff]
        %v1261 = vld [vmem:[%s2 + $0x70] sm:$0xff]
        %v1262 = vld [vmem:[%s2 + $0x78] sm:$0xff]
        %v1263 = vld [vmem:[%s2 + $0x80] sm:$0xff]
        %v1264 = vld [vmem:[%s2 + $0x88] sm:$0xff]
        %v1265 = vld [vmem:[%s2 + $0x90] sm:$0xff]
        %v1266 = vld [vmem:[%s2 + $0x98] sm:$0xff]
        %v1267 = vld [vmem:[%s2 + $0xa0] sm:$0xff]
        %v1268 = vld [vmem:[%s2 + $0xa8] sm:$0xff]
        %v1269 = vld [vmem:[%s2 + $0xb0] sm:$0xff]
        %v1270 = vld [vmem:[%s2 + $0xb8] sm:$0xff]
        %1271 = vmatprep.subr.mxu0 0.0
        %1272 = vmatpush1.msra.mxu0 %v1263
        %1273 = vmatprep.subr.mxu0 0.0
        %1274 = vmatpush1.msra.mxu0 %v1264
        %1275 = vmatprep.subr.mxu0 0.0
        %1276 = vmatpush1.msra.mxu0 %v1265
        %1277 = vmatprep.subr.mxu0 0.0
        %1278 = vmatpush1.msra.mxu0 %v1266
        %1279 = vmatprep.subr.mxu0 0.0
        %1280 = vmatpush1.msra.mxu0 %v1267
        %1281 = vmatprep.subr.mxu0 0.0
        %1282 = vmatpush1.msra.mxu0 %v1268
        %1283 = vmatprep.subr.mxu0 0.0
        %1284 = vmatpush1.msra.mxu0 %v1269
        %1285 = vmatprep.subr.mxu0 0.0
        %1286 = vmatpush1.msra.mxu0 %v1270
        %1287 = vmatprep.subr.mxu0 0.0
        %1288 = vmatpush1.msra.mxu0 0.0
        %1289 = vmatprep.subr.mxu0 0.0
        %1290 = vmatpush1.msra.mxu0 0.0
        %1291 = vmatprep.subr.mxu0 0.0
        %1292 = vmatpush1.msra.mxu0 0.0
        %1293 = vmatprep.subr.mxu0 0.0
        %1294 = vmatpush1.msra.mxu0 0.0
        %1295 = vmatprep.subr.mxu0 0.0
        %1296 = vmatpush1.msra.mxu0 0.0
        %1297 = vmatprep.subr.mxu0 0.0
        %1298 = vmatpush1.msra.mxu0 0.0
        %1299 = vmatprep.subr.mxu0 0.0
        %1300 = vmatpush1.msra.mxu0 0.0
        %1301 = vmatprep.subr.mxu0 0.0
        %1302 = vmatpush1.msra.mxu0 0.0
        %1303 = vmatprep.subr.mxu0 0.0
        %1304 = vmatpush1.msra.mxu0 0.0
        %1305 = vmatprep.subr.mxu0 0.0
        %1306 = vmatpush1.msra.mxu0 0.0
        %1307 = vmatprep.subr.mxu0 0.0
        %1308 = vmatpush1.msra.mxu0 0.0
        %1309 = vmatprep.subr.mxu0 0.0
        %1310 = vmatpush1.msra.mxu0 0.0
        %1311 = vmatprep.subr.mxu0 0.0
        %1312 = vmatpush1.msra.mxu0 0.0
        %1313 = vmatprep.subr.mxu0 0.0
        %1314 = vmatpush1.msra.mxu0 0.0
        %1315 = vmatprep.subr.mxu0 0.0
        %1316 = vmatpush1.msra.mxu0 0.0
        %1317 = vmatprep.subr.mxu0 0.0
        %1318 = vmatpush1.msra.mxu0 0.0
        %1319 = vmatprep.subr.mxu0 0.0
        %1320 = vmatpush1.msra.mxu0 0.0
        %1321 = vmatprep.subr.mxu0 0.0
        %1322 = vmatpush1.msra.mxu0 0.0
        %1323 = vmatprep.subr.mxu0 0.0
        %1324 = vmatpush1.msra.mxu0 0.0
        %1325 = vmatprep.subr.mxu0 0.0
        %1326 = vmatpush1.msra.mxu0 0.0
        %1327 = vmatprep.subr.mxu0 0.0
        %1328 = vmatpush1.msra.mxu0 0.0
        %1329 = vmatprep.subr.mxu0 0.0
        %1330 = vmatpush1.msra.mxu0 0.0
        %1331 = vmatprep.subr.mxu0 0.0
        %1332 = vmatpush1.msra.mxu0 0.0
        %1333 = vmatprep.subr.mxu0 0.0
        %1334 = vmatpush1.msra.mxu0 0.0
        %1335 = vmatprep.mubr.f32.mxu0 0.0
        %1336 = vmatmul.mubr.f32.gmra.mrb[0].mxu0 %v687
        %v1337 = vpop.f32.mrb[0].mxu0
        %v1338 = vadd.f32 0.0, %v1337
        %v1339 = vpop.f32.mrb[0].mxu0
        %1340 = vmatprep.mubr.f32.mxu0 0.0
        %1341 = vmatmul.mubr.f32.gmra.mrb[0].mxu0 %v690
        %v1342 = vpop.f32.mrb[0].mxu0
        %v1343 = vadd.f32 0.0, %v1342
        %v1344 = vpop.f32.mrb[0].mxu0
        %1345 = vmatprep.mubr.f32.mxu0 0.0
        %1346 = vmatmul.mubr.f32.gmra.mrb[0].mxu0 %v693
        %v1347 = vpop.f32.mrb[0].mxu0
        %v1348 = vadd.f32 0.0, %v1347
        %v1349 = vpop.f32.mrb[0].mxu0
        %1350 = vmatprep.mubr.f32.mxu0 0.0
        %1351 = vmatmul.mubr.f32.gmra.mrb[0].mxu0 %v696
        %v1352 = vpop.f32.mrb[0].mxu0
        %v1353 = vadd.f32 0.0, %v1352
        %v1354 = vpop.f32.mrb[0].mxu0
        %1355 = vmatprep.mubr.f32.mxu0 0.0
        %1356 = vmatmul.mubr.f32.gmra.mrb[0].mxu0 %v699
        %v1357 = vpop.f32.mrb[0].mxu0
        %v1358 = vadd.f32 0.0, %v1357
        %v1359 = vpop.f32.mrb[0].mxu0
        %1360 = vmatprep.mubr.f32.mxu0 0.0
        %1361 = vmatmul.mubr.f32.gmra.mrb[0].mxu0 %v702
        %v1362 = vpop.f32.mrb[0].mxu0
        %v1363 = vadd.f32 0.0, %v1362
        %v1364 = vpop.f32.mrb[0].mxu0
        %1365 = vmatprep.mubr.f32.mxu0 0.0
        %1366 = vmatmul.mubr.f32.gmra.mrb[0].mxu0 %v705
        %v1367 = vpop.f32.mrb[0].mxu0
        %v1368 = vadd.f32 0.0, %v1367
        %v1369 = vpop.f32.mrb[0].mxu0
        %1370 = vmatprep.mubr.f32.mxu0 0.0
        %1371 = vmatmul.mubr.f32.gmra.mrb[0].mxu0 %v708
        %v1372 = vpop.f32.mrb[0].mxu0
        %v1373 = vadd.f32 0.0, %v1372
        %v1374 = vpop.f32.mrb[0].mxu0
        %1375 = vmatprep.mubr.f32.mxu0 0.0
        %1376 = vmatmul.mubr.f32.gmra.mrb[0].mxu0 %v711
        %v1377 = vpop.f32.mrb[0].mxu0
        %v1378 = vadd.f32 0.0, %v1377
        %v1379 = vpop.f32.mrb[0].mxu0
        %1380 = vmatprep.mubr.f32.mxu0 0.0
        %1381 = vmatmul.mubr.f32.gmra.mrb[0].mxu0 %v714
        %v1382 = vpop.f32.mrb[0].mxu0
        %v1383 = vadd.f32 0.0, %v1382
        %v1384 = vpop.f32.mrb[0].mxu0
        %1385 = vmatprep.mubr.f32.mxu0 0.0
        %1386 = vmatmul.mubr.f32.gmra.mrb[0].mxu0 %v717
        %v1387 = vpop.f32.mrb[0].mxu0
        %v1388 = vadd.f32 0.0, %v1387
        %v1389 = vpop.f32.mrb[0].mxu0
        %1390 = vmatprep.mubr.f32.mxu0 0.0
        %1391 = vmatmul.mubr.f32.gmra.mrb[0].mxu0 %v720
        %v1392 = vpop.f32.mrb[0].mxu0
        %v1393 = vadd.f32 0.0, %v1392
        %v1394 = vpop.f32.mrb[0].mxu0
        %1395 = vmatprep.mubr.f32.mxu0 0.0
        %1396 = vmatmul.mubr.f32.gmra.mrb[0].mxu0 %v723
        %v1397 = vpop.f32.mrb[0].mxu0
        %v1398 = vadd.f32 0.0, %v1397
        %v1399 = vpop.f32.mrb[0].mxu0
        %1400 = vmatprep.mubr.f32.mxu0 0.0
        %1401 = vmatmul.mubr.f32.gmra.mrb[0].mxu0 %v726
        %v1402 = vpop.f32.mrb[0].mxu0
        %v1403 = vadd.f32 0.0, %v1402
        %v1404 = vpop.f32.mrb[0].mxu0
        %1405 = vmatprep.mubr.f32.mxu0 0.0
        %1406 = vmatmul.mubr.f32.gmra.mrb[0].mxu0 %v729
        %v1407 = vpop.f32.mrb[0].mxu0
        %v1408 = vadd.f32 0.0, %v1407
        %v1409 = vpop.f32.mrb[0].mxu0
        %1410 = vmatprep.mubr.f32.mxu0 0.0
        %1411 = vmatmul.mubr.f32.gmra.mrb[0].mxu0 %v732
        %v1412 = vpop.f32.mrb[0].mxu0
        %v1413 = vadd.f32 0.0, %v1412
        %v1414 = vpop.f32.mrb[0].mxu0
        %1415 = vdwg.mxu0
        %v1417 = vsel %vm620, %v1239, 0
        %v1420 = vsel %vm620, %v1240, 0
        %v1423 = vsel %vm620, %v1241, 0
        %v1426 = vsel %vm620, %v1242, 0
        %v1429 = vsel %vm620, %v1243, 0
        %v1432 = vsel %vm620, %v1244, 0
        %v1435 = vsel %vm620, %v1245, 0
        %v1438 = vsel %vm620, %v1246, 0
        %v1441 = vsel %vm620, %v1247, 0
        %v1444 = vsel %vm620, %v1248, 0
        %v1447 = vsel %vm620, %v1249, 0
        %v1450 = vsel %vm620, %v1250, 0
        %v1453 = vsel %vm620, %v1251, 0
        %v1456 = vsel %vm620, %v1252, 0
        %v1459 = vsel %vm620, %v1253, 0
        %v1462 = vsel %vm620, %v1254, 0
        %1464 = vmatprep.subr.mxu0 0.0
        %1465 = vmatpush1.msra.mxu0 %v1255
        %1466 = vmatprep.subr.mxu0 0.0
        %1467 = vmatpush1.msra.mxu0 %v1256
        %1468 = vmatprep.subr.mxu0 0.0
        %1469 = vmatpush1.msra.mxu0 %v1257
        %1470 = vmatprep.subr.mxu0 0.0
        %1471 = vmatpush1.msra.mxu0 %v1258
        %1472 = vmatprep.subr.mxu0 0.0
        %1473 = vmatpush1.msra.mxu0 %v1259
        %1474 = vmatprep.subr.mxu0 0.0
        %1475 = vmatpush1.msra.mxu0 %v1260
        %1476 = vmatprep.subr.mxu0 0.0
        %1477 = vmatpush1.msra.mxu0 %v1261
        %1478 = vmatprep.subr.mxu0 0.0
        %1479 = vmatpush1.msra.mxu0 %v1262
        %1480 = vmatprep.subr.mxu0 0.0
        %1481 = vmatpush1.msra.mxu0 0.0
        %1482 = vmatprep.subr.mxu0 0.0
        %1483 = vmatpush1.msra.mxu0 0.0
        %1484 = vmatprep.subr.mxu0 0.0
        %1485 = vmatpush1.msra.mxu0 0.0
        %1486 = vmatprep.subr.mxu0 0.0
        %1487 = vmatpush1.msra.mxu0 0.0
        %1488 = vmatprep.subr.mxu0 0.0
        %1489 = vmatpush1.msra.mxu0 0.0
        %1490 = vmatprep.subr.mxu0 0.0
        %1491 = vmatpush1.msra.mxu0 0.0
        %1492 = vmatprep.subr.mxu0 0.0
        %1493 = vmatpush1.msra.mxu0 0.0
        %1494 = vmatprep.subr.mxu0 0.0
        %1495 = vmatpush1.msra.mxu0 0.0
        %1496 = vmatprep.subr.mxu0 0.0
        %1497 = vmatpush1.msra.mxu0 0.0
        %1498 = vmatprep.subr.mxu0 0.0
        %1499 = vmatpush1.msra.mxu0 0.0
        %1500 = vmatprep.subr.mxu0 0.0
        %1501 = vmatpush1.msra.mxu0 0.0
        %1502 = vmatprep.subr.mxu0 0.0
        %1503 = vmatpush1.msra.mxu0 0.0
        %1504 = vmatprep.subr.mxu0 0.0
        %1505 = vmatpush1.msra.mxu0 0.0
        %1506 = vmatprep.subr.mxu0 0.0
        %1507 = vmatpush1.msra.mxu0 0.0
        %1508 = vmatprep.subr.mxu0 0.0
        %1509 = vmatpush1.msra.mxu0 0.0
        %1510 = vmatprep.subr.mxu0 0.0
        %1511 = vmatpush1.msra.mxu0 0.0
        %1512 = vmatprep.subr.mxu0 0.0
        %1513 = vmatpush1.msra.mxu0 0.0
        %1514 = vmatprep.subr.mxu0 0.0
        %1515 = vmatpush1.msra.mxu0 0.0
        %1516 = vmatprep.subr.mxu0 0.0
        %1517 = vmatpush1.msra.mxu0 0.0
        %1518 = vmatprep.subr.mxu0 0.0
        %1519 = vmatpush1.msra.mxu0 0.0
        %1520 = vmatprep.subr.mxu0 0.0
        %1521 = vmatpush1.msra.mxu0 0.0
        %1522 = vmatprep.subr.mxu0 0.0
        %1523 = vmatpush1.msra.mxu0 0.0
        %1524 = vmatprep.subr.mxu0 0.0
        %1525 = vmatpush1.msra.mxu0 0.0
        %1526 = vmatprep.subr.mxu0 0.0
        %1527 = vmatpush1.msra.mxu0 0.0
        %1528 = vmatprep.mubr.f32.mxu0 0.0
        %1529 = vmatmul.mubr.f32.gmra.mrb[0].mxu0 %v1417
        %v1530 = vpop.f32.mrb[0].mxu0
        %v1531 = vadd.f32 %v1338, %v1530
        %v1532 = vpop.f32.mrb[0].mxu0
        %1533 = vmatprep.mubr.f32.mxu0 0.0
        %1534 = vmatmul.mubr.f32.gmra.mrb[0].mxu0 %v1420
        %v1535 = vpop.f32.mrb[0].mxu0
        %v1536 = vadd.f32 %v1343, %v1535
        %v1537 = vpop.f32.mrb[0].mxu0
        %1538 = vmatprep.mubr.f32.mxu0 0.0
        %1539 = vmatmul.mubr.f32.gmra.mrb[0].mxu0 %v1423
        %v1540 = vpop.f32.mrb[0].mxu0
        %v1541 = vadd.f32 %v1348, %v1540
        %v1542 = vpop.f32.mrb[0].mxu0
        %1543 = vmatprep.mubr.f32.mxu0 0.0
        %1544 = vmatmul.mubr.f32.gmra.mrb[0].mxu0 %v1426
        %v1545 = vpop.f32.mrb[0].mxu0
        %v1546 = vadd.f32 %v1353, %v1545
        %v1547 = vpop.f32.mrb[0].mxu0
        %1548 = vmatprep.mubr.f32.mxu0 0.0
        %1549 = vmatmul.mubr.f32.gmra.mrb[0].mxu0 %v1429
        %v1550 = vpop.f32.mrb[0].mxu0
        %v1551 = vadd.f32 %v1358, %v1550
        %v1552 = vpop.f32.mrb[0].mxu0
        %1553 = vmatprep.mubr.f32.mxu0 0.0
        %1554 = vmatmul.mubr.f32.gmra.mrb[0].mxu0 %v1432
        %v1555 = vpop.f32.mrb[0].mxu0
        %v1556 = vadd.f32 %v1363, %v1555
        %v1557 = vpop.f32.mrb[0].mxu0
        %1558 = vmatprep.mubr.f32.mxu0 0.0
        %1559 = vmatmul.mubr.f32.gmra.mrb[0].mxu0 %v1435
        %v1560 = vpop.f32.mrb[0].mxu0
        %v1561 = vadd.f32 %v1368, %v1560
        %v1562 = vpop.f32.mrb[0].mxu0
        %1563 = vmatprep.mubr.f32.mxu0 0.0
        %1564 = vmatmul.mubr.f32.gmra.mrb[0].mxu0 %v1438
        %v1565 = vpop.f32.mrb[0].mxu0
        %v1566 = vadd.f32 %v1373, %v1565
        %v1567 = vpop.f32.mrb[0].mxu0
        %1568 = vmatprep.mubr.f32.mxu0 0.0
        %1569 = vmatmul.mubr.f32.gmra.mrb[0].mxu0 %v1441
        %v1570 = vpop.f32.mrb[0].mxu0
        %v1571 = vadd.f32 %v1378, %v1570
        %v1572 = vpop.f32.mrb[0].mxu0
        %1573 = vmatprep.mubr.f32.mxu0 0.0
        %1574 = vmatmul.mubr.f32.gmra.mrb[0].mxu0 %v1444
        %v1575 = vpop.f32.mrb[0].mxu0
        %v1576 = vadd.f32 %v1383, %v1575
        %v1577 = vpop.f32.mrb[0].mxu0
        %1578 = vmatprep.mubr.f32.mxu0 0.0
        %1579 = vmatmul.mubr.f32.gmra.mrb[0].mxu0 %v1447
        %v1580 = vpop.f32.mrb[0].mxu0
        %v1581 = vadd.f32 %v1388, %v1580
        %v1582 = vpop.f32.mrb[0].mxu0
        %1583 = vmatprep.mubr.f32.mxu0 0.0
        %1584 = vmatmul.mubr.f32.gmra.mrb[0].mxu0 %v1450
        %v1585 = vpop.f32.mrb[0].mxu0
        %v1586 = vadd.f32 %v1393, %v1585
        %v1587 = vpop.f32.mrb[0].mxu0
        %1588 = vmatprep.mubr.f32.mxu0 0.0
        %1589 = vmatmul.mubr.f32.gmra.mrb[0].mxu0 %v1453
        %v1590 = vpop.f32.mrb[0].mxu0
        %v1591 = vadd.f32 %v1398, %v1590
        %v1592 = vpop.f32.mrb[0].mxu0
        %1593 = vmatprep.mubr.f32.mxu0 0.0
        %1594 = vmatmul.mubr.f32.gmra.mrb[0].mxu0 %v1456
        %v1595 = vpop.f32.mrb[0].mxu0
        %v1596 = vadd.f32 %v1403, %v1595
        %v1597 = vpop.f32.mrb[0].mxu0
        %1598 = vmatprep.mubr.f32.mxu0 0.0
        %1599 = vmatmul.mubr.f32.gmra.mrb[0].mxu0 %v1459
        %v1600 = vpop.f32.mrb[0].mxu0
        %v1601 = vadd.f32 %v1408, %v1600
        %v1602 = vpop.f32.mrb[0].mxu0
        %1603 = vmatprep.mubr.f32.mxu0 0.0
        %1604 = vmatmul.mubr.f32.gmra.mrb[0].mxu0 %v1462
        %v1605 = vpop.f32.mrb[0].mxu0
        %v1606 = vadd.f32 %v1413, %v1605
        %v1607 = vpop.f32.mrb[0].mxu0
        %1608 = vdwg.mxu0
        %v1609 = vld [vmem:[#allocation2 + $0x3] sm:$0xff]
        %v1610 = vld [vmem:[#allocation2 + $0xb] sm:$0xff]
        %v1611 = vld [vmem:[#allocation2 + $0x1b] sm:$0xff]
        %v1612 = vld [vmem:[#allocation2 + $0x23] sm:$0xff]
        %v1613 = vld [vmem:[#allocation2 + $0x33] sm:$0xff]
        %v1614 = vld [vmem:[#allocation2 + $0x3b] sm:$0xff]
        %v1615 = vld [vmem:[#allocation2 + $0x4b] sm:$0xff]
        %v1616 = vld [vmem:[#allocation2 + $0x53] sm:$0xff]
        %v1617 = vld [vmem:[#allocation2 + $0x63] sm:$0xff]
        %v1618 = vld [vmem:[#allocation2 + $0x6b] sm:$0xff]
        %v1619 = vld [vmem:[#allocation2 + $0x7b] sm:$0xff]
        %v1620 = vld [vmem:[#allocation2 + $0x83] sm:$0xff]
        %v1621 = vld [vmem:[#allocation2 + $0x93] sm:$0xff]
        %v1622 = vld [vmem:[#allocation2 + $0x9b] sm:$0xff]
        %v1623 = vld [vmem:[#allocation2 + $0xab] sm:$0xff]
        %v1624 = vld [vmem:[#allocation2 + $0xb3] sm:$0xff]
        %v1625 = vld [vmem:[%s2 + $0xc0] sm:$0xff]
        %v1626 = vld [vmem:[%s2 + $0xc8] sm:$0xff]
        %v1627 = vld [vmem:[%s2 + $0xd0] sm:$0xff]
        %v1628 = vld [vmem:[%s2 + $0xd8] sm:$0xff]
        %v1629 = vld [vmem:[%s2 + $0xe0] sm:$0xff]
        %v1630 = vld [vmem:[%s2 + $0xe8] sm:$0xff]
        %v1631 = vld [vmem:[%s2 + $0xf0] sm:$0xff]
        %v1632 = vld [vmem:[%s2 + $0xf8] sm:$0xff]
        %v1634 = vsel %vm620, %v1609, 0
        %v1637 = vsel %vm620, %v1610, 0
        %v1640 = vsel %vm620, %v1611, 0
        %v1643 = vsel %vm620, %v1612, 0
        %v1646 = vsel %vm620, %v1613, 0
        %v1649 = vsel %vm620, %v1614, 0
        %v1652 = vsel %vm620, %v1615, 0
        %v1655 = vsel %vm620, %v1616, 0
        %v1658 = vsel %vm620, %v1617, 0
        %v1661 = vsel %vm620, %v1618, 0
        %v1664 = vsel %vm620, %v1619, 0
        %v1667 = vsel %vm620, %v1620, 0
        %v1670 = vsel %vm620, %v1621, 0
        %v1673 = vsel %vm620, %v1622, 0
        %v1676 = vsel %vm620, %v1623, 0
        %v1679 = vsel %vm620, %v1624, 0
        %1681 = vmatprep.subr.mxu0 0.0
        %1682 = vmatpush1.msra.mxu0 %v1625
        %1683 = vmatprep.subr.mxu0 0.0
        %1684 = vmatpush1.msra.mxu0 %v1626
        %1685 = vmatprep.subr.mxu0 0.0
        %1686 = vmatpush1.msra.mxu0 %v1627
        %1687 = vmatprep.subr.mxu0 0.0
        %1688 = vmatpush1.msra.mxu0 %v1628
        %1689 = vmatprep.subr.mxu0 0.0
        %1690 = vmatpush1.msra.mxu0 %v1629
        %1691 = vmatprep.subr.mxu0 0.0
        %1692 = vmatpush1.msra.mxu0 %v1630
        %1693 = vmatprep.subr.mxu0 0.0
        %1694 = vmatpush1.msra.mxu0 %v1631
        %1695 = vmatprep.subr.mxu0 0.0
        %1696 = vmatpush1.msra.mxu0 %v1632
        %1697 = vmatprep.subr.mxu0 0.0
        %1698 = vmatpush1.msra.mxu0 0.0
        %1699 = vmatprep.subr.mxu0 0.0
        %1700 = vmatpush1.msra.mxu0 0.0
        %1701 = vmatprep.subr.mxu0 0.0
        %1702 = vmatpush1.msra.mxu0 0.0
        %1703 = vmatprep.subr.mxu0 0.0
        %1704 = vmatpush1.msra.mxu0 0.0
        %1705 = vmatprep.subr.mxu0 0.0
        %1706 = vmatpush1.msra.mxu0 0.0
        %1707 = vmatprep.subr.mxu0 0.0
        %1708 = vmatpush1.msra.mxu0 0.0
        %1709 = vmatprep.subr.mxu0 0.0
        %1710 = vmatpush1.msra.mxu0 0.0
        %1711 = vmatprep.subr.mxu0 0.0
        %1712 = vmatpush1.msra.mxu0 0.0
        %1713 = vmatprep.subr.mxu0 0.0
        %1714 = vmatpush1.msra.mxu0 0.0
        %1715 = vmatprep.subr.mxu0 0.0
        %1716 = vmatpush1.msra.mxu0 0.0
        %1717 = vmatprep.subr.mxu0 0.0
        %1718 = vmatpush1.msra.mxu0 0.0
        %1719 = vmatprep.subr.mxu0 0.0
        %1720 = vmatpush1.msra.mxu0 0.0
        %1721 = vmatprep.subr.mxu0 0.0
        %1722 = vmatpush1.msra.mxu0 0.0
        %1723 = vmatprep.subr.mxu0 0.0
        %1724 = vmatpush1.msra.mxu0 0.0
        %1725 = vmatprep.subr.mxu0 0.0
        %1726 = vmatpush1.msra.mxu0 0.0
        %1727 = vmatprep.subr.mxu0 0.0
        %1728 = vmatpush1.msra.mxu0 0.0
        %1729 = vmatprep.subr.mxu0 0.0
        %1730 = vmatpush1.msra.mxu0 0.0
        %1731 = vmatprep.subr.mxu0 0.0
        %1732 = vmatpush1.msra.mxu0 0.0
        %1733 = vmatprep.subr.mxu0 0.0
        %1734 = vmatpush1.msra.mxu0 0.0
        %1735 = vmatprep.subr.mxu0 0.0
        %1736 = vmatpush1.msra.mxu0 0.0
        %1737 = vmatprep.subr.mxu0 0.0
        %1738 = vmatpush1.msra.mxu0 0.0
        %1739 = vmatprep.subr.mxu0 0.0
        %1740 = vmatpush1.msra.mxu0 0.0
        %1741 = vmatprep.subr.mxu0 0.0
        %1742 = vmatpush1.msra.mxu0 0.0
        %1743 = vmatprep.subr.mxu0 0.0
        %1744 = vmatpush1.msra.mxu0 0.0
        %1745 = vmatprep.mubr.f32.mxu0 0.0
        %1746 = vmatmul.mubr.f32.gmra.mrb[0].mxu0 %v1634
        %v1747 = vpop.f32.mrb[0].mxu0
        %v1748 = vadd.f32 0.0, %v1747
        %v1749 = vpop.f32.mrb[0].mxu0
        %1750 = vmatprep.mubr.f32.mxu0 0.0
        %1751 = vmatmul.mubr.f32.gmra.mrb[0].mxu0 %v1637
        %v1752 = vpop.f32.mrb[0].mxu0
        %v1753 = vadd.f32 0.0, %v1752
        %v1754 = vpop.f32.mrb[0].mxu0
        %1755 = vmatprep.mubr.f32.mxu0 0.0
        %1756 = vmatmul.mubr.f32.gmra.mrb[0].mxu0 %v1640
        %v1757 = vpop.f32.mrb[0].mxu0
        %v1758 = vadd.f32 0.0, %v1757
        %v1759 = vpop.f32.mrb[0].mxu0
        %1760 = vmatprep.mubr.f32.mxu0 0.0
        %1761 = vmatmul.mubr.f32.gmra.mrb[0].mxu0 %v1643
        %v1762 = vpop.f32.mrb[0].mxu0
        %v1763 = vadd.f32 0.0, %v1762
        %v1764 = vpop.f32.mrb[0].mxu0
        %1765 = vmatprep.mubr.f32.mxu0 0.0
        %1766 = vmatmul.mubr.f32.gmra.mrb[0].mxu0 %v1646
        %v1767 = vpop.f32.mrb[0].mxu0
        %v1768 = vadd.f32 0.0, %v1767
        %v1769 = vpop.f32.mrb[0].mxu0
        %1770 = vmatprep.mubr.f32.mxu0 0.0
        %1771 = vmatmul.mubr.f32.gmra.mrb[0].mxu0 %v1649
        %v1772 = vpop.f32.mrb[0].mxu0
        %v1773 = vadd.f32 0.0, %v1772
        %v1774 = vpop.f32.mrb[0].mxu0
        %1775 = vmatprep.mubr.f32.mxu0 0.0
        %1776 = vmatmul.mubr.f32.gmra.mrb[0].mxu0 %v1652
        %v1777 = vpop.f32.mrb[0].mxu0
        %v1778 = vadd.f32 0.0, %v1777
        %v1779 = vpop.f32.mrb[0].mxu0
        %1780 = vmatprep.mubr.f32.mxu0 0.0
        %1781 = vmatmul.mubr.f32.gmra.mrb[0].mxu0 %v1655
        %v1782 = vpop.f32.mrb[0].mxu0
        %v1783 = vadd.f32 0.0, %v1782
        %v1784 = vpop.f32.mrb[0].mxu0
        %1785 = vmatprep.mubr.f32.mxu0 0.0
        %1786 = vmatmul.mubr.f32.gmra.mrb[0].mxu0 %v1658
        %v1787 = vpop.f32.mrb[0].mxu0
        %v1788 = vadd.f32 0.0, %v1787
        %v1789 = vpop.f32.mrb[0].mxu0
        %1790 = vmatprep.mubr.f32.mxu0 0.0
        %1791 = vmatmul.mubr.f32.gmra.mrb[0].mxu0 %v1661
        %v1792 = vpop.f32.mrb[0].mxu0
        %v1793 = vadd.f32 0.0, %v1792
        %v1794 = vpop.f32.mrb[0].mxu0
        %1795 = vmatprep.mubr.f32.mxu0 0.0
        %1796 = vmatmul.mubr.f32.gmra.mrb[0].mxu0 %v1664
        %v1797 = vpop.f32.mrb[0].mxu0
        %v1798 = vadd.f32 0.0, %v1797
        %v1799 = vpop.f32.mrb[0].mxu0
        %1800 = vmatprep.mubr.f32.mxu0 0.0
        %1801 = vmatmul.mubr.f32.gmra.mrb[0].mxu0 %v1667
        %v1802 = vpop.f32.mrb[0].mxu0
        %v1803 = vadd.f32 0.0, %v1802
        %v1804 = vpop.f32.mrb[0].mxu0
        %1805 = vmatprep.mubr.f32.mxu0 0.0
        %1806 = vmatmul.mubr.f32.gmra.mrb[0].mxu0 %v1670
        %v1807 = vpop.f32.mrb[0].mxu0
        %v1808 = vadd.f32 0.0, %v1807
        %v1809 = vpop.f32.mrb[0].mxu0
        %1810 = vmatprep.mubr.f32.mxu0 0.0
        %1811 = vmatmul.mubr.f32.gmra.mrb[0].mxu0 %v1673
        %v1812 = vpop.f32.mrb[0].mxu0
        %v1813 = vadd.f32 0.0, %v1812
        %v1814 = vpop.f32.mrb[0].mxu0
        %1815 = vmatprep.mubr.f32.mxu0 0.0
        %1816 = vmatmul.mubr.f32.gmra.mrb[0].mxu0 %v1676
        %v1817 = vpop.f32.mrb[0].mxu0
        %v1818 = vadd.f32 0.0, %v1817
        %v1819 = vpop.f32.mrb[0].mxu0
        %1820 = vmatprep.mubr.f32.mxu0 0.0
        %1821 = vmatmul.mubr.f32.gmra.mrb[0].mxu0 %v1679
        %v1822 = vpop.f32.mrb[0].mxu0
        %v1823 = vadd.f32 0.0, %v1822
        %v1824 = vpop.f32.mrb[0].mxu0
        %1825 = vdwg.mxu0
        %v1826 = vadd.f32 %v1531, %v1748
        %v1827 = vadd.f32 %v1536, %v1753
        %v1828 = vadd.f32 %v1541, %v1758
        %v1829 = vadd.f32 %v1546, %v1763
        %v1830 = vadd.f32 %v1551, %v1768
        %v1831 = vadd.f32 %v1556, %v1773
        %v1832 = vadd.f32 %v1561, %v1778
        %v1833 = vadd.f32 %v1566, %v1783
        %v1834 = vadd.f32 %v1571, %v1788
        %v1835 = vadd.f32 %v1576, %v1793
        %v1836 = vadd.f32 %v1581, %v1798
        %v1837 = vadd.f32 %v1586, %v1803
        %v1838 = vadd.f32 %v1591, %v1808
        %v1839 = vadd.f32 %v1596, %v1813
        %v1840 = vadd.f32 %v1601, %v1818
        %v1841 = vadd.f32 %v1606, %v1823
        %v1842 = vld [vmem:[%s3 + $0x1] sm:$0x1]
        %v1843 = vlaneseq
        %v1844 = vshrl.u32 %v1843, 7
        %v1845 = vsub.s32 0, %v1844
        %v1846 = vrot.slane %v1842, %v1845
        %v1847 = vadd.f32 %v1826, %v1846
        %v1848 = vadd.f32 %v1827, %v1846
        %v1849 = vadd.f32 %v1828, %v1846
        %v1850 = vadd.f32 %v1829, %v1846
        %v1851 = vadd.f32 %v1830, %v1846
        %v1852 = vadd.f32 %v1831, %v1846
        %v1853 = vadd.f32 %v1832, %v1846
        %v1854 = vadd.f32 %v1833, %v1846
        %v1855 = vadd.f32 %v1834, %v1846
        %v1856 = vadd.f32 %v1835, %v1846
        %v1857 = vadd.f32 %v1836, %v1846
        %v1858 = vadd.f32 %v1837, %v1846
        %v1859 = vadd.f32 %v1838, %v1846
        %v1860 = vadd.f32 %v1839, %v1846
        %v1861 = vadd.f32 %v1840, %v1846
        %v1862 = vadd.f32 %v1841, %v1846
        %v1863 = vsel %vm620, %v1847, 0.0
        %1864 = vadd.xlane.f32.xlu0 %v1863
        %v1865 = vpop.xlane.xlu0 %1864
        %v1866 = vsel %vm620, %v1848, 0.0
        %1867 = vadd.xlane.f32.xlu0 %v1866
        %v1868 = vpop.xlane.xlu0 %1867
        %v1869 = vsel %vm620, %v1849, 0.0
        %1870 = vadd.xlane.f32.xlu0 %v1869
        %v1871 = vpop.xlane.xlu0 %1870
        %v1872 = vsel %vm620, %v1850, 0.0
        %1873 = vadd.xlane.f32.xlu0 %v1872
        %v1874 = vpop.xlane.xlu0 %1873
        %v1875 = vsel %vm620, %v1851, 0.0
        %1876 = vadd.xlane.f32.xlu0 %v1875
        %v1877 = vpop.xlane.xlu0 %1876
        %v1878 = vsel %vm620, %v1852, 0.0
        %1879 = vadd.xlane.f32.xlu0 %v1878
        %v1880 = vpop.xlane.xlu0 %1879
        %v1881 = vsel %vm620, %v1853, 0.0
        %1882 = vadd.xlane.f32.xlu0 %v1881
        %v1883 = vpop.xlane.xlu0 %1882
        %v1884 = vsel %vm620, %v1854, 0.0
        %1885 = vadd.xlane.f32.xlu0 %v1884
        %v1886 = vpop.xlane.xlu0 %1885
        %v1887 = vsel %vm620, %v1855, 0.0
        %1888 = vadd.xlane.f32.xlu0 %v1887
        %v1889 = vpop.xlane.xlu0 %1888
        %v1890 = vsel %vm620, %v1856, 0.0
        %1891 = vadd.xlane.f32.xlu0 %v1890
        %v1892 = vpop.xlane.xlu0 %1891
        %v1893 = vsel %vm620, %v1857, 0.0
        %1894 = vadd.xlane.f32.xlu0 %v1893
        %v1895 = vpop.xlane.xlu0 %1894
        %v1896 = vsel %vm620, %v1858, 0.0
        %1897 = vadd.xlane.f32.xlu0 %v1896
        %v1898 = vpop.xlane.xlu0 %1897
        %v1899 = vsel %vm620, %v1859, 0.0
        %1900 = vadd.xlane.f32.xlu0 %v1899
        %v1901 = vpop.xlane.xlu0 %1900
        %v1902 = vsel %vm620, %v1860, 0.0
        %1903 = vadd.xlane.f32.xlu0 %v1902
        %v1904 = vpop.xlane.xlu0 %1903
        %v1905 = vsel %vm620, %v1861, 0.0
        %1906 = vadd.xlane.f32.xlu0 %v1905
        %v1907 = vpop.xlane.xlu0 %1906
        %v1908 = vsel %vm620, %v1862, 0.0
        %1909 = vadd.xlane.f32.xlu0 %v1908
        %v1910 = vpop.xlane.xlu0 %1909
        %v1911 = vmul.f32 %v1865, %v948
        %v1912 = vmul.f32 %v1868, %v948
        %v1913 = vmul.f32 %v1871, %v948
        %v1914 = vmul.f32 %v1874, %v948
        %v1915 = vmul.f32 %v1877, %v948
        %v1916 = vmul.f32 %v1880, %v948
        %v1917 = vmul.f32 %v1883, %v948
        %v1918 = vmul.f32 %v1886, %v948
        %v1919 = vmul.f32 %v1889, %v948
        %v1920 = vmul.f32 %v1892, %v948
        %v1921 = vmul.f32 %v1895, %v948
        %v1922 = vmul.f32 %v1898, %v948
        %v1923 = vmul.f32 %v1901, %v948
        %v1924 = vmul.f32 %v1904, %v948
        %v1925 = vmul.f32 %v1907, %v948
        %v1926 = vmul.f32 %v1910, %v948
        %v1927 = vsub.f32 %v1847, %v1911
        %v1928 = vsub.f32 %v1848, %v1912
        %v1929 = vsub.f32 %v1849, %v1913
        %v1930 = vsub.f32 %v1850, %v1914
        %v1931 = vsub.f32 %v1851, %v1915
        %v1932 = vsub.f32 %v1852, %v1916
        %v1933 = vsub.f32 %v1853, %v1917
        %v1934 = vsub.f32 %v1854, %v1918
        %v1935 = vsub.f32 %v1855, %v1919
        %v1936 = vsub.f32 %v1856, %v1920
        %v1937 = vsub.f32 %v1857, %v1921
        %v1938 = vsub.f32 %v1858, %v1922
        %v1939 = vsub.f32 %v1859, %v1923
        %v1940 = vsub.f32 %v1860, %v1924
        %v1941 = vsub.f32 %v1861, %v1925
        %v1942 = vsub.f32 %v1862, %v1926
        %v1943 = vmul.f32 %v1927, %v1927
        %v1944 = vmul.f32 %v1928, %v1928
        %v1945 = vmul.f32 %v1929, %v1929
        %v1946 = vmul.f32 %v1930, %v1930
        %v1947 = vmul.f32 %v1931, %v1931
        %v1948 = vmul.f32 %v1932, %v1932
        %v1949 = vmul.f32 %v1933, %v1933
        %v1950 = vmul.f32 %v1934, %v1934
        %v1951 = vmul.f32 %v1935, %v1935
        %v1952 = vmul.f32 %v1936, %v1936
        %v1953 = vmul.f32 %v1937, %v1937
        %v1954 = vmul.f32 %v1938, %v1938
        %v1955 = vmul.f32 %v1939, %v1939
        %v1956 = vmul.f32 %v1940, %v1940
        %v1957 = vmul.f32 %v1941, %v1941
        %v1958 = vmul.f32 %v1942, %v1942
        %v1959 = vsel %vm620, %v1943, 0.0
        %1960 = vadd.xlane.f32.xlu0 %v1959
        %v1961 = vpop.xlane.xlu0 %1960
        %v1962 = vsel %vm620, %v1944, 0.0
        %1963 = vadd.xlane.f32.xlu0 %v1962
        %v1964 = vpop.xlane.xlu0 %1963
        %v1965 = vsel %vm620, %v1945, 0.0
        %1966 = vadd.xlane.f32.xlu0 %v1965
        %v1967 = vpop.xlane.xlu0 %1966
        %v1968 = vsel %vm620, %v1946, 0.0
        %1969 = vadd.xlane.f32.xlu0 %v1968
        %v1970 = vpop.xlane.xlu0 %1969
        %v1971 = vsel %vm620, %v1947, 0.0
        %1972 = vadd.xlane.f32.xlu0 %v1971
        %v1973 = vpop.xlane.xlu0 %1972
        %v1974 = vsel %vm620, %v1948, 0.0
        %1975 = vadd.xlane.f32.xlu0 %v1974
        %v1976 = vpop.xlane.xlu0 %1975
        %v1977 = vsel %vm620, %v1949, 0.0
        %1978 = vadd.xlane.f32.xlu0 %v1977
        %v1979 = vpop.xlane.xlu0 %1978
        %v1980 = vsel %vm620, %v1950, 0.0
        %1981 = vadd.xlane.f32.xlu0 %v1980
        %v1982 = vpop.xlane.xlu0 %1981
        %v1983 = vsel %vm620, %v1951, 0.0
        %1984 = vadd.xlane.f32.xlu0 %v1983
        %v1985 = vpop.xlane.xlu0 %1984
        %v1986 = vsel %vm620, %v1952, 0.0
        %1987 = vadd.xlane.f32.xlu0 %v1986
        %v1988 = vpop.xlane.xlu0 %1987
        %v1989 = vsel %vm620, %v1953, 0.0
        %1990 = vadd.xlane.f32.xlu0 %v1989
        %v1991 = vpop.xlane.xlu0 %1990
        %v1992 = vsel %vm620, %v1954, 0.0
        %1993 = vadd.xlane.f32.xlu0 %v1992
        %v1994 = vpop.xlane.xlu0 %1993
        %v1995 = vsel %vm620, %v1955, 0.0
        %1996 = vadd.xlane.f32.xlu0 %v1995
        %v1997 = vpop.xlane.xlu0 %1996
        %v1998 = vsel %vm620, %v1956, 0.0
        %1999 = vadd.xlane.f32.xlu0 %v1998
        %v2000 = vpop.xlane.xlu0 %1999
        %v2001 = vsel %vm620, %v1957, 0.0
        %2002 = vadd.xlane.f32.xlu0 %v2001
        %v2003 = vpop.xlane.xlu0 %2002
        %v2004 = vsel %vm620, %v1958, 0.0
        %2005 = vadd.xlane.f32.xlu0 %v2004
        %v2006 = vpop.xlane.xlu0 %2005
        %v2007 = vmul.f32 %v1961, %v948
        %v2008 = vmul.f32 %v1964, %v948
        %v2009 = vmul.f32 %v1967, %v948
        %v2010 = vmul.f32 %v1970, %v948
        %v2011 = vmul.f32 %v1973, %v948
        %v2012 = vmul.f32 %v1976, %v948
        %v2013 = vmul.f32 %v1979, %v948
        %v2014 = vmul.f32 %v1982, %v948
        %v2015 = vmul.f32 %v1985, %v948
        %v2016 = vmul.f32 %v1988, %v948
        %v2017 = vmul.f32 %v1991, %v948
        %v2018 = vmul.f32 %v1994, %v948
        %v2019 = vmul.f32 %v1997, %v948
        %v2020 = vmul.f32 %v2000, %v948
        %v2021 = vmul.f32 %v2003, %v948
        %v2022 = vmul.f32 %v2006, %v948
        %v2023 = vadd.f32 %v2007, 1e-05
        %v2024 = vadd.f32 %v2008, 1e-05
        %v2025 = vadd.f32 %v2009, 1e-05
        %v2026 = vadd.f32 %v2010, 1e-05
        %v2027 = vadd.f32 %v2011, 1e-05
        %v2028 = vadd.f32 %v2012, 1e-05
        %v2029 = vadd.f32 %v2013, 1e-05
        %v2030 = vadd.f32 %v2014, 1e-05
        %v2031 = vadd.f32 %v2015, 1e-05
        %v2032 = vadd.f32 %v2016, 1e-05
        %v2033 = vadd.f32 %v2017, 1e-05
        %v2034 = vadd.f32 %v2018, 1e-05
        %v2035 = vadd.f32 %v2019, 1e-05
        %v2036 = vadd.f32 %v2020, 1e-05
        %v2037 = vadd.f32 %v2021, 1e-05
        %v2038 = vadd.f32 %v2022, 1e-05
        %v2039 = vrsqrt.pop %v2023
        %v2040 = vrsqrt.pop %v2024
        %v2041 = vrsqrt.pop %v2025
        %v2042 = vrsqrt.pop %v2026
        %v2043 = vrsqrt.pop %v2027
        %v2044 = vrsqrt.pop %v2028
        %v2045 = vrsqrt.pop %v2029
        %v2046 = vrsqrt.pop %v2030
        %v2047 = vrsqrt.pop %v2031
        %v2048 = vrsqrt.pop %v2032
        %v2049 = vrsqrt.pop %v2033
        %v2050 = vrsqrt.pop %v2034
        %v2051 = vrsqrt.pop %v2035
        %v2052 = vrsqrt.pop %v2036
        %v2053 = vrsqrt.pop %v2037
        %v2054 = vrsqrt.pop %v2038
        %v2055 = vmul.f32 %v1927, %v2039
        %v2056 = vmul.f32 %v1928, %v2040
        %v2057 = vmul.f32 %v1929, %v2041
        %v2058 = vmul.f32 %v1930, %v2042
        %v2059 = vmul.f32 %v1931, %v2043
        %v2060 = vmul.f32 %v1932, %v2044
        %v2061 = vmul.f32 %v1933, %v2045
        %v2062 = vmul.f32 %v1934, %v2046
        %v2063 = vmul.f32 %v1935, %v2047
        %v2064 = vmul.f32 %v1936, %v2048
        %v2065 = vmul.f32 %v1937, %v2049
        %v2066 = vmul.f32 %v1938, %v2050
        %v2067 = vmul.f32 %v1939, %v2051
        %v2068 = vmul.f32 %v1940, %v2052
        %v2069 = vmul.f32 %v1941, %v2053
        %v2070 = vmul.f32 %v1942, %v2054
        %v2071 = vld [vmem:[%s4 + $0x1] sm:$0x1]
        %v2072 = vlaneseq
        %v2073 = vshrl.u32 %v2072, 7
        %v2074 = vsub.s32 0, %v2073
        %v2075 = vrot.slane %v2071, %v2074
        %v2076 = vmul.f32 %v2055, %v2075
        %v2077 = vmul.f32 %v2056, %v2075
        %v2078 = vmul.f32 %v2057, %v2075
        %v2079 = vmul.f32 %v2058, %v2075
        %v2080 = vmul.f32 %v2059, %v2075
        %v2081 = vmul.f32 %v2060, %v2075
        %v2082 = vmul.f32 %v2061, %v2075
        %v2083 = vmul.f32 %v2062, %v2075
        %v2084 = vmul.f32 %v2063, %v2075
        %v2085 = vmul.f32 %v2064, %v2075
        %v2086 = vmul.f32 %v2065, %v2075
        %v2087 = vmul.f32 %v2066, %v2075
        %v2088 = vmul.f32 %v2067, %v2075
        %v2089 = vmul.f32 %v2068, %v2075
        %v2090 = vmul.f32 %v2069, %v2075
        %v2091 = vmul.f32 %v2070, %v2075
        %v2092 = vld [vmem:[%s5 + $0x1] sm:$0x1]
        %v2093 = vlaneseq
        %v2094 = vshrl.u32 %v2093, 7
        %v2095 = vsub.s32 0, %v2094
        %v2096 = vrot.slane %v2092, %v2095
        %v2097 = vadd.f32 %v2076, %v2096
        %v2098 = vadd.f32 %v2077, %v2096
        %v2099 = vadd.f32 %v2078, %v2096
        %v2100 = vadd.f32 %v2079, %v2096
        %v2101 = vadd.f32 %v2080, %v2096
        %v2102 = vadd.f32 %v2081, %v2096
        %v2103 = vadd.f32 %v2082, %v2096
        %v2104 = vadd.f32 %v2083, %v2096
        %v2105 = vadd.f32 %v2084, %v2096
        %v2106 = vadd.f32 %v2085, %v2096
        %v2107 = vadd.f32 %v2086, %v2096
        %v2108 = vadd.f32 %v2087, %v2096
        %v2109 = vadd.f32 %v2088, %v2096
        %v2110 = vadd.f32 %v2089, %v2096
        %v2111 = vadd.f32 %v2090, %v2096
        %v2112 = vadd.f32 %v2091, %v2096
        %v2113 = vmax.f32 %v2097, 0.0
        %v2114 = vmax.f32 %v2098, 0.0
        %v2115 = vmax.f32 %v2099, 0.0
        %v2116 = vmax.f32 %v2100, 0.0
        %v2117 = vmax.f32 %v2101, 0.0
        %v2118 = vmax.f32 %v2102, 0.0
        %v2119 = vmax.f32 %v2103, 0.0
        %v2120 = vmax.f32 %v2104, 0.0
        %v2121 = vmax.f32 %v2105, 0.0
        %v2122 = vmax.f32 %v2106, 0.0
        %v2123 = vmax.f32 %v2107, 0.0
        %v2124 = vmax.f32 %v2108, 0.0
        %v2125 = vmax.f32 %v2109, 0.0
        %v2126 = vmax.f32 %v2110, 0.0
        %v2127 = vmax.f32 %v2111, 0.0
        %v2128 = vmax.f32 %v2112, 0.0
        %v2129 = vsel %vm620, %v2113, -inf
        %v2130 = vsel %vm620, %v2114, -inf
        %v2131 = vmax.f32 %v2129, %v2130
        %v2132 = vrot.slane %v2131, 4
        %v2133 = vmax.f32 %v2131, %v2132
        %v2134 = vrot.slane %v2133, 2
        %v2135 = vmax.f32 %v2133, %v2134
        %v2136 = vrot.slane %v2135, 1
        %v2137 = vmax.f32 %v2135, %v2136
        %v2138 = vsel %vm620, %v2115, -inf
        %v2139 = vsel %vm620, %v2116, -inf
        %v2140 = vmax.f32 %v2138, %v2139
        %v2141 = vrot.slane %v2140, 4
        %v2142 = vmax.f32 %v2140, %v2141
        %v2143 = vrot.slane %v2142, 2
        %v2144 = vmax.f32 %v2142, %v2143
        %v2145 = vrot.slane %v2144, 1
        %v2146 = vmax.f32 %v2144, %v2145
        %v2147 = vsel %vm620, %v2117, -inf
        %v2148 = vsel %vm620, %v2118, -inf
        %v2149 = vmax.f32 %v2147, %v2148
        %v2150 = vrot.slane %v2149, 4
        %v2151 = vmax.f32 %v2149, %v2150
        %v2152 = vrot.slane %v2151, 2
        %v2153 = vmax.f32 %v2151, %v2152
        %v2154 = vrot.slane %v2153, 1
        %v2155 = vmax.f32 %v2153, %v2154
        %v2156 = vsel %vm620, %v2119, -inf
        %v2157 = vsel %vm620, %v2120, -inf
        %v2158 = vmax.f32 %v2156, %v2157
        %v2159 = vrot.slane %v2158, 4
        %v2160 = vmax.f32 %v2158, %v2159
        %v2161 = vrot.slane %v2160, 2
        %v2162 = vmax.f32 %v2160, %v2161
        %v2163 = vrot.slane %v2162, 1
        %v2164 = vmax.f32 %v2162, %v2163
        %v2165 = vsel %vm620, %v2121, -inf
        %v2166 = vsel %vm620, %v2122, -inf
        %v2167 = vmax.f32 %v2165, %v2166
        %v2168 = vrot.slane %v2167, 4
        %v2169 = vmax.f32 %v2167, %v2168
        %v2170 = vrot.slane %v2169, 2
        %v2171 = vmax.f32 %v2169, %v2170
        %v2172 = vrot.slane %v2171, 1
        %v2173 = vmax.f32 %v2171, %v2172
        %v2174 = vsel %vm620, %v2123, -inf
        %v2175 = vsel %vm620, %v2124, -inf
        %v2176 = vmax.f32 %v2174, %v2175
        %v2177 = vrot.slane %v2176, 4
        %v2178 = vmax.f32 %v2176, %v2177
        %v2179 = vrot.slane %v2178, 2
        %v2180 = vmax.f32 %v2178, %v2179
        %v2181 = vrot.slane %v2180, 1
        %v2182 = vmax.f32 %v2180, %v2181
        %v2183 = vsel %vm620, %v2125, -inf
        %v2184 = vsel %vm620, %v2126, -inf
        %v2185 = vmax.f32 %v2183, %v2184
        %v2186 = vrot.slane %v2185, 4
        %v2187 = vmax.f32 %v2185, %v2186
        %v2188 = vrot.slane %v2187, 2
        %v2189 = vmax.f32 %v2187, %v2188
        %v2190 = vrot.slane %v2189, 1
        %v2191 = vmax.f32 %v2189, %v2190
        %v2192 = vsel %vm620, %v2127, -inf
        %v2193 = vsel %vm620, %v2128, -inf
        %v2194 = vmax.f32 %v2192, %v2193
        %v2195 = vrot.slane %v2194, 4
        %v2196 = vmax.f32 %v2194, %v2195
        %v2197 = vrot.slane %v2196, 2
        %v2198 = vmax.f32 %v2196, %v2197
        %v2199 = vrot.slane %v2198, 1
        %v2200 = vmax.f32 %v2198, %v2199
        %v2201 = vld [vmem:[#allocation2] sm:$0xff]
        %v2202 = vld [vmem:[#allocation2 + $0x8] sm:$0xff]
        %v2203 = vld [vmem:[#allocation2 + $0x18] sm:$0xff]
        %v2204 = vld [vmem:[#allocation2 + $0x20] sm:$0xff]
        %v2205 = vld [vmem:[#allocation2 + $0x30] sm:$0xff]
        %v2206 = vld [vmem:[#allocation2 + $0x38] sm:$0xff]
        %v2207 = vld [vmem:[#allocation2 + $0x48] sm:$0xff]
        %v2208 = vld [vmem:[#allocation2 + $0x50] sm:$0xff]
        %v2209 = vld [vmem:[#allocation2 + $0x60] sm:$0xff]
        %v2210 = vld [vmem:[#allocation2 + $0x68] sm:$0xff]
        %v2211 = vld [vmem:[#allocation2 + $0x78] sm:$0xff]
        %v2212 = vld [vmem:[#allocation2 + $0x80] sm:$0xff]
        %v2213 = vld [vmem:[#allocation2 + $0x90] sm:$0xff]
        %v2214 = vld [vmem:[#allocation2 + $0x98] sm:$0xff]
        %v2215 = vld [vmem:[#allocation2 + $0xa8] sm:$0xff]
        %v2216 = vld [vmem:[#allocation2 + $0xb0] sm:$0xff]
        %v2217 = vld [vmem:[%s2 + $0x100] sm:$0xff]
        %v2218 = vld [vmem:[%s2 + $0x108] sm:$0xff]
        %v2219 = vld [vmem:[%s2 + $0x110] sm:$0xff]
        %v2220 = vld [vmem:[%s2 + $0x118] sm:$0xff]
        %v2221 = vld [vmem:[%s2 + $0x120] sm:$0xff]
        %v2222 = vld [vmem:[%s2 + $0x128] sm:$0xff]
        %v2223 = vld [vmem:[%s2 + $0x130] sm:$0xff]
        %v2224 = vld [vmem:[%s2 + $0x138] sm:$0xff]
        %v2225 = vld [vmem:[%s2 + $0x140] sm:$0xff]
        %v2226 = vld [vmem:[%s2 + $0x148] sm:$0xff]
        %v2227 = vld [vmem:[%s2 + $0x150] sm:$0xff]
        %v2228 = vld [vmem:[%s2 + $0x158] sm:$0xff]
        %v2229 = vld [vmem:[%s2 + $0x160] sm:$0xff]
        %v2230 = vld [vmem:[%s2 + $0x168] sm:$0xff]
        %v2231 = vld [vmem:[%s2 + $0x170] sm:$0xff]
        %v2232 = vld [vmem:[%s2 + $0x178] sm:$0xff]
        %2233 = vmatprep.subr.mxu0 0.0
        %2234 = vmatpush1.msra.mxu0 %v2225
        %2235 = vmatprep.subr.mxu0 0.0
        %2236 = vmatpush1.msra.mxu0 %v2226
        %2237 = vmatprep.subr.mxu0 0.0
        %2238 = vmatpush1.msra.mxu0 %v2227
        %2239 = vmatprep.subr.mxu0 0.0
        %2240 = vmatpush1.msra.mxu0 %v2228
        %2241 = vmatprep.subr.mxu0 0.0
        %2242 = vmatpush1.msra.mxu0 %v2229
        %2243 = vmatprep.subr.mxu0 0.0
        %2244 = vmatpush1.msra.mxu0 %v2230
        %2245 = vmatprep.subr.mxu0 0.0
        %2246 = vmatpush1.msra.mxu0 %v2231
        %2247 = vmatprep.subr.mxu0 0.0
        %2248 = vmatpush1.msra.mxu0 %v2232
        %2249 = vmatprep.subr.mxu0 0.0
        %2250 = vmatpush1.msra.mxu0 0.0
        %2251 = vmatprep.subr.mxu0 0.0
        %2252 = vmatpush1.msra.mxu0 0.0
        %2253 = vmatprep.subr.mxu0 0.0
        %2254 = vmatpush1.msra.mxu0 0.0
        %2255 = vmatprep.subr.mxu0 0.0
        %2256 = vmatpush1.msra.mxu0 0.0
        %2257 = vmatprep.subr.mxu0 0.0
        %2258 = vmatpush1.msra.mxu0 0.0
        %2259 = vmatprep.subr.mxu0 0.0
        %2260 = vmatpush1.msra.mxu0 0.0
        %2261 = vmatprep.subr.mxu0 0.0
        %2262 = vmatpush1.msra.mxu0 0.0
        %2263 = vmatprep.subr.mxu0 0.0
        %2264 = vmatpush1.msra.mxu0 0.0
        %2265 = vmatprep.subr.mxu0 0.0
        %2266 = vmatpush1.msra.mxu0 0.0
        %2267 = vmatprep.subr.mxu0 0.0
        %2268 = vmatpush1.msra.mxu0 0.0
        %2269 = vmatprep.subr.mxu0 0.0
        %2270 = vmatpush1.msra.mxu0 0.0
        %2271 = vmatprep.subr.mxu0 0.0
        %2272 = vmatpush1.msra.mxu0 0.0
        %2273 = vmatprep.subr.mxu0 0.0
        %2274 = vmatpush1.msra.mxu0 0.0
        %2275 = vmatprep.subr.mxu0 0.0
        %2276 = vmatpush1.msra.mxu0 0.0
        %2277 = vmatprep.subr.mxu0 0.0
        %2278 = vmatpush1.msra.mxu0 0.0
        %2279 = vmatprep.subr.mxu0 0.0
        %2280 = vmatpush1.msra.mxu0 0.0
        %2281 = vmatprep.subr.mxu0 0.0
        %2282 = vmatpush1.msra.mxu0 0.0
        %2283 = vmatprep.subr.mxu0 0.0
        %2284 = vmatpush1.msra.mxu0 0.0
        %2285 = vmatprep.subr.mxu0 0.0
        %2286 = vmatpush1.msra.mxu0 0.0
        %2287 = vmatprep.subr.mxu0 0.0
        %2288 = vmatpush1.msra.mxu0 0.0
        %2289 = vmatprep.subr.mxu0 0.0
        %2290 = vmatpush1.msra.mxu0 0.0
        %2291 = vmatprep.subr.mxu0 0.0
        %2292 = vmatpush1.msra.mxu0 0.0
        %2293 = vmatprep.subr.mxu0 0.0
        %2294 = vmatpush1.msra.mxu0 0.0
        %2295 = vmatprep.subr.mxu0 0.0
        %2296 = vmatpush1.msra.mxu0 0.0
        %2297 = vmatprep.mubr.f32.mxu0 0.0
        %2298 = vmatmul.mubr.f32.gmra.mrb[0].mxu0 %v1417
        %v2299 = vpop.f32.mrb[0].mxu0
        %v2300 = vadd.f32 0.0, %v2299
        %v2301 = vpop.f32.mrb[0].mxu0
        %2302 = vmatprep.mubr.f32.mxu0 0.0
        %2303 = vmatmul.mubr.f32.gmra.mrb[0].mxu0 %v1420
        %v2304 = vpop.f32.mrb[0].mxu0
        %v2305 = vadd.f32 0.0, %v2304
        %v2306 = vpop.f32.mrb[0].mxu0
        %2307 = vmatprep.mubr.f32.mxu0 0.0
        %2308 = vmatmul.mubr.f32.gmra.mrb[0].mxu0 %v1423
        %v2309 = vpop.f32.mrb[0].mxu0
        %v2310 = vadd.f32 0.0, %v2309
        %v2311 = vpop.f32.mrb[0].mxu0
        %2312 = vmatprep.mubr.f32.mxu0 0.0
        %2313 = vmatmul.mubr.f32.gmra.mrb[0].mxu0 %v1426
        %v2314 = vpop.f32.mrb[0].mxu0
        %v2315 = vadd.f32 0.0, %v2314
        %v2316 = vpop.f32.mrb[0].mxu0
        %2317 = vmatprep.mubr.f32.mxu0 0.0
        %2318 = vmatmul.mubr.f32.gmra.mrb[0].mxu0 %v1429
        %v2319 = vpop.f32.mrb[0].mxu0
        %v2320 = vadd.f32 0.0, %v2319
        %v2321 = vpop.f32.mrb[0].mxu0
        %2322 = vmatprep.mubr.f32.mxu0 0.0
        %2323 = vmatmul.mubr.f32.gmra.mrb[0].mxu0 %v1432
        %v2324 = vpop.f32.mrb[0].mxu0
        %v2325 = vadd.f32 0.0, %v2324
        %v2326 = vpop.f32.mrb[0].mxu0
        %2327 = vmatprep.mubr.f32.mxu0 0.0
        %2328 = vmatmul.mubr.f32.gmra.mrb[0].mxu0 %v1435
        %v2329 = vpop.f32.mrb[0].mxu0
        %v2330 = vadd.f32 0.0, %v2329
        %v2331 = vpop.f32.mrb[0].mxu0
        %2332 = vmatprep.mubr.f32.mxu0 0.0
        %2333 = vmatmul.mubr.f32.gmra.mrb[0].mxu0 %v1438
        %v2334 = vpop.f32.mrb[0].mxu0
        %v2335 = vadd.f32 0.0, %v2334
        %v2336 = vpop.f32.mrb[0].mxu0
        %2337 = vmatprep.mubr.f32.mxu0 0.0
        %2338 = vmatmul.mubr.f32.gmra.mrb[0].mxu0 %v1441
        %v2339 = vpop.f32.mrb[0].mxu0
        %v2340 = vadd.f32 0.0, %v2339
        %v2341 = vpop.f32.mrb[0].mxu0
        %2342 = vmatprep.mubr.f32.mxu0 0.0
        %2343 = vmatmul.mubr.f32.gmra.mrb[0].mxu0 %v1444
        %v2344 = vpop.f32.mrb[0].mxu0
        %v2345 = vadd.f32 0.0, %v2344
        %v2346 = vpop.f32.mrb[0].mxu0
        %2347 = vmatprep.mubr.f32.mxu0 0.0
        %2348 = vmatmul.mubr.f32.gmra.mrb[0].mxu0 %v1447
        %v2349 = vpop.f32.mrb[0].mxu0
        %v2350 = vadd.f32 0.0, %v2349
        %v2351 = vpop.f32.mrb[0].mxu0
        %2352 = vmatprep.mubr.f32.mxu0 0.0
        %2353 = vmatmul.mubr.f32.gmra.mrb[0].mxu0 %v1450
        %v2354 = vpop.f32.mrb[0].mxu0
        %v2355 = vadd.f32 0.0, %v2354
        %v2356 = vpop.f32.mrb[0].mxu0
        %2357 = vmatprep.mubr.f32.mxu0 0.0
        %2358 = vmatmul.mubr.f32.gmra.mrb[0].mxu0 %v1453
        %v2359 = vpop.f32.mrb[0].mxu0
        %v2360 = vadd.f32 0.0, %v2359
        %v2361 = vpop.f32.mrb[0].mxu0
        %2362 = vmatprep.mubr.f32.mxu0 0.0
        %2363 = vmatmul.mubr.f32.gmra.mrb[0].mxu0 %v1456
        %v2364 = vpop.f32.mrb[0].mxu0
        %v2365 = vadd.f32 0.0, %v2364
        %v2366 = vpop.f32.mrb[0].mxu0
        %2367 = vmatprep.mubr.f32.mxu0 0.0
        %2368 = vmatmul.mubr.f32.gmra.mrb[0].mxu0 %v1459
        %v2369 = vpop.f32.mrb[0].mxu0
        %v2370 = vadd.f32 0.0, %v2369
        %v2371 = vpop.f32.mrb[0].mxu0
        %2372 = vmatprep.mubr.f32.mxu0 0.0
        %2373 = vmatmul.mubr.f32.gmra.mrb[0].mxu0 %v1462
        %v2374 = vpop.f32.mrb[0].mxu0
        %v2375 = vadd.f32 0.0, %v2374
        %v2376 = vpop.f32.mrb[0].mxu0
        %2377 = vdwg.mxu0
        %v2379 = vsel %vm620, %v2201, 0
        %v2382 = vsel %vm620, %v2202, 0
        %v2385 = vsel %vm620, %v2203, 0
        %v2388 = vsel %vm620, %v2204, 0
        %v2391 = vsel %vm620, %v2205, 0
        %v2394 = vsel %vm620, %v2206, 0
        %v2397 = vsel %vm620, %v2207, 0
        %v2400 = vsel %vm620, %v2208, 0
        %v2403 = vsel %vm620, %v2209, 0
        %v2406 = vsel %vm620, %v2210, 0
        %v2409 = vsel %vm620, %v2211, 0
        %v2412 = vsel %vm620, %v2212, 0
        %v2415 = vsel %vm620, %v2213, 0
        %v2418 = vsel %vm620, %v2214, 0
        %v2421 = vsel %vm620, %v2215, 0
        %v2424 = vsel %vm620, %v2216, 0
        %2426 = vmatprep.subr.mxu0 0.0
        %2427 = vmatpush1.msra.mxu0 %v2217
        %2428 = vmatprep.subr.mxu0 0.0
        %2429 = vmatpush1.msra.mxu0 %v2218
        %2430 = vmatprep.subr.mxu0 0.0
        %2431 = vmatpush1.msra.mxu0 %v2219
        %2432 = vmatprep.subr.mxu0 0.0
        %2433 = vmatpush1.msra.mxu0 %v2220
        %2434 = vmatprep.subr.mxu0 0.0
        %2435 = vmatpush1.msra.mxu0 %v2221
        %2436 = vmatprep.subr.mxu0 0.0
        %2437 = vmatpush1.msra.mxu0 %v2222
        %2438 = vmatprep.subr.mxu0 0.0
        %2439 = vmatpush1.msra.mxu0 %v2223
        %2440 = vmatprep.subr.mxu0 0.0
        %2441 = vmatpush1.msra.mxu0 %v2224
        %2442 = vmatprep.subr.mxu0 0.0
        %2443 = vmatpush1.msra.mxu0 0.0
        %2444 = vmatprep.subr.mxu0 0.0
        %2445 = vmatpush1.msra.mxu0 0.0
        %2446 = vmatprep.subr.mxu0 0.0
        %2447 = vmatpush1.msra.mxu0 0.0
        %2448 = vmatprep.subr.mxu0 0.0
        %2449 = vmatpush1.msra.mxu0 0.0
        %2450 = vmatprep.subr.mxu0 0.0
        %2451 = vmatpush1.msra.mxu0 0.0
        %2452 = vmatprep.subr.mxu0 0.0
        %2453 = vmatpush1.msra.mxu0 0.0
        %2454 = vmatprep.subr.mxu0 0.0
        %2455 = vmatpush1.msra.mxu0 0.0
        %2456 = vmatprep.subr.mxu0 0.0
        %2457 = vmatpush1.msra.mxu0 0.0
        %2458 = vmatprep.subr.mxu0 0.0
        %2459 = vmatpush1.msra.mxu0 0.0
        %2460 = vmatprep.subr.mxu0 0.0
        %2461 = vmatpush1.msra.mxu0 0.0
        %2462 = vmatprep.subr.mxu0 0.0
        %2463 = vmatpush1.msra.mxu0 0.0
        %2464 = vmatprep.subr.mxu0 0.0
        %2465 = vmatpush1.msra.mxu0 0.0
        %2466 = vmatprep.subr.mxu0 0.0
        %2467 = vmatpush1.msra.mxu0 0.0
        %2468 = vmatprep.subr.mxu0 0.0
        %2469 = vmatpush1.msra.mxu0 0.0
        %2470 = vmatprep.subr.mxu0 0.0
        %2471 = vmatpush1.msra.mxu0 0.0
        %2472 = vmatprep.subr.mxu0 0.0
        %2473 = vmatpush1.msra.mxu0 0.0
        %2474 = vmatprep.subr.mxu0 0.0
        %2475 = vmatpush1.msra.mxu0 0.0
        %2476 = vmatprep.subr.mxu0 0.0
        %2477 = vmatpush1.msra.mxu0 0.0
        %2478 = vmatprep.subr.mxu0 0.0
        %2479 = vmatpush1.msra.mxu0 0.0
        %2480 = vmatprep.subr.mxu0 0.0
        %2481 = vmatpush1.msra.mxu0 0.0
        %2482 = vmatprep.subr.mxu0 0.0
        %2483 = vmatpush1.msra.mxu0 0.0
        %2484 = vmatprep.subr.mxu0 0.0
        %2485 = vmatpush1.msra.mxu0 0.0
        %2486 = vmatprep.subr.mxu0 0.0
        %2487 = vmatpush1.msra.mxu0 0.0
        %2488 = vmatprep.subr.mxu0 0.0
        %2489 = vmatpush1.msra.mxu0 0.0
        %2490 = vmatprep.mubr.f32.mxu0 0.0
        %2491 = vmatmul.mubr.f32.gmra.mrb[0].mxu0 %v2379
        %v2492 = vpop.f32.mrb[0].mxu0
        %v2493 = vadd.f32 %v2300, %v2492
        %v2494 = vpop.f32.mrb[0].mxu0
        %2495 = vmatprep.mubr.f32.mxu0 0.0
        %2496 = vmatmul.mubr.f32.gmra.mrb[0].mxu0 %v2382
        %v2497 = vpop.f32.mrb[0].mxu0
        %v2498 = vadd.f32 %v2305, %v2497
        %v2499 = vpop.f32.mrb[0].mxu0
        %2500 = vmatprep.mubr.f32.mxu0 0.0
        %2501 = vmatmul.mubr.f32.gmra.mrb[0].mxu0 %v2385
        %v2502 = vpop.f32.mrb[0].mxu0
        %v2503 = vadd.f32 %v2310, %v2502
        %v2504 = vpop.f32.mrb[0].mxu0
        %2505 = vmatprep.mubr.f32.mxu0 0.0
        %2506 = vmatmul.mubr.f32.gmra.mrb[0].mxu0 %v2388
        %v2507 = vpop.f32.mrb[0].mxu0
        %v2508 = vadd.f32 %v2315, %v2507
        %v2509 = vpop.f32.mrb[0].mxu0
        %2510 = vmatprep.mubr.f32.mxu0 0.0
        %2511 = vmatmul.mubr.f32.gmra.mrb[0].mxu0 %v2391
        %v2512 = vpop.f32.mrb[0].mxu0
        %v2513 = vadd.f32 %v2320, %v2512
        %v2514 = vpop.f32.mrb[0].mxu0
        %2515 = vmatprep.mubr.f32.mxu0 0.0
        %2516 = vmatmul.mubr.f32.gmra.mrb[0].mxu0 %v2394
        %v2517 = vpop.f32.mrb[0].mxu0
        %v2518 = vadd.f32 %v2325, %v2517
        %v2519 = vpop.f32.mrb[0].mxu0
        %2520 = vmatprep.mubr.f32.mxu0 0.0
        %2521 = vmatmul.mubr.f32.gmra.mrb[0].mxu0 %v2397
        %v2522 = vpop.f32.mrb[0].mxu0
        %v2523 = vadd.f32 %v2330, %v2522
        %v2524 = vpop.f32.mrb[0].mxu0
        %2525 = vmatprep.mubr.f32.mxu0 0.0
        %2526 = vmatmul.mubr.f32.gmra.mrb[0].mxu0 %v2400
        %v2527 = vpop.f32.mrb[0].mxu0
        %v2528 = vadd.f32 %v2335, %v2527
        %v2529 = vpop.f32.mrb[0].mxu0
        %2530 = vmatprep.mubr.f32.mxu0 0.0
        %2531 = vmatmul.mubr.f32.gmra.mrb[0].mxu0 %v2403
        %v2532 = vpop.f32.mrb[0].mxu0
        %v2533 = vadd.f32 %v2340, %v2532
        %v2534 = vpop.f32.mrb[0].mxu0
        %2535 = vmatprep.mubr.f32.mxu0 0.0
        %2536 = vmatmul.mubr.f32.gmra.mrb[0].mxu0 %v2406
        %v2537 = vpop.f32.mrb[0].mxu0
        %v2538 = vadd.f32 %v2345, %v2537
        %v2539 = vpop.f32.mrb[0].mxu0
        %2540 = vmatprep.mubr.f32.mxu0 0.0
        %2541 = vmatmul.mubr.f32.gmra.mrb[0].mxu0 %v2409
        %v2542 = vpop.f32.mrb[0].mxu0
        %v2543 = vadd.f32 %v2350, %v2542
        %v2544 = vpop.f32.mrb[0].mxu0
        %2545 = vmatprep.mubr.f32.mxu0 0.0
        %2546 = vmatmul.mubr.f32.gmra.mrb[0].mxu0 %v2412
        %v2547 = vpop.f32.mrb[0].mxu0
        %v2548 = vadd.f32 %v2355, %v2547
        %v2549 = vpop.f32.mrb[0].mxu0
        %2550 = vmatprep.mubr.f32.mxu0 0.0
        %2551 = vmatmul.mubr.f32.gmra.mrb[0].mxu0 %v2415
        %v2552 = vpop.f32.mrb[0].mxu0
        %v2553 = vadd.f32 %v2360, %v2552
        %v2554 = vpop.f32.mrb[0].mxu0
        %2555 = vmatprep.mubr.f32.mxu0 0.0
        %2556 = vmatmul.mubr.f32.gmra.mrb[0].mxu0 %v2418
        %v2557 = vpop.f32.mrb[0].mxu0
        %v2558 = vadd.f32 %v2365, %v2557
        %v2559 = vpop.f32.mrb[0].mxu0
        %2560 = vmatprep.mubr.f32.mxu0 0.0
        %2561 = vmatmul.mubr.f32.gmra.mrb[0].mxu0 %v2421
        %v2562 = vpop.f32.mrb[0].mxu0
        %v2563 = vadd.f32 %v2370, %v2562
        %v2564 = vpop.f32.mrb[0].mxu0
        %2565 = vmatprep.mubr.f32.mxu0 0.0
        %2566 = vmatmul.mubr.f32.gmra.mrb[0].mxu0 %v2424
        %v2567 = vpop.f32.mrb[0].mxu0
        %v2568 = vadd.f32 %v2375, %v2567
        %v2569 = vpop.f32.mrb[0].mxu0
        %2570 = vdwg.mxu0
        %v2571 = vld [vmem:[%s2 + $0x180] sm:$0xff]
        %v2572 = vld [vmem:[%s2 + $0x188] sm:$0xff]
        %v2573 = vld [vmem:[%s2 + $0x190] sm:$0xff]
        %v2574 = vld [vmem:[%s2 + $0x198] sm:$0xff]
        %v2575 = vld [vmem:[%s2 + $0x1a0] sm:$0xff]
        %v2576 = vld [vmem:[%s2 + $0x1a8] sm:$0xff]
        %v2577 = vld [vmem:[%s2 + $0x1b0] sm:$0xff]
        %v2578 = vld [vmem:[%s2 + $0x1b8] sm:$0xff]
        %2579 = vmatprep.subr.mxu0 0.0
        %2580 = vmatpush1.msra.mxu0 %v2571
        %2581 = vmatprep.subr.mxu0 0.0
        %2582 = vmatpush1.msra.mxu0 %v2572
        %2583 = vmatprep.subr.mxu0 0.0
        %2584 = vmatpush1.msra.mxu0 %v2573
        %2585 = vmatprep.subr.mxu0 0.0
        %2586 = vmatpush1.msra.mxu0 %v2574
        %2587 = vmatprep.subr.mxu0 0.0
        %2588 = vmatpush1.msra.mxu0 %v2575
        %2589 = vmatprep.subr.mxu0 0.0
        %2590 = vmatpush1.msra.mxu0 %v2576
        %2591 = vmatprep.subr.mxu0 0.0
        %2592 = vmatpush1.msra.mxu0 %v2577
        %2593 = vmatprep.subr.mxu0 0.0
        %2594 = vmatpush1.msra.mxu0 %v2578
        %2595 = vmatprep.subr.mxu0 0.0
        %2596 = vmatpush1.msra.mxu0 0.0
        %2597 = vmatprep.subr.mxu0 0.0
        %2598 = vmatpush1.msra.mxu0 0.0
        %2599 = vmatprep.subr.mxu0 0.0
        %2600 = vmatpush1.msra.mxu0 0.0
        %2601 = vmatprep.subr.mxu0 0.0
        %2602 = vmatpush1.msra.mxu0 0.0
        %2603 = vmatprep.subr.mxu0 0.0
        %2604 = vmatpush1.msra.mxu0 0.0
        %2605 = vmatprep.subr.mxu0 0.0
        %2606 = vmatpush1.msra.mxu0 0.0
        %2607 = vmatprep.subr.mxu0 0.0
        %2608 = vmatpush1.msra.mxu0 0.0
        %2609 = vmatprep.subr.mxu0 0.0
        %2610 = vmatpush1.msra.mxu0 0.0
        %2611 = vmatprep.subr.mxu0 0.0
        %2612 = vmatpush1.msra.mxu0 0.0
        %2613 = vmatprep.subr.mxu0 0.0
        %2614 = vmatpush1.msra.mxu0 0.0
        %2615 = vmatprep.subr.mxu0 0.0
        %2616 = vmatpush1.msra.mxu0 0.0
        %2617 = vmatprep.subr.mxu0 0.0
        %2618 = vmatpush1.msra.mxu0 0.0
        %2619 = vmatprep.subr.mxu0 0.0
        %2620 = vmatpush1.msra.mxu0 0.0
        %2621 = vmatprep.subr.mxu0 0.0
        %2622 = vmatpush1.msra.mxu0 0.0
        %2623 = vmatprep.subr.mxu0 0.0
        %2624 = vmatpush1.msra.mxu0 0.0
        %2625 = vmatprep.subr.mxu0 0.0
        %2626 = vmatpush1.msra.mxu0 0.0
        %2627 = vmatprep.subr.mxu0 0.0
        %2628 = vmatpush1.msra.mxu0 0.0
        %2629 = vmatprep.subr.mxu0 0.0
        %2630 = vmatpush1.msra.mxu0 0.0
        %2631 = vmatprep.subr.mxu0 0.0
        %2632 = vmatpush1.msra.mxu0 0.0
        %2633 = vmatprep.subr.mxu0 0.0
        %2634 = vmatpush1.msra.mxu0 0.0
        %2635 = vmatprep.subr.mxu0 0.0
        %2636 = vmatpush1.msra.mxu0 0.0
        %2637 = vmatprep.subr.mxu0 0.0
        %2638 = vmatpush1.msra.mxu0 0.0
        %2639 = vmatprep.subr.mxu0 0.0
        %2640 = vmatpush1.msra.mxu0 0.0
        %2641 = vmatprep.subr.mxu0 0.0
        %2642 = vmatpush1.msra.mxu0 0.0
        %2643 = vmatprep.mubr.f32.mxu0 0.0
        %2644 = vmatmul.mubr.f32.gmra.mrb[0].mxu0 %v687
        %v2645 = vpop.f32.mrb[0].mxu0
        %v2646 = vadd.f32 0.0, %v2645
        %v2647 = vpop.f32.mrb[0].mxu0
        %2648 = vmatprep.mubr.f32.mxu0 0.0
        %2649 = vmatmul.mubr.f32.gmra.mrb[0].mxu0 %v690
        %v2650 = vpop.f32.mrb[0].mxu0
        %v2651 = vadd.f32 0.0, %v2650
        %v2652 = vpop.f32.mrb[0].mxu0
        %2653 = vmatprep.mubr.f32.mxu0 0.0
        %2654 = vmatmul.mubr.f32.gmra.mrb[0].mxu0 %v693
        %v2655 = vpop.f32.mrb[0].mxu0
        %v2656 = vadd.f32 0.0, %v2655
        %v2657 = vpop.f32.mrb[0].mxu0
        %2658 = vmatprep.mubr.f32.mxu0 0.0
        %2659 = vmatmul.mubr.f32.gmra.mrb[0].mxu0 %v696
        %v2660 = vpop.f32.mrb[0].mxu0
        %v2661 = vadd.f32 0.0, %v2660
        %v2662 = vpop.f32.mrb[0].mxu0
        %2663 = vmatprep.mubr.f32.mxu0 0.0
        %2664 = vmatmul.mubr.f32.gmra.mrb[0].mxu0 %v699
        %v2665 = vpop.f32.mrb[0].mxu0
        %v2666 = vadd.f32 0.0, %v2665
        %v2667 = vpop.f32.mrb[0].mxu0
        %2668 = vmatprep.mubr.f32.mxu0 0.0
        %2669 = vmatmul.mubr.f32.gmra.mrb[0].mxu0 %v702
        %v2670 = vpop.f32.mrb[0].mxu0
        %v2671 = vadd.f32 0.0, %v2670
        %v2672 = vpop.f32.mrb[0].mxu0
        %2673 = vmatprep.mubr.f32.mxu0 0.0
        %2674 = vmatmul.mubr.f32.gmra.mrb[0].mxu0 %v705
        %v2675 = vpop.f32.mrb[0].mxu0
        %v2676 = vadd.f32 0.0, %v2675
        %v2677 = vpop.f32.mrb[0].mxu0
        %2678 = vmatprep.mubr.f32.mxu0 0.0
        %2679 = vmatmul.mubr.f32.gmra.mrb[0].mxu0 %v708
        %v2680 = vpop.f32.mrb[0].mxu0
        %v2681 = vadd.f32 0.0, %v2680
        %v2682 = vpop.f32.mrb[0].mxu0
        %2683 = vmatprep.mubr.f32.mxu0 0.0
        %2684 = vmatmul.mubr.f32.gmra.mrb[0].mxu0 %v711
        %v2685 = vpop.f32.mrb[0].mxu0
        %v2686 = vadd.f32 0.0, %v2685
        %v2687 = vpop.f32.mrb[0].mxu0
        %2688 = vmatprep.mubr.f32.mxu0 0.0
        %2689 = vmatmul.mubr.f32.gmra.mrb[0].mxu0 %v714
        %v2690 = vpop.f32.mrb[0].mxu0
        %v2691 = vadd.f32 0.0, %v2690
        %v2692 = vpop.f32.mrb[0].mxu0
        %2693 = vmatprep.mubr.f32.mxu0 0.0
        %2694 = vmatmul.mubr.f32.gmra.mrb[0].mxu0 %v717
        %v2695 = vpop.f32.mrb[0].mxu0
        %v2696 = vadd.f32 0.0, %v2695
        %v2697 = vpop.f32.mrb[0].mxu0
        %2698 = vmatprep.mubr.f32.mxu0 0.0
        %2699 = vmatmul.mubr.f32.gmra.mrb[0].mxu0 %v720
        %v2700 = vpop.f32.mrb[0].mxu0
        %v2701 = vadd.f32 0.0, %v2700
        %v2702 = vpop.f32.mrb[0].mxu0
        %2703 = vmatprep.mubr.f32.mxu0 0.0
        %2704 = vmatmul.mubr.f32.gmra.mrb[0].mxu0 %v723
        %v2705 = vpop.f32.mrb[0].mxu0
        %v2706 = vadd.f32 0.0, %v2705
        %v2707 = vpop.f32.mrb[0].mxu0
        %2708 = vmatprep.mubr.f32.mxu0 0.0
        %2709 = vmatmul.mubr.f32.gmra.mrb[0].mxu0 %v726
        %v2710 = vpop.f32.mrb[0].mxu0
        %v2711 = vadd.f32 0.0, %v2710
        %v2712 = vpop.f32.mrb[0].mxu0
        %2713 = vmatprep.mubr.f32.mxu0 0.0
        %2714 = vmatmul.mubr.f32.gmra.mrb[0].mxu0 %v729
        %v2715 = vpop.f32.mrb[0].mxu0
        %v2716 = vadd.f32 0.0, %v2715
        %v2717 = vpop.f32.mrb[0].mxu0
        %2718 = vmatprep.mubr.f32.mxu0 0.0
        %2719 = vmatmul.mubr.f32.gmra.mrb[0].mxu0 %v732
        %v2720 = vpop.f32.mrb[0].mxu0
        %v2721 = vadd.f32 0.0, %v2720
        %v2722 = vpop.f32.mrb[0].mxu0
        %2723 = vdwg.mxu0
        %v2724 = vadd.f32 %v2493, %v2646
        %v2725 = vadd.f32 %v2498, %v2651
        %v2726 = vadd.f32 %v2503, %v2656
        %v2727 = vadd.f32 %v2508, %v2661
        %v2728 = vadd.f32 %v2513, %v2666
        %v2729 = vadd.f32 %v2518, %v2671
        %v2730 = vadd.f32 %v2523, %v2676
        %v2731 = vadd.f32 %v2528, %v2681
        %v2732 = vadd.f32 %v2533, %v2686
        %v2733 = vadd.f32 %v2538, %v2691
        %v2734 = vadd.f32 %v2543, %v2696
        %v2735 = vadd.f32 %v2548, %v2701
        %v2736 = vadd.f32 %v2553, %v2706
        %v2737 = vadd.f32 %v2558, %v2711
        %v2738 = vadd.f32 %v2563, %v2716
        %v2739 = vadd.f32 %v2568, %v2721
        %v2740 = vld [vmem:[%s2 + $0x1c0] sm:$0xff]
        %v2741 = vld [vmem:[%s2 + $0x1c8] sm:$0xff]
        %v2742 = vld [vmem:[%s2 + $0x1d0] sm:$0xff]
        %v2743 = vld [vmem:[%s2 + $0x1d8] sm:$0xff]
        %v2744 = vld [vmem:[%s2 + $0x1e0] sm:$0xff]
        %v2745 = vld [vmem:[%s2 + $0x1e8] sm:$0xff]
        %v2746 = vld [vmem:[%s2 + $0x1f0] sm:$0xff]
        %v2747 = vld [vmem:[%s2 + $0x1f8] sm:$0xff]
        %2748 = vmatprep.subr.mxu0 0.0
        %2749 = vmatpush1.msra.mxu0 %v2740
        %2750 = vmatprep.subr.mxu0 0.0
        %2751 = vmatpush1.msra.mxu0 %v2741
        %2752 = vmatprep.subr.mxu0 0.0
        %2753 = vmatpush1.msra.mxu0 %v2742
        %2754 = vmatprep.subr.mxu0 0.0
        %2755 = vmatpush1.msra.mxu0 %v2743
        %2756 = vmatprep.subr.mxu0 0.0
        %2757 = vmatpush1.msra.mxu0 %v2744
        %2758 = vmatprep.subr.mxu0 0.0
        %2759 = vmatpush1.msra.mxu0 %v2745
        %2760 = vmatprep.subr.mxu0 0.0
        %2761 = vmatpush1.msra.mxu0 %v2746
        %2762 = vmatprep.subr.mxu0 0.0
        %2763 = vmatpush1.msra.mxu0 %v2747
        %2764 = vmatprep.subr.mxu0 0.0
        %2765 = vmatpush1.msra.mxu0 0.0
        %2766 = vmatprep.subr.mxu0 0.0
        %2767 = vmatpush1.msra.mxu0 0.0
        %2768 = vmatprep.subr.mxu0 0.0
        %2769 = vmatpush1.msra.mxu0 0.0
        %2770 = vmatprep.subr.mxu0 0.0
        %2771 = vmatpush1.msra.mxu0 0.0
        %2772 = vmatprep.subr.mxu0 0.0
        %2773 = vmatpush1.msra.mxu0 0.0
        %2774 = vmatprep.subr.mxu0 0.0
        %2775 = vmatpush1.msra.mxu0 0.0
        %2776 = vmatprep.subr.mxu0 0.0
        %2777 = vmatpush1.msra.mxu0 0.0
        %2778 = vmatprep.subr.mxu0 0.0
        %2779 = vmatpush1.msra.mxu0 0.0
        %2780 = vmatprep.subr.mxu0 0.0
        %2781 = vmatpush1.msra.mxu0 0.0
        %2782 = vmatprep.subr.mxu0 0.0
        %2783 = vmatpush1.msra.mxu0 0.0
        %2784 = vmatprep.subr.mxu0 0.0
        %2785 = vmatpush1.msra.mxu0 0.0
        %2786 = vmatprep.subr.mxu0 0.0
        %2787 = vmatpush1.msra.mxu0 0.0
        %2788 = vmatprep.subr.mxu0 0.0
        %2789 = vmatpush1.msra.mxu0 0.0
        %2790 = vmatprep.subr.mxu0 0.0
        %2791 = vmatpush1.msra.mxu0 0.0
        %2792 = vmatprep.subr.mxu0 0.0
        %2793 = vmatpush1.msra.mxu0 0.0
        %2794 = vmatprep.subr.mxu0 0.0
        %2795 = vmatpush1.msra.mxu0 0.0
        %2796 = vmatprep.subr.mxu0 0.0
        %2797 = vmatpush1.msra.mxu0 0.0
        %2798 = vmatprep.subr.mxu0 0.0
        %2799 = vmatpush1.msra.mxu0 0.0
        %2800 = vmatprep.subr.mxu0 0.0
        %2801 = vmatpush1.msra.mxu0 0.0
        %2802 = vmatprep.subr.mxu0 0.0
        %2803 = vmatpush1.msra.mxu0 0.0
        %2804 = vmatprep.subr.mxu0 0.0
        %2805 = vmatpush1.msra.mxu0 0.0
        %2806 = vmatprep.subr.mxu0 0.0
        %2807 = vmatpush1.msra.mxu0 0.0
        %2808 = vmatprep.subr.mxu0 0.0
        %2809 = vmatpush1.msra.mxu0 0.0
        %2810 = vmatprep.subr.mxu0 0.0
        %2811 = vmatpush1.msra.mxu0 0.0
        %2812 = vmatprep.mubr.f32.mxu0 0.0
        %2813 = vmatmul.mubr.f32.gmra.mrb[0].mxu0 %v1634
        %v2814 = vpop.f32.mrb[0].mxu0
        %v2815 = vadd.f32 0.0, %v2814
        %v2816 = vpop.f32.mrb[0].mxu0
        %2817 = vmatprep.mubr.f32.mxu0 0.0
        %2818 = vmatmul.mubr.f32.gmra.mrb[0].mxu0 %v1637
        %v2819 = vpop.f32.mrb[0].mxu0
        %v2820 = vadd.f32 0.0, %v2819
        %v2821 = vpop.f32.mrb[0].mxu0
        %2822 = vmatprep.mubr.f32.mxu0 0.0
        %2823 = vmatmul.mubr.f32.gmra.mrb[0].mxu0 %v1640
        %v2824 = vpop.f32.mrb[0].mxu0
        %v2825 = vadd.f32 0.0, %v2824
        %v2826 = vpop.f32.mrb[0].mxu0
        %2827 = vmatprep.mubr.f32.mxu0 0.0
        %2828 = vmatmul.mubr.f32.gmra.mrb[0].mxu0 %v1643
        %v2829 = vpop.f32.mrb[0].mxu0
        %v2830 = vadd.f32 0.0, %v2829
        %v2831 = vpop.f32.mrb[0].mxu0
        %2832 = vmatprep.mubr.f32.mxu0 0.0
        %2833 = vmatmul.mubr.f32.gmra.mrb[0].mxu0 %v1646
        %v2834 = vpop.f32.mrb[0].mxu0
        %v2835 = vadd.f32 0.0, %v2834
        %v2836 = vpop.f32.mrb[0].mxu0
        %2837 = vmatprep.mubr.f32.mxu0 0.0
        %2838 = vmatmul.mubr.f32.gmra.mrb[0].mxu0 %v1649
        %v2839 = vpop.f32.mrb[0].mxu0
        %v2840 = vadd.f32 0.0, %v2839
        %v2841 = vpop.f32.mrb[0].mxu0
        %2842 = vmatprep.mubr.f32.mxu0 0.0
        %2843 = vmatmul.mubr.f32.gmra.mrb[0].mxu0 %v1652
        %v2844 = vpop.f32.mrb[0].mxu0
        %v2845 = vadd.f32 0.0, %v2844
        %v2846 = vpop.f32.mrb[0].mxu0
        %2847 = vmatprep.mubr.f32.mxu0 0.0
        %2848 = vmatmul.mubr.f32.gmra.mrb[0].mxu0 %v1655
        %v2849 = vpop.f32.mrb[0].mxu0
        %v2850 = vadd.f32 0.0, %v2849
        %v2851 = vpop.f32.mrb[0].mxu0
        %2852 = vmatprep.mubr.f32.mxu0 0.0
        %2853 = vmatmul.mubr.f32.gmra.mrb[0].mxu0 %v1658
        %v2854 = vpop.f32.mrb[0].mxu0
        %v2855 = vadd.f32 0.0, %v2854
        %v2856 = vpop.f32.mrb[0].mxu0
        %2857 = vmatprep.mubr.f32.mxu0 0.0
        %2858 = vmatmul.mubr.f32.gmra.mrb[0].mxu0 %v1661
        %v2859 = vpop.f32.mrb[0].mxu0
        %v2860 = vadd.f32 0.0, %v2859
        %v2861 = vpop.f32.mrb[0].mxu0
        %2862 = vmatprep.mubr.f32.mxu0 0.0
        %2863 = vmatmul.mubr.f32.gmra.mrb[0].mxu0 %v1664
        %v2864 = vpop.f32.mrb[0].mxu0
        %v2865 = vadd.f32 0.0, %v2864
        %v2866 = vpop.f32.mrb[0].mxu0
        %2867 = vmatprep.mubr.f32.mxu0 0.0
        %2868 = vmatmul.mubr.f32.gmra.mrb[0].mxu0 %v1667
        %v2869 = vpop.f32.mrb[0].mxu0
        %v2870 = vadd.f32 0.0, %v2869
        %v2871 = vpop.f32.mrb[0].mxu0
        %2872 = vmatprep.mubr.f32.mxu0 0.0
        %2873 = vmatmul.mubr.f32.gmra.mrb[0].mxu0 %v1670
        %v2874 = vpop.f32.mrb[0].mxu0
        %v2875 = vadd.f32 0.0, %v2874
        %v2876 = vpop.f32.mrb[0].mxu0
        %2877 = vmatprep.mubr.f32.mxu0 0.0
        %2878 = vmatmul.mubr.f32.gmra.mrb[0].mxu0 %v1673
        %v2879 = vpop.f32.mrb[0].mxu0
        %v2880 = vadd.f32 0.0, %v2879
        %v2881 = vpop.f32.mrb[0].mxu0
        %2882 = vmatprep.mubr.f32.mxu0 0.0
        %2883 = vmatmul.mubr.f32.gmra.mrb[0].mxu0 %v1676
        %v2884 = vpop.f32.mrb[0].mxu0
        %v2885 = vadd.f32 0.0, %v2884
        %v2886 = vpop.f32.mrb[0].mxu0
        %2887 = vmatprep.mubr.f32.mxu0 0.0
        %2888 = vmatmul.mubr.f32.gmra.mrb[0].mxu0 %v1679
        %v2889 = vpop.f32.mrb[0].mxu0
        %v2890 = vadd.f32 0.0, %v2889
        %v2891 = vpop.f32.mrb[0].mxu0
        %2892 = vdwg.mxu0
        %v2893 = vadd.f32 %v2724, %v2815
        %v2894 = vadd.f32 %v2725, %v2820
        %v2895 = vadd.f32 %v2726, %v2825
        %v2896 = vadd.f32 %v2727, %v2830
        %v2897 = vadd.f32 %v2728, %v2835
        %v2898 = vadd.f32 %v2729, %v2840
        %v2899 = vadd.f32 %v2730, %v2845
        %v2900 = vadd.f32 %v2731, %v2850
        %v2901 = vadd.f32 %v2732, %v2855
        %v2902 = vadd.f32 %v2733, %v2860
        %v2903 = vadd.f32 %v2734, %v2865
        %v2904 = vadd.f32 %v2735, %v2870
        %v2905 = vadd.f32 %v2736, %v2875
        %v2906 = vadd.f32 %v2737, %v2880
        %v2907 = vadd.f32 %v2738, %v2885
        %v2908 = vadd.f32 %v2739, %v2890
        %v2909 = vld [vmem:[#allocation2 + $0x4] sm:$0xff]
        %v2910 = vld [vmem:[#allocation2 + $0xc] sm:$0xff]
        %v2911 = vld [vmem:[#allocation2 + $0x1c] sm:$0xff]
        %v2912 = vld [vmem:[#allocation2 + $0x24] sm:$0xff]
        %v2913 = vld [vmem:[#allocation2 + $0x34] sm:$0xff]
        %v2914 = vld [vmem:[#allocation2 + $0x3c] sm:$0xff]
        %v2915 = vld [vmem:[#allocation2 + $0x4c] sm:$0xff]
        %v2916 = vld [vmem:[#allocation2 + $0x54] sm:$0xff]
        %v2917 = vld [vmem:[#allocation2 + $0x64] sm:$0xff]
        %v2918 = vld [vmem:[#allocation2 + $0x6c] sm:$0xff]
        %v2919 = vld [vmem:[#allocation2 + $0x7c] sm:$0xff]
        %v2920 = vld [vmem:[#allocation2 + $0x84] sm:$0xff]
        %v2921 = vld [vmem:[#allocation2 + $0x94] sm:$0xff]
        %v2922 = vld [vmem:[#allocation2 + $0x9c] sm:$0xff]
        %v2923 = vld [vmem:[#allocation2 + $0xac] sm:$0xff]
        %v2924 = vld [vmem:[#allocation2 + $0xb4] sm:$0xff]
        %v2925 = vld [vmem:[%s2 + $0x200] sm:$0xff]
        %v2926 = vld [vmem:[%s2 + $0x208] sm:$0xff]
        %v2927 = vld [vmem:[%s2 + $0x210] sm:$0xff]
        %v2928 = vld [vmem:[%s2 + $0x218] sm:$0xff]
        %v2929 = vld [vmem:[%s2 + $0x220] sm:$0xff]
        %v2930 = vld [vmem:[%s2 + $0x228] sm:$0xff]
        %v2931 = vld [vmem:[%s2 + $0x230] sm:$0xff]
        %v2932 = vld [vmem:[%s2 + $0x238] sm:$0xff]
        %v2934 = vsel %vm620, %v2909, 0
        %v2937 = vsel %vm620, %v2910, 0
        %v2940 = vsel %vm620, %v2911, 0
        %v2943 = vsel %vm620, %v2912, 0
        %v2946 = vsel %vm620, %v2913, 0
        %v2949 = vsel %vm620, %v2914, 0
        %v2952 = vsel %vm620, %v2915, 0
        %v2955 = vsel %vm620, %v2916, 0
        %v2958 = vsel %vm620, %v2917, 0
        %v2961 = vsel %vm620, %v2918, 0
        %v2964 = vsel %vm620, %v2919, 0
        %v2967 = vsel %vm620, %v2920, 0
        %v2970 = vsel %vm620, %v2921, 0
        %v2973 = vsel %vm620, %v2922, 0
        %v2976 = vsel %vm620, %v2923, 0
        %v2979 = vsel %vm620, %v2924, 0
        %2981 = vmatprep.subr.mxu0 0.0
        %2982 = vmatpush1.msra.mxu0 %v2925
        %2983 = vmatprep.subr.mxu0 0.0
        %2984 = vmatpush1.msra.mxu0 %v2926
        %2985 = vmatprep.subr.mxu0 0.0
        %2986 = vmatpush1.msra.mxu0 %v2927
        %2987 = vmatprep.subr.mxu0 0.0
        %2988 = vmatpush1.msra.mxu0 %v2928
        %2989 = vmatprep.subr.mxu0 0.0
        %2990 = vmatpush1.msra.mxu0 %v2929
        %2991 = vmatprep.subr.mxu0 0.0
        %2992 = vmatpush1.msra.mxu0 %v2930
        %2993 = vmatprep.subr.mxu0 0.0
        %2994 = vmatpush1.msra.mxu0 %v2931
        %2995 = vmatprep.subr.mxu0 0.0
        %2996 = vmatpush1.msra.mxu0 %v2932
        %2997 = vmatprep.subr.mxu0 0.0
        %2998 = vmatpush1.msra.mxu0 0.0
        %2999 = vmatprep.subr.mxu0 0.0
        %3000 = vmatpush1.msra.mxu0 0.0
        %3001 = vmatprep.subr.mxu0 0.0
        %3002 = vmatpush1.msra.mxu0 0.0
        %3003 = vmatprep.subr.mxu0 0.0
        %3004 = vmatpush1.msra.mxu0 0.0
        %3005 = vmatprep.subr.mxu0 0.0
        %3006 = vmatpush1.msra.mxu0 0.0
        %3007 = vmatprep.subr.mxu0 0.0
        %3008 = vmatpush1.msra.mxu0 0.0
        %3009 = vmatprep.subr.mxu0 0.0
        %3010 = vmatpush1.msra.mxu0 0.0
        %3011 = vmatprep.subr.mxu0 0.0
        %3012 = vmatpush1.msra.mxu0 0.0
        %3013 = vmatprep.subr.mxu0 0.0
        %3014 = vmatpush1.msra.mxu0 0.0
        %3015 = vmatprep.subr.mxu0 0.0
        %3016 = vmatpush1.msra.mxu0 0.0
        %3017 = vmatprep.subr.mxu0 0.0
        %3018 = vmatpush1.msra.mxu0 0.0
        %3019 = vmatprep.subr.mxu0 0.0
        %3020 = vmatpush1.msra.mxu0 0.0
        %3021 = vmatprep.subr.mxu0 0.0
        %3022 = vmatpush1.msra.mxu0 0.0
        %3023 = vmatprep.subr.mxu0 0.0
        %3024 = vmatpush1.msra.mxu0 0.0
        %3025 = vmatprep.subr.mxu0 0.0
        %3026 = vmatpush1.msra.mxu0 0.0
        %3027 = vmatprep.subr.mxu0 0.0
        %3028 = vmatpush1.msra.mxu0 0.0
        %3029 = vmatprep.subr.mxu0 0.0
        %3030 = vmatpush1.msra.mxu0 0.0
        %3031 = vmatprep.subr.mxu0 0.0
        %3032 = vmatpush1.msra.mxu0 0.0
        %3033 = vmatprep.subr.mxu0 0.0
        %3034 = vmatpush1.msra.mxu0 0.0
        %3035 = vmatprep.subr.mxu0 0.0
        %3036 = vmatpush1.msra.mxu0 0.0
        %3037 = vmatprep.subr.mxu0 0.0
        %3038 = vmatpush1.msra.mxu0 0.0
        %3039 = vmatprep.subr.mxu0 0.0
        %3040 = vmatpush1.msra.mxu0 0.0
        %3041 = vmatprep.subr.mxu0 0.0
        %3042 = vmatpush1.msra.mxu0 0.0
        %3043 = vmatprep.subr.mxu0 0.0
        %3044 = vmatpush1.msra.mxu0 0.0
        %3045 = vmatprep.mubr.f32.mxu0 0.0
        %3046 = vmatmul.mubr.f32.gmra.mrb[0].mxu0 %v2934
        %v3047 = vpop.f32.mrb[0].mxu0
        %v3048 = vadd.f32 0.0, %v3047
        %v3049 = vpop.f32.mrb[0].mxu0
        %3050 = vmatprep.mubr.f32.mxu0 0.0
        %3051 = vmatmul.mubr.f32.gmra.mrb[0].mxu0 %v2937
        %v3052 = vpop.f32.mrb[0].mxu0
        %v3053 = vadd.f32 0.0, %v3052
        %v3054 = vpop.f32.mrb[0].mxu0
        %3055 = vmatprep.mubr.f32.mxu0 0.0
        %3056 = vmatmul.mubr.f32.gmra.mrb[0].mxu0 %v2940
        %v3057 = vpop.f32.mrb[0].mxu0
        %v3058 = vadd.f32 0.0, %v3057
        %v3059 = vpop.f32.mrb[0].mxu0
        %3060 = vmatprep.mubr.f32.mxu0 0.0
        %3061 = vmatmul.mubr.f32.gmra.mrb[0].mxu0 %v2943
        %v3062 = vpop.f32.mrb[0].mxu0
        %v3063 = vadd.f32 0.0, %v3062
        %v3064 = vpop.f32.mrb[0].mxu0
        %3065 = vmatprep.mubr.f32.mxu0 0.0
        %3066 = vmatmul.mubr.f32.gmra.mrb[0].mxu0 %v2946
        %v3067 = vpop.f32.mrb[0].mxu0
        %v3068 = vadd.f32 0.0, %v3067
        %v3069 = vpop.f32.mrb[0].mxu0
        %3070 = vmatprep.mubr.f32.mxu0 0.0
        %3071 = vmatmul.mubr.f32.gmra.mrb[0].mxu0 %v2949
        %v3072 = vpop.f32.mrb[0].mxu0
        %v3073 = vadd.f32 0.0, %v3072
        %v3074 = vpop.f32.mrb[0].mxu0
        %3075 = vmatprep.mubr.f32.mxu0 0.0
        %3076 = vmatmul.mubr.f32.gmra.mrb[0].mxu0 %v2952
        %v3077 = vpop.f32.mrb[0].mxu0
        %v3078 = vadd.f32 0.0, %v3077
        %v3079 = vpop.f32.mrb[0].mxu0
        %3080 = vmatprep.mubr.f32.mxu0 0.0
        %3081 = vmatmul.mubr.f32.gmra.mrb[0].mxu0 %v2955
        %v3082 = vpop.f32.mrb[0].mxu0
        %v3083 = vadd.f32 0.0, %v3082
        %v3084 = vpop.f32.mrb[0].mxu0
        %3085 = vmatprep.mubr.f32.mxu0 0.0
        %3086 = vmatmul.mubr.f32.gmra.mrb[0].mxu0 %v2958
        %v3087 = vpop.f32.mrb[0].mxu0
        %v3088 = vadd.f32 0.0, %v3087
        %v3089 = vpop.f32.mrb[0].mxu0
        %3090 = vmatprep.mubr.f32.mxu0 0.0
        %3091 = vmatmul.mubr.f32.gmra.mrb[0].mxu0 %v2961
        %v3092 = vpop.f32.mrb[0].mxu0
        %v3093 = vadd.f32 0.0, %v3092
        %v3094 = vpop.f32.mrb[0].mxu0
        %3095 = vmatprep.mubr.f32.mxu0 0.0
        %3096 = vmatmul.mubr.f32.gmra.mrb[0].mxu0 %v2964
        %v3097 = vpop.f32.mrb[0].mxu0
        %v3098 = vadd.f32 0.0, %v3097
        %v3099 = vpop.f32.mrb[0].mxu0
        %3100 = vmatprep.mubr.f32.mxu0 0.0
        %3101 = vmatmul.mubr.f32.gmra.mrb[0].mxu0 %v2967
        %v3102 = vpop.f32.mrb[0].mxu0
        %v3103 = vadd.f32 0.0, %v3102
        %v3104 = vpop.f32.mrb[0].mxu0
        %3105 = vmatprep.mubr.f32.mxu0 0.0
        %3106 = vmatmul.mubr.f32.gmra.mrb[0].mxu0 %v2970
        %v3107 = vpop.f32.mrb[0].mxu0
        %v3108 = vadd.f32 0.0, %v3107
        %v3109 = vpop.f32.mrb[0].mxu0
        %3110 = vmatprep.mubr.f32.mxu0 0.0
        %3111 = vmatmul.mubr.f32.gmra.mrb[0].mxu0 %v2973
        %v3112 = vpop.f32.mrb[0].mxu0
        %v3113 = vadd.f32 0.0, %v3112
        %v3114 = vpop.f32.mrb[0].mxu0
        %3115 = vmatprep.mubr.f32.mxu0 0.0
        %3116 = vmatmul.mubr.f32.gmra.mrb[0].mxu0 %v2976
        %v3117 = vpop.f32.mrb[0].mxu0
        %v3118 = vadd.f32 0.0, %v3117
        %v3119 = vpop.f32.mrb[0].mxu0
        %3120 = vmatprep.mubr.f32.mxu0 0.0
        %3121 = vmatmul.mubr.f32.gmra.mrb[0].mxu0 %v2979
        %v3122 = vpop.f32.mrb[0].mxu0
        %v3123 = vadd.f32 0.0, %v3122
        %v3124 = vpop.f32.mrb[0].mxu0
        %3125 = vdwg.mxu0
        %v3126 = vadd.f32 %v2893, %v3048
        %v3127 = vadd.f32 %v2894, %v3053
        %v3128 = vadd.f32 %v2895, %v3058
        %v3129 = vadd.f32 %v2896, %v3063
        %v3130 = vadd.f32 %v2897, %v3068
        %v3131 = vadd.f32 %v2898, %v3073
        %v3132 = vadd.f32 %v2899, %v3078
        %v3133 = vadd.f32 %v2900, %v3083
        %v3134 = vadd.f32 %v2901, %v3088
        %v3135 = vadd.f32 %v2902, %v3093
        %v3136 = vadd.f32 %v2903, %v3098
        %v3137 = vadd.f32 %v2904, %v3103
        %v3138 = vadd.f32 %v2905, %v3108
        %v3139 = vadd.f32 %v2906, %v3113
        %v3140 = vadd.f32 %v2907, %v3118
        %v3141 = vadd.f32 %v2908, %v3123
        %v3142 = vld [vmem:[%s3 + $0x2] sm:$0x1]
        %v3143 = vlaneseq
        %v3144 = vshrl.u32 %v3143, 7
        %v3145 = vsub.s32 0, %v3144
        %v3146 = vrot.slane %v3142, %v3145
        %v3147 = vadd.f32 %v3126, %v3146
        %v3148 = vadd.f32 %v3127, %v3146
        %v3149 = vadd.f32 %v3128, %v3146
        %v3150 = vadd.f32 %v3129, %v3146
        %v3151 = vadd.f32 %v3130, %v3146
        %v3152 = vadd.f32 %v3131, %v3146
        %v3153 = vadd.f32 %v3132, %v3146
        %v3154 = vadd.f32 %v3133, %v3146
        %v3155 = vadd.f32 %v3134, %v3146
        %v3156 = vadd.f32 %v3135, %v3146
        %v3157 = vadd.f32 %v3136, %v3146
        %v3158 = vadd.f32 %v3137, %v3146
        %v3159 = vadd.f32 %v3138, %v3146
        %v3160 = vadd.f32 %v3139, %v3146
        %v3161 = vadd.f32 %v3140, %v3146
        %v3162 = vadd.f32 %v3141, %v3146
        %v3163 = vsel %vm620, %v3147, 0.0
        %3164 = vadd.xlane.f32.xlu0 %v3163
        %v3165 = vpop.xlane.xlu0 %3164
        %v3166 = vsel %vm620, %v3148, 0.0
        %3167 = vadd.xlane.f32.xlu0 %v3166
        %v3168 = vpop.xlane.xlu0 %3167
        %v3169 = vsel %vm620, %v3149, 0.0
        %3170 = vadd.xlane.f32.xlu0 %v3169
        %v3171 = vpop.xlane.xlu0 %3170
        %v3172 = vsel %vm620, %v3150, 0.0
        %3173 = vadd.xlane.f32.xlu0 %v3172
        %v3174 = vpop.xlane.xlu0 %3173
        %v3175 = vsel %vm620, %v3151, 0.0
        %3176 = vadd.xlane.f32.xlu0 %v3175
        %v3177 = vpop.xlane.xlu0 %3176
        %v3178 = vsel %vm620, %v3152, 0.0
        %3179 = vadd.xlane.f32.xlu0 %v3178
        %v3180 = vpop.xlane.xlu0 %3179
        %v3181 = vsel %vm620, %v3153, 0.0
        %3182 = vadd.xlane.f32.xlu0 %v3181
        %v3183 = vpop.xlane.xlu0 %3182
        %v3184 = vsel %vm620, %v3154, 0.0
        %3185 = vadd.xlane.f32.xlu0 %v3184
        %v3186 = vpop.xlane.xlu0 %3185
        %v3187 = vsel %vm620, %v3155, 0.0
        %3188 = vadd.xlane.f32.xlu0 %v3187
        %v3189 = vpop.xlane.xlu0 %3188
        %v3190 = vsel %vm620, %v3156, 0.0
        %3191 = vadd.xlane.f32.xlu0 %v3190
        %v3192 = vpop.xlane.xlu0 %3191
        %v3193 = vsel %vm620, %v3157, 0.0
        %3194 = vadd.xlane.f32.xlu0 %v3193
        %v3195 = vpop.xlane.xlu0 %3194
        %v3196 = vsel %vm620, %v3158, 0.0
        %3197 = vadd.xlane.f32.xlu0 %v3196
        %v3198 = vpop.xlane.xlu0 %3197
        %v3199 = vsel %vm620, %v3159, 0.0
        %3200 = vadd.xlane.f32.xlu0 %v3199
        %v3201 = vpop.xlane.xlu0 %3200
        %v3202 = vsel %vm620, %v3160, 0.0
        %3203 = vadd.xlane.f32.xlu0 %v3202
        %v3204 = vpop.xlane.xlu0 %3203
        %v3205 = vsel %vm620, %v3161, 0.0
        %3206 = vadd.xlane.f32.xlu0 %v3205
        %v3207 = vpop.xlane.xlu0 %3206
        %v3208 = vsel %vm620, %v3162, 0.0
        %3209 = vadd.xlane.f32.xlu0 %v3208
        %v3210 = vpop.xlane.xlu0 %3209
        %v3211 = vmul.f32 %v3165, %v948
        %v3212 = vmul.f32 %v3168, %v948
        %v3213 = vmul.f32 %v3171, %v948
        %v3214 = vmul.f32 %v3174, %v948
        %v3215 = vmul.f32 %v3177, %v948
        %v3216 = vmul.f32 %v3180, %v948
        %v3217 = vmul.f32 %v3183, %v948
        %v3218 = vmul.f32 %v3186, %v948
        %v3219 = vmul.f32 %v3189, %v948
        %v3220 = vmul.f32 %v3192, %v948
        %v3221 = vmul.f32 %v3195, %v948
        %v3222 = vmul.f32 %v3198, %v948
        %v3223 = vmul.f32 %v3201, %v948
        %v3224 = vmul.f32 %v3204, %v948
        %v3225 = vmul.f32 %v3207, %v948
        %v3226 = vmul.f32 %v3210, %v948
        %v3227 = vsub.f32 %v3147, %v3211
        %v3228 = vsub.f32 %v3148, %v3212
        %v3229 = vsub.f32 %v3149, %v3213
        %v3230 = vsub.f32 %v3150, %v3214
        %v3231 = vsub.f32 %v3151, %v3215
        %v3232 = vsub.f32 %v3152, %v3216
        %v3233 = vsub.f32 %v3153, %v3217
        %v3234 = vsub.f32 %v3154, %v3218
        %v3235 = vsub.f32 %v3155, %v3219
        %v3236 = vsub.f32 %v3156, %v3220
        %v3237 = vsub.f32 %v3157, %v3221
        %v3238 = vsub.f32 %v3158, %v3222
        %v3239 = vsub.f32 %v3159, %v3223
        %v3240 = vsub.f32 %v3160, %v3224
        %v3241 = vsub.f32 %v3161, %v3225
        %v3242 = vsub.f32 %v3162, %v3226
        %v3243 = vmul.f32 %v3227, %v3227
        %v3244 = vmul.f32 %v3228, %v3228
        %v3245 = vmul.f32 %v3229, %v3229
        %v3246 = vmul.f32 %v3230, %v3230
        %v3247 = vmul.f32 %v3231, %v3231
        %v3248 = vmul.f32 %v3232, %v3232
        %v3249 = vmul.f32 %v3233, %v3233
        %v3250 = vmul.f32 %v3234, %v3234
        %v3251 = vmul.f32 %v3235, %v3235
        %v3252 = vmul.f32 %v3236, %v3236
        %v3253 = vmul.f32 %v3237, %v3237
        %v3254 = vmul.f32 %v3238, %v3238
        %v3255 = vmul.f32 %v3239, %v3239
        %v3256 = vmul.f32 %v3240, %v3240
        %v3257 = vmul.f32 %v3241, %v3241
        %v3258 = vmul.f32 %v3242, %v3242
        %v3259 = vsel %vm620, %v3243, 0.0
        %3260 = vadd.xlane.f32.xlu0 %v3259
        %v3261 = vpop.xlane.xlu0 %3260
        %v3262 = vsel %vm620, %v3244, 0.0
        %3263 = vadd.xlane.f32.xlu0 %v3262
        %v3264 = vpop.xlane.xlu0 %3263
        %v3265 = vsel %vm620, %v3245, 0.0
        %3266 = vadd.xlane.f32.xlu0 %v3265
        %v3267 = vpop.xlane.xlu0 %3266
        %v3268 = vsel %vm620, %v3246, 0.0
        %3269 = vadd.xlane.f32.xlu0 %v3268
        %v3270 = vpop.xlane.xlu0 %3269
        %v3271 = vsel %vm620, %v3247, 0.0
        %3272 = vadd.xlane.f32.xlu0 %v3271
        %v3273 = vpop.xlane.xlu0 %3272
        %v3274 = vsel %vm620, %v3248, 0.0
        %3275 = vadd.xlane.f32.xlu0 %v3274
        %v3276 = vpop.xlane.xlu0 %3275
        %v3277 = vsel %vm620, %v3249, 0.0
        %3278 = vadd.xlane.f32.xlu0 %v3277
        %v3279 = vpop.xlane.xlu0 %3278
        %v3280 = vsel %vm620, %v3250, 0.0
        %3281 = vadd.xlane.f32.xlu0 %v3280
        %v3282 = vpop.xlane.xlu0 %3281
        %v3283 = vsel %vm620, %v3251, 0.0
        %3284 = vadd.xlane.f32.xlu0 %v3283
        %v3285 = vpop.xlane.xlu0 %3284
        %v3286 = vsel %vm620, %v3252, 0.0
        %3287 = vadd.xlane.f32.xlu0 %v3286
        %v3288 = vpop.xlane.xlu0 %3287
        %v3289 = vsel %vm620, %v3253, 0.0
        %3290 = vadd.xlane.f32.xlu0 %v3289
        %v3291 = vpop.xlane.xlu0 %3290
        %v3292 = vsel %vm620, %v3254, 0.0
        %3293 = vadd.xlane.f32.xlu0 %v3292
        %v3294 = vpop.xlane.xlu0 %3293
        %v3295 = vsel %vm620, %v3255, 0.0
        %3296 = vadd.xlane.f32.xlu0 %v3295
        %v3297 = vpop.xlane.xlu0 %3296
        %v3298 = vsel %vm620, %v3256, 0.0
        %3299 = vadd.xlane.f32.xlu0 %v3298
        %v3300 = vpop.xlane.xlu0 %3299
        %v3301 = vsel %vm620, %v3257, 0.0
        %3302 = vadd.xlane.f32.xlu0 %v3301
        %v3303 = vpop.xlane.xlu0 %3302
        %v3304 = vsel %vm620, %v3258, 0.0
        %3305 = vadd.xlane.f32.xlu0 %v3304
        %v3306 = vpop.xlane.xlu0 %3305
        %v3307 = vmul.f32 %v3261, %v948
        %v3308 = vmul.f32 %v3264, %v948
        %v3309 = vmul.f32 %v3267, %v948
        %v3310 = vmul.f32 %v3270, %v948
        %v3311 = vmul.f32 %v3273, %v948
        %v3312 = vmul.f32 %v3276, %v948
        %v3313 = vmul.f32 %v3279, %v948
        %v3314 = vmul.f32 %v3282, %v948
        %v3315 = vmul.f32 %v3285, %v948
        %v3316 = vmul.f32 %v3288, %v948
        %v3317 = vmul.f32 %v3291, %v948
        %v3318 = vmul.f32 %v3294, %v948
        %v3319 = vmul.f32 %v3297, %v948
        %v3320 = vmul.f32 %v3300, %v948
        %v3321 = vmul.f32 %v3303, %v948
        %v3322 = vmul.f32 %v3306, %v948
        %v3323 = vadd.f32 %v3307, 1e-05
        %v3324 = vadd.f32 %v3308, 1e-05
        %v3325 = vadd.f32 %v3309, 1e-05
        %v3326 = vadd.f32 %v3310, 1e-05
        %v3327 = vadd.f32 %v3311, 1e-05
        %v3328 = vadd.f32 %v3312, 1e-05
        %v3329 = vadd.f32 %v3313, 1e-05
        %v3330 = vadd.f32 %v3314, 1e-05
        %v3331 = vadd.f32 %v3315, 1e-05
        %v3332 = vadd.f32 %v3316, 1e-05
        %v3333 = vadd.f32 %v3317, 1e-05
        %v3334 = vadd.f32 %v3318, 1e-05
        %v3335 = vadd.f32 %v3319, 1e-05
        %v3336 = vadd.f32 %v3320, 1e-05
        %v3337 = vadd.f32 %v3321, 1e-05
        %v3338 = vadd.f32 %v3322, 1e-05
        %v3339 = vrsqrt.pop %v3323
        %v3340 = vrsqrt.pop %v3324
        %v3341 = vrsqrt.pop %v3325
        %v3342 = vrsqrt.pop %v3326
        %v3343 = vrsqrt.pop %v3327
        %v3344 = vrsqrt.pop %v3328
        %v3345 = vrsqrt.pop %v3329
        %v3346 = vrsqrt.pop %v3330
        %v3347 = vrsqrt.pop %v3331
        %v3348 = vrsqrt.pop %v3332
        %v3349 = vrsqrt.pop %v3333
        %v3350 = vrsqrt.pop %v3334
        %v3351 = vrsqrt.pop %v3335
        %v3352 = vrsqrt.pop %v3336
        %v3353 = vrsqrt.pop %v3337
        %v3354 = vrsqrt.pop %v3338
        %v3355 = vmul.f32 %v3227, %v3339
        %v3356 = vmul.f32 %v3228, %v3340
        %v3357 = vmul.f32 %v3229, %v3341
        %v3358 = vmul.f32 %v3230, %v3342
        %v3359 = vmul.f32 %v3231, %v3343
        %v3360 = vmul.f32 %v3232, %v3344
        %v3361 = vmul.f32 %v3233, %v3345
        %v3362 = vmul.f32 %v3234, %v3346
        %v3363 = vmul.f32 %v3235, %v3347
        %v3364 = vmul.f32 %v3236, %v3348
        %v3365 = vmul.f32 %v3237, %v3349
        %v3366 = vmul.f32 %v3238, %v3350
        %v3367 = vmul.f32 %v3239, %v3351
        %v3368 = vmul.f32 %v3240, %v3352
        %v3369 = vmul.f32 %v3241, %v3353
        %v3370 = vmul.f32 %v3242, %v3354
        %v3371 = vld [vmem:[%s4 + $0x2] sm:$0x1]
        %v3372 = vlaneseq
        %v3373 = vshrl.u32 %v3372, 7
        %v3374 = vsub.s32 0, %v3373
        %v3375 = vrot.slane %v3371, %v3374
        %v3376 = vmul.f32 %v3355, %v3375
        %v3377 = vmul.f32 %v3356, %v3375
        %v3378 = vmul.f32 %v3357, %v3375
        %v3379 = vmul.f32 %v3358, %v3375
        %v3380 = vmul.f32 %v3359, %v3375
        %v3381 = vmul.f32 %v3360, %v3375
        %v3382 = vmul.f32 %v3361, %v3375
        %v3383 = vmul.f32 %v3362, %v3375
        %v3384 = vmul.f32 %v3363, %v3375
        %v3385 = vmul.f32 %v3364, %v3375
        %v3386 = vmul.f32 %v3365, %v3375
        %v3387 = vmul.f32 %v3366, %v3375
        %v3388 = vmul.f32 %v3367, %v3375
        %v3389 = vmul.f32 %v3368, %v3375
        %v3390 = vmul.f32 %v3369, %v3375
        %v3391 = vmul.f32 %v3370, %v3375
        %v3392 = vld [vmem:[%s5 + $0x2] sm:$0x1]
        %v3393 = vlaneseq
        %v3394 = vshrl.u32 %v3393, 7
        %v3395 = vsub.s32 0, %v3394
        %v3396 = vrot.slane %v3392, %v3395
        %v3397 = vadd.f32 %v3376, %v3396
        %v3398 = vadd.f32 %v3377, %v3396
        %v3399 = vadd.f32 %v3378, %v3396
        %v3400 = vadd.f32 %v3379, %v3396
        %v3401 = vadd.f32 %v3380, %v3396
        %v3402 = vadd.f32 %v3381, %v3396
        %v3403 = vadd.f32 %v3382, %v3396
        %v3404 = vadd.f32 %v3383, %v3396
        %v3405 = vadd.f32 %v3384, %v3396
        %v3406 = vadd.f32 %v3385, %v3396
        %v3407 = vadd.f32 %v3386, %v3396
        %v3408 = vadd.f32 %v3387, %v3396
        %v3409 = vadd.f32 %v3388, %v3396
        %v3410 = vadd.f32 %v3389, %v3396
        %v3411 = vadd.f32 %v3390, %v3396
        %v3412 = vadd.f32 %v3391, %v3396
        %v3413 = vmax.f32 %v3397, 0.0
        %v3414 = vmax.f32 %v3398, 0.0
        %v3415 = vmax.f32 %v3399, 0.0
        %v3416 = vmax.f32 %v3400, 0.0
        %v3417 = vmax.f32 %v3401, 0.0
        %v3418 = vmax.f32 %v3402, 0.0
        %v3419 = vmax.f32 %v3403, 0.0
        %v3420 = vmax.f32 %v3404, 0.0
        %v3421 = vmax.f32 %v3405, 0.0
        %v3422 = vmax.f32 %v3406, 0.0
        %v3423 = vmax.f32 %v3407, 0.0
        %v3424 = vmax.f32 %v3408, 0.0
        %v3425 = vmax.f32 %v3409, 0.0
        %v3426 = vmax.f32 %v3410, 0.0
        %v3427 = vmax.f32 %v3411, 0.0
        %v3428 = vmax.f32 %v3412, 0.0
        %v3429 = vsel %vm620, %v3413, -inf
        %v3430 = vsel %vm620, %v3414, -inf
        %v3431 = vmax.f32 %v3429, %v3430
        %v3432 = vrot.slane %v3431, 4
        %v3433 = vmax.f32 %v3431, %v3432
        %v3434 = vrot.slane %v3433, 2
        %v3435 = vmax.f32 %v3433, %v3434
        %v3436 = vrot.slane %v3435, 1
        %v3437 = vmax.f32 %v3435, %v3436
        %v3438 = vsel %vm620, %v3415, -inf
        %v3439 = vsel %vm620, %v3416, -inf
        %v3440 = vmax.f32 %v3438, %v3439
        %v3441 = vrot.slane %v3440, 4
        %v3442 = vmax.f32 %v3440, %v3441
        %v3443 = vrot.slane %v3442, 2
        %v3444 = vmax.f32 %v3442, %v3443
        %v3445 = vrot.slane %v3444, 1
        %v3446 = vmax.f32 %v3444, %v3445
        %v3447 = vsel %vm620, %v3417, -inf
        %v3448 = vsel %vm620, %v3418, -inf
        %v3449 = vmax.f32 %v3447, %v3448
        %v3450 = vrot.slane %v3449, 4
        %v3451 = vmax.f32 %v3449, %v3450
        %v3452 = vrot.slane %v3451, 2
        %v3453 = vmax.f32 %v3451, %v3452
        %v3454 = vrot.slane %v3453, 1
        %v3455 = vmax.f32 %v3453, %v3454
        %v3456 = vsel %vm620, %v3419, -inf
        %v3457 = vsel %vm620, %v3420, -inf
        %v3458 = vmax.f32 %v3456, %v3457
        %v3459 = vrot.slane %v3458, 4
        %v3460 = vmax.f32 %v3458, %v3459
        %v3461 = vrot.slane %v3460, 2
        %v3462 = vmax.f32 %v3460, %v3461
        %v3463 = vrot.slane %v3462, 1
        %v3464 = vmax.f32 %v3462, %v3463
        %v3465 = vsel %vm620, %v3421, -inf
        %v3466 = vsel %vm620, %v3422, -inf
        %v3467 = vmax.f32 %v3465, %v3466
        %v3468 = vrot.slane %v3467, 4
        %v3469 = vmax.f32 %v3467, %v3468
        %v3470 = vrot.slane %v3469, 2
        %v3471 = vmax.f32 %v3469, %v3470
        %v3472 = vrot.slane %v3471, 1
        %v3473 = vmax.f32 %v3471, %v3472
        %v3474 = vsel %vm620, %v3423, -inf
        %v3475 = vsel %vm620, %v3424, -inf
        %v3476 = vmax.f32 %v3474, %v3475
        %v3477 = vrot.slane %v3476, 4
        %v3478 = vmax.f32 %v3476, %v3477
        %v3479 = vrot.slane %v3478, 2
        %v3480 = vmax.f32 %v3478, %v3479
        %v3481 = vrot.slane %v3480, 1
        %v3482 = vmax.f32 %v3480, %v3481
        %v3483 = vsel %vm620, %v3425, -inf
        %v3484 = vsel %vm620, %v3426, -inf
        %v3485 = vmax.f32 %v3483, %v3484
        %v3486 = vrot.slane %v3485, 4
        %v3487 = vmax.f32 %v3485, %v3486
        %v3488 = vrot.slane %v3487, 2
        %v3489 = vmax.f32 %v3487, %v3488
        %v3490 = vrot.slane %v3489, 1
        %v3491 = vmax.f32 %v3489, %v3490
        %v3492 = vsel %vm620, %v3427, -inf
        %v3493 = vsel %vm620, %v3428, -inf
        %v3494 = vmax.f32 %v3492, %v3493
        %v3495 = vrot.slane %v3494, 4
        %v3496 = vmax.f32 %v3494, %v3495
        %v3497 = vrot.slane %v3496, 2
        %v3498 = vmax.f32 %v3496, %v3497
        %v3499 = vrot.slane %v3498, 1
        %v3500 = vmax.f32 %v3498, %v3499
        %vm3509 = vcmask 1041409
        %v3510 = vsel %vm3509, %v1184, %v1175
        %vm3511 = vcmask 1042434
        %v3512 = vsel %vm3511, %v1193, %v3510
        %vm3513 = vcmask 1043459
        %v3514 = vsel %vm3513, %v1202, %v3512
        %vm3515 = vcmask 1044484
        %v3516 = vsel %vm3515, %v1211, %v3514
        %vm3517 = vcmask 1045509
        %v3518 = vsel %vm3517, %v1220, %v3516
        %vm3519 = vcmask 1046534
        %v3520 = vsel %vm3519, %v1229, %v3518
        %vm3521 = vcmask 1047559
        %v3522 = vsel %vm3521, %v1238, %v3520
        %v3532 = vsel %vm3509, %v2146, %v2137
        %v3533 = vsel %vm3511, %v2155, %v3532
        %v3534 = vsel %vm3513, %v2164, %v3533
        %v3535 = vsel %vm3515, %v2173, %v3534
        %v3536 = vsel %vm3517, %v2182, %v3535
        %v3537 = vsel %vm3519, %v2191, %v3536
        %v3538 = vsel %vm3521, %v2200, %v3537
        %3539 = vrot.lane.b32.xlu0 %v3538, 64
        %v3540 = vpop.permute.xlu0 %3539
        %v3550 = vsel %vm3509, %v3446, %v3437
        %v3551 = vsel %vm3511, %v3455, %v3550
        %v3552 = vsel %vm3513, %v3464, %v3551
        %v3553 = vsel %vm3515, %v3473, %v3552
        %v3554 = vsel %vm3517, %v3482, %v3553
        %v3555 = vsel %vm3519, %v3491, %v3554
        %v3556 = vsel %vm3521, %v3500, %v3555
        %v3557 = vsel %vm620, %v3522, %v3540
        %v3558 = vld [vmem:[%s6] sm:$0xff]
        %v3559 = vld [vmem:[%s6 + $0x8] sm:$0xff]
        %v3560 = vld [vmem:[%s6 + $0x10] sm:$0xff]
        %v3561 = vld [vmem:[%s6 + $0x18] sm:$0xff]
        %v3562 = vld [vmem:[%s6 + $0x20] sm:$0xff]
        %v3563 = vld [vmem:[%s6 + $0x28] sm:$0xff]
        %v3564 = vld [vmem:[%s6 + $0x30] sm:$0xff]
        %v3565 = vld [vmem:[%s6 + $0x38] sm:$0xff]
        %v3566 = vld [vmem:[%s6 + $0x40] sm:$0xff]
        %v3567 = vld [vmem:[%s6 + $0x48] sm:$0xff]
        %v3568 = vld [vmem:[%s6 + $0x50] sm:$0xff]
        %v3569 = vld [vmem:[%s6 + $0x58] sm:$0xff]
        %v3570 = vld [vmem:[%s6 + $0x60] sm:$0xff]
        %v3571 = vld [vmem:[%s6 + $0x68] sm:$0xff]
        %v3572 = vld [vmem:[%s6 + $0x70] sm:$0xff]
        %v3573 = vld [vmem:[%s6 + $0x78] sm:$0xff]
        %v3574 = vld [vmem:[%s6 + $0x80] sm:$0xff]
        %v3575 = vld [vmem:[%s6 + $0x88] sm:$0xff]
        %v3576 = vld [vmem:[%s6 + $0x90] sm:$0xff]
        %v3577 = vld [vmem:[%s6 + $0x98] sm:$0xff]
        %v3578 = vld [vmem:[%s6 + $0xa0] sm:$0xff]
        %v3579 = vld [vmem:[%s6 + $0xa8] sm:$0xff]
        %v3580 = vld [vmem:[%s6 + $0xb0] sm:$0xff]
        %v3581 = vld [vmem:[%s6 + $0xb8] sm:$0xff]
        %v3582 = vld [vmem:[%s7] sm:$0x1]
        %v3584 = vlaneseq
        %v3585 = vshrl.u32 %v3584, 7
        %v3586 = vsub.s32 0, %v3585
        %v3587 = vrot.slane %v3582, %v3586
        %v3589 = vsel %vm620, %v3556, 0
        %3591 = vmatprep.subr.mxu0 0.0
        %3592 = vmatpush1.msra.mxu0 %v3558
        %3593 = vmatprep.subr.mxu0 0.0
        %3594 = vmatpush1.msra.mxu0 %v3559
        %3595 = vmatprep.subr.mxu0 0.0
        %3596 = vmatpush1.msra.mxu0 %v3560
        %3597 = vmatprep.subr.mxu0 0.0
        %3598 = vmatpush1.msra.mxu0 %v3561
        %3599 = vmatprep.subr.mxu0 0.0
        %3600 = vmatpush1.msra.mxu0 %v3562
        %3601 = vmatprep.subr.mxu0 0.0
        %3602 = vmatpush1.msra.mxu0 %v3563
        %3603 = vmatprep.subr.mxu0 0.0
        %3604 = vmatpush1.msra.mxu0 %v3564
        %3605 = vmatprep.subr.mxu0 0.0
        %3606 = vmatpush1.msra.mxu0 %v3565
        %3607 = vmatprep.subr.mxu0 0.0
        %3608 = vmatpush1.msra.mxu0 %v3566
        %3609 = vmatprep.subr.mxu0 0.0
        %3610 = vmatpush1.msra.mxu0 %v3567
        %3611 = vmatprep.subr.mxu0 0.0
        %3612 = vmatpush1.msra.mxu0 %v3568
        %3613 = vmatprep.subr.mxu0 0.0
        %3614 = vmatpush1.msra.mxu0 %v3569
        %3615 = vmatprep.subr.mxu0 0.0
        %3616 = vmatpush1.msra.mxu0 %v3570
        %3617 = vmatprep.subr.mxu0 0.0
        %3618 = vmatpush1.msra.mxu0 %v3571
        %3619 = vmatprep.subr.mxu0 0.0
        %3620 = vmatpush1.msra.mxu0 %v3572
        %3621 = vmatprep.subr.mxu0 0.0
        %3622 = vmatpush1.msra.mxu0 %v3573
        %3623 = vmatprep.subr.mxu0 0.0
        %3624 = vmatpush1.msra.mxu0 %v3574
        %3625 = vmatprep.subr.mxu0 0.0
        %3626 = vmatpush1.msra.mxu0 %v3575
        %3627 = vmatprep.subr.mxu0 0.0
        %3628 = vmatpush1.msra.mxu0 %v3576
        %3629 = vmatprep.subr.mxu0 0.0
        %3630 = vmatpush1.msra.mxu0 %v3577
        %3631 = vmatprep.subr.mxu0 0.0
        %3632 = vmatpush1.msra.mxu0 %v3578
        %3633 = vmatprep.subr.mxu0 0.0
        %3634 = vmatpush1.msra.mxu0 %v3579
        %3635 = vmatprep.subr.mxu0 0.0
        %3636 = vmatpush1.msra.mxu0 %v3580
        %3637 = vmatprep.subr.mxu0 0.0
        %3638 = vmatpush1.msra.mxu0 %v3581
        %3639 = vmatprep.subr.mxu0 0.0
        %3640 = vmatpush1.msra.mxu0 0.0
        %3641 = vmatprep.subr.mxu0 0.0
        %3642 = vmatpush1.msra.mxu0 0.0
        %3643 = vmatprep.subr.mxu0 0.0
        %3644 = vmatpush1.msra.mxu0 0.0
        %3645 = vmatprep.subr.mxu0 0.0
        %3646 = vmatpush1.msra.mxu0 0.0
        %3647 = vmatprep.subr.mxu0 0.0
        %3648 = vmatpush1.msra.mxu0 0.0
        %3649 = vmatprep.subr.mxu0 0.0
        %3650 = vmatpush1.msra.mxu0 0.0
        %3651 = vmatprep.subr.mxu0 0.0
        %3652 = vmatpush1.msra.mxu0 0.0
        %3653 = vmatprep.subr.mxu0 0.0
        %3654 = vmatpush1.msra.mxu0 0.0
        %3655 = vmatprep.mubr.f32.mxu0 %v3589
        %3656 = vmatmul.mubr.f32.gmra.mrb[0].mxu0 %v3557
        %v3657 = vpop.f32.mrb[0].mxu0
        %v3658 = vadd.f32 %v3587, %v3657
        %v3659 = vpop.f32.mrb[0].mxu0
        %3660 = vdwg.mxu0
        %3661 = vst [vmem:[%s301] sm:$0xff] %v3658
        %s3662 = sand.u32 %s203, 1
        %s3663 = scalar_lea.sflag [#allocation4], %s3662
        %s3664 = sand.u32 %s203, 1
        %s3665 = smul.addr %s3664, 8
        %s3666 = scalar_lea.vmem [#allocation3], %s3665
        // Predicated region
        $region53: #{tpu_custom_call.1} parent=51 // pred_check
          %p3667 = pneg %p213
        $region54: #{tpu_custom_call.1} parent=51 // pred_check_branch
          %3669 = sbr.rel (%p3667) target = $region56
        $region55: #{tpu_custom_call.1} parent=51 // pred_region
          %s3671 = ssub.s32 128, 128
          %3672 = vsyncadd %s3663, %s3671
          %s3673 = smul.addr %s22, 128
          %s3674 = scalar_lea.hbm %s8, %s3673
          %s3676 = sshll.u32 %s3666, 4
          %s3677 = int_to_ptr.vmem [resolvable:$true] %s3676
          %3679 = dma.vmem_to_hbm [thread:$0]  %s3677, 128, %s3674, %s3663
        $region56: #{tpu_custom_call.1} parent=51 // pred_fallthru
          _
      $region52: #{tpu_custom_call.1} parent=5 // pred_fallthru
        _
      %p3680 = scmp.le.s32.totalorder 2, %s17
      // Predicated region
      $region57: #{tpu_custom_call.1} parent=5 // pred_check
        %p3681 = pneg %p3680
      $region58: #{tpu_custom_call.1} parent=5 // pred_check_branch
        %3683 = sbr.rel (%p3681) target = $region60
      $region59: #{tpu_custom_call.1} parent=5 // pred_region
        %s3684 = ssub.s32 %s17, 2
        // Predicated region
        $region61: #{tpu_custom_call.1} parent=59 // pred_check
          %p3685 = pneg %p219
        $region62: #{tpu_custom_call.1} parent=59 // pred_check_branch
          %3687 = sbr.rel (%p3685) target = $region64
        $region63: #{tpu_custom_call.1} parent=59 // pred_region
          %s3688 = sand.u32 %s204, 1
          %s3689 = scalar_lea.sflag [#allocation4], %s3688
          %s3690 = sand.u32 %s204, 1
          %s3691 = smul.addr %s3690, 8
          %s3692 = scalar_lea.vmem [#allocation3], %s3691
          %3693 = dma.done %s3689, 128
        $region64: #{tpu_custom_call.1} parent=59 // pred_fallthru
          _
      $region60: #{tpu_custom_call.1} parent=5 // pred_fallthru
        _
    $region6: #{tpu_custom_call.1} parent=1 // loop_footer
      %s21 = sadd.s32 1, %s17
    $region7: #{tpu_custom_call.1} parent=1 // loop_footer_branch
      %16 = sbr.rel target = $region3
    $region8: #{tpu_custom_call.1} parent=1 // loop_exit
      _
    %3694 = vsyncpa [#allocation4], 1
    %s3695 = scalar_lea.sflag [#allocation4], 1
    %3696 = vsyncpa %s3695, 1

</llo_original>
